<compile_context>
chip_gen: v5e
topology: v5e:2x2
jax: 0.10.0
libtpu: 0.0.40
codegen_flags: <defaults>
</compile_context>

<pallas_src>
import functools

import jax
import jax.numpy as jnp
from jax import lax
from jax.experimental import pallas as pl
from jax.experimental.pallas import tpu as pltpu

BASEWIDTH = 64
CARDINALITY = 32
DEPTH = 4
BN_EPS = 1e-5

_VMEM_LIMIT = 48 * 1024 * 1024  # cap that fits v7x (64 MiB phys) and is generous on v5e/v6e


# ----------------------------- Pallas kernels ------------------------------

def _matmul_kernel(*refs, relu, has_residual):
    """One-shot y = act(x @ W + b [+ residual]); W/b are VMEM-resident (constant block index)."""
    if has_residual:
        x_ref, w_ref, b_ref, r_ref, o_ref = refs
    else:
        x_ref, w_ref, b_ref, o_ref = refs
    y = jnp.dot(x_ref[...], w_ref[...], preferred_element_type=jnp.float32) + b_ref[...]
    if has_residual:
        y = y + r_ref[...].astype(jnp.float32)
    if relu:
        y = jnp.maximum(y, 0.0)
    o_ref[...] = y.astype(o_ref.dtype)


def _dual_matmul_kernel(x1_ref, w1_ref, x2_ref, w2_ref, b_ref, o_ref):
    """Fused conv3 + projection shortcut: relu(x1 @ W1 + x2 @ W2 + b)."""
    y = jnp.dot(x1_ref[...], w1_ref[...], preferred_element_type=jnp.float32)
    y = y + jnp.dot(x2_ref[...], w2_ref[...], preferred_element_type=jnp.float32)
    y = y + b_ref[...]
    o_ref[...] = jnp.maximum(y, 0.0).astype(o_ref.dtype)


def _conv3x3_kernel(x_ref, w_ref, b_ref, o_ref, acc_ref, *, stride, ho, wo, wh, cd):
    """Grouped 3x3 conv for one image.  x_ref holds the padded, phase-split activation as a
    flat (Hh*Wh, s*s*CD) slab; each tap is one (Ho*Wh, CD) x (CD, Cout) MXU matmul accumulated
    into a VMEM f32 scratch, then bias + ReLU per output row."""
    m = ho * wh
    tap = 0
    for kh in range(3):
        dh = kh // stride
        for kw in range(3):
            dw = kw // stride
            p = (kh % stride) * stride + (kw % stride)     # phase channel block
            start = dh * wh + dw                            # flat (row-major) window offset
            lhs = x_ref[0, start:start + m, p * cd:(p + 1) * cd]   # (Ho*Wh, CD) bf16
            contrib = jnp.dot(lhs, w_ref[kh * 3 + kw],
                              preferred_element_type=jnp.float32)
            if tap == 0:
                acc_ref[...] = contrib         # first tap writes (no zero-init pass)
            else:
                acc_ref[...] += contrib
            tap += 1
    b = b_ref[...]
    for r in range(ho):                        # valid columns are the first Wo of each Wh group
        y = acc_ref[r * wh:r * wh + wo, :] + b
        o_ref[0, r, :, :] = jnp.maximum(y, 0.0).astype(o_ref.dtype)


# ------------------------------ wrappers -----------------------------------

def _round_up(v, m):
    return (v + m - 1) // m * m


def matmul_bias(x, w, bias, *, relu, residual=None, out_dtype=jnp.bfloat16, tm=256):
    """y = act(x @ w + bias [+ residual]); weight/bias resident in VMEM, grid over M only."""
    M, K = x.shape
    N = w.shape[1]
    tm_ = min(tm, _round_up(M, 8))
    grid = (pl.cdiv(M, tm_),)

    inputs = [x, w, bias.reshape(1, N).astype(jnp.float32)]
    in_specs = [
        pl.BlockSpec((tm_, K), lambda i: (i, 0)),
        pl.BlockSpec((K, N), lambda i: (0, 0)),     # constant index -> fetched once
        pl.BlockSpec((1, N), lambda i: (0, 0)),
    ]
    if residual is not None:
        inputs.append(residual)
        in_specs.append(pl.BlockSpec((tm_, N), lambda i: (i, 0)))

    kernel = functools.partial(_matmul_kernel, relu=relu,
                               has_residual=residual is not None)
    return pl.pallas_call(
        kernel,
        out_shape=jax.ShapeDtypeStruct((M, N), out_dtype),
        grid=grid,
        in_specs=in_specs,
        out_specs=pl.BlockSpec((tm_, N), lambda i: (i, 0)),
        compiler_params=pltpu.CompilerParams(
            dimension_semantics=("parallel",),
            vmem_limit_bytes=_VMEM_LIMIT),
    )(*inputs)


def dual_matmul_bias_relu(x1, w1, x2, w2, bias, *, out_dtype=jnp.bfloat16, tm=256):
    """relu(x1 @ w1 + x2 @ w2 + bias): conv3 with the projection shortcut fused in."""
    M, K1 = x1.shape
    K2 = x2.shape[1]
    N = w1.shape[1]
    tm_ = min(tm, _round_up(M, 8))
    grid = (pl.cdiv(M, tm_),)
    return pl.pallas_call(
        _dual_matmul_kernel,
        out_shape=jax.ShapeDtypeStruct((M, N), out_dtype),
        grid=grid,
        in_specs=[
            pl.BlockSpec((tm_, K1), lambda i: (i, 0)),
            pl.BlockSpec((K1, N), lambda i: (0, 0)),    # resident
            pl.BlockSpec((tm_, K2), lambda i: (i, 0)),
            pl.BlockSpec((K2, N), lambda i: (0, 0)),    # resident
            pl.BlockSpec((1, N), lambda i: (0, 0)),
        ],
        out_specs=pl.BlockSpec((tm_, N), lambda i: (i, 0)),
        compiler_params=pltpu.CompilerParams(
            dimension_semantics=("parallel",),
            vmem_limit_bytes=_VMEM_LIMIT),
    )(x1, w1, x2, w2, bias.reshape(1, N).astype(jnp.float32))


def grouped_conv3x3_bn_relu(y_nhwc, w_taps, bias, *, stride):
    """Grouped 3x3 conv (pad=1, stride s) + folded-BN + ReLU, NHWC in / NHWC out."""
    N, H, W, CD = y_nhwc.shape
    cout = w_taps.shape[-1]
    s = stride
    Ho = (H - 1) // s + 1
    Wo = (W - 1) // s + 1
    n_dh = (2 // s) + 1                      # distinct phase-row offsets (3 if s==1 else 2)
    Hh = Ho + n_dh                           # +1 extra zero phase-row keeps flat tap slices in-bounds
    Wh = Wo + n_dh - 1
    Hp, Wp = s * Hh, s * Wh

    yp = jnp.pad(y_nhwc, ((0, 0), (1, Hp - H - 1), (1, Wp - W - 1), (0, 0)))
    if s == 1:
        ph = yp                              # no phase split needed
    else:
        # space-to-depth: stride-lattice phase (a, b) lives in channel block a*s + b.
        ph = (yp.reshape(N, Hh, s, Wh, s, CD)
                .transpose(0, 1, 3, 2, 4, 5)
                .reshape(N, Hh, Wh, s * s * CD))
    pcd = s * s * CD
    ph_flat = ph.reshape(N, Hh * Wh, pcd)    # contiguous reshape (free)
    bias2 = bias.reshape(1, cout).astype(jnp.float32)

    kernel = functools.partial(_conv3x3_kernel, stride=s, ho=Ho, wo=Wo, wh=Wh, cd=CD)
    return pl.pallas_call(
        kernel,
        out_shape=jax.ShapeDtypeStruct((N, Ho, Wo, cout), jnp.bfloat16),
        grid=(N,),
        in_specs=[
            pl.BlockSpec((1, Hh * Wh, pcd), lambda n: (n, 0, 0)),
            pl.BlockSpec((9, CD, cout), lambda n: (0, 0, 0)),   # resident weights
            pl.BlockSpec((1, cout), lambda n: (0, 0)),
        ],
        out_specs=pl.BlockSpec((1, Ho, Wo, cout), lambda n: (n, 0, 0, 0)),
        scratch_shapes=[pltpu.VMEM((Ho * Wh, cout), jnp.float32)],
        compiler_params=pltpu.CompilerParams(
            dimension_semantics=("parallel",),
            vmem_limit_bytes=_VMEM_LIMIT),
    )(ph_flat, w_taps, bias2)


# ------------------------- parameter preparation ---------------------------

def fold_bn(bn):
    gamma, beta, mean, var = bn
    scale = gamma / jnp.sqrt(var + BN_EPS)
    bias = beta - mean * scale
    return scale, bias


def grouped_1x1_dense(w, groups):
    # w: (Cout, Cin_g, 1, 1) -> block-diagonal dense (Cin, Cout)
    cout, cin_g = w.shape[0], w.shape[1]
    dout = cout // groups
    w3 = w[:, :, 0, 0].reshape(groups, dout, cin_g)            # [h, do, ci]
    eye = jnp.eye(groups, dtype=w.dtype)
    dense = jnp.einsum('gh,hdc->gchd', eye, w3)                # [g, ci, h, do]
    return dense.reshape(groups * cin_g, cout)


def grouped_3x3_taps(w, groups):
    # w: (Cout, Cin_g, 3, 3) -> per-tap block-diagonal dense (9, Cin, Cout)
    cout, cin_g = w.shape[0], w.shape[1]
    dout = cout // groups
    wt = w.transpose(2, 3, 1, 0).reshape(9, cin_g, groups, dout)   # [t, ci, h, do]
    eye = jnp.eye(groups, dtype=w.dtype)
    dense = jnp.einsum('gh,tchd->tgchd', eye, wt)                  # [t, g, ci, h, do]
    return dense.reshape(9, groups * cin_g, cout)


def init_params(key, in_channels, out_channels, stride):
    C = CARDINALITY
    D = int(DEPTH * out_channels / BASEWIDTH)
    CD = C * D
    out4 = out_channels * 4
    ks = jax.random.split(key, 8)

    def conv_w(k, shape):
        fan_in = shape[1] * shape[2] * shape[3]
        bound = 1.0 / jnp.sqrt(float(fan_in))
        return jax.random.uniform(k, shape, jnp.float32, -bound, bound)

    def bn_p(k, c):
        k1, k2, k3, k4 = jax.random.split(k, 4)
        gamma = jax.random.uniform(k1, (c,), jnp.float32, 0.5, 1.5)
        beta = 0.1 * jax.random.normal(k2, (c,), jnp.float32)
        mean = 0.1 * jax.random.normal(k3, (c,), jnp.float32)
        var = jax.random.uniform(k4, (c,), jnp.float32, 0.5, 1.5)
        return gamma, beta, mean, var

    params = {
        "w1": conv_w(ks[0], (CD, in_channels // C, 1, 1)),
        "bn1": bn_p(ks[1], CD),
        "w2": conv_w(ks[2], (CD, D, 3, 3)),
        "bn2": bn_p(ks[3], CD),
        "w3": conv_w(ks[4], (out4, CD, 1, 1)),
        "bn3": bn_p(ks[5], out4),
    }
    if stride != 1 or in_channels != out4:
        params["ws"] = conv_w(ks[6], (out4, in_channels, 1, 1))
        params["bns"] = bn_p(ks[7], out4)
    return params


# ------------------------------- forward -----------------------------------

def resnext_bottleneck_forward(x, params, in_channels, out_channels, stride):
    C = CARDINALITY
    D = int(DEPTH * out_channels / BASEWIDTH)
    CD = C * D
    out4 = out_channels * 4
    N, Cin, H, W = x.shape
    s = stride
    Ho = (H - 1) // s + 1
    Wo = (W - 1) // s + 1
    cdt = jnp.bfloat16

    # bf16 cast fused into the single entry transpose (NCHW -> NHWC); stay NHWC until the end.
    x_nhwc = jnp.transpose(x.astype(cdt), (0, 2, 3, 1))

    # --- conv1: grouped 1x1 + BN + ReLU (BN scale folded into weight columns) ---
    s1, b1 = fold_bn(params["bn1"])
    w1 = (grouped_1x1_dense(params["w1"], C) * s1[None, :]).astype(cdt)
    y1 = matmul_bias(x_nhwc.reshape(N * H * W, Cin), w1, b1,
                     relu=True, out_dtype=cdt)                          # (N*H*W, CD)

    # --- conv2: grouped 3x3, stride, pad=1 + BN + ReLU (tap-matmul kernel, no im2col) ---
    s2, b2 = fold_bn(params["bn2"])
    w2 = (grouped_3x3_taps(params["w2"], C) * s2[None, None, :]).astype(cdt)
    y2 = grouped_conv3x3_bn_relu(y1.reshape(N, H, W, CD), w2, b2, stride=s)  # (N,Ho,Wo,CD)
    y2f = y2.reshape(N * Ho * Wo, CD)

    # --- conv3 (1x1 + BN) with the shortcut fused in, ReLU epilogue ---
    s3, b3 = fold_bn(params["bn3"])
    w3 = (params["w3"][:, :, 0, 0].T * s3[None, :]).astype(cdt)
    if s != 1 or Cin != out4:
        ss, bs = fold_bn(params["bns"])
        ws = (params["ws"][:, :, 0, 0].T * ss[None, :]).astype(cdt)
        xs = x_nhwc[:, ::s, ::s, :].reshape(N * Ho * Wo, Cin)
        out = dual_matmul_bias_relu(y2f, w3, xs, ws, b3 + bs, out_dtype=cdt)
    else:
        short = x_nhwc.reshape(N * Ho * Wo, out4)
        out = matmul_bias(y2f, w3, b3, relu=True, residual=short, out_dtype=cdt)

    # exit transpose on bf16, cast to f32 at the boundary (matches module dtype).
    return jnp.transpose(out.reshape(N, Ho, Wo, out4), (0, 3, 1, 2)).astype(jnp.float32)


# ------------------------- pure-JAX reference ------------------------------

def reference(x, params, in_channels, out_channels, stride):
    C = CARDINALITY
    out4 = out_channels * 4

    def conv(v, w, s=1, pad="VALID", groups=1):
        return lax.conv_general_dilated(
            v, w, (s, s), pad,
            dimension_numbers=("NCHW", "OIHW", "NCHW"),
            feature_group_count=groups)

    def bn(v, p):
        gamma, beta, mean, var = p
        sc = gamma / jnp.sqrt(var + BN_EPS)
        bi = beta - mean * sc
        return v * sc[None, :, None, None] + bi[None, :, None, None]

    y = jax.nn.relu(bn(conv(x, params["w1"], groups=C), params["bn1"]))
    y = jax.nn.relu(bn(conv(y, params["w2"], s=stride, pad=[(1, 1), (1, 1)], groups=C),
                       params["bn2"]))
    y = bn(conv(y, params["w3"]), params["bn3"])
    if stride != 1 or in_channels != out4:
        sh = bn(conv(x, params["ws"], s=stride), params["bns"])
    else:
        sh = x
    return jax.nn.relu(y + sh)


# --------------------------------- main ------------------------------------

if __name__ == "__main__":
    in_channels, out_channels, stride = 32, 64, 2   # small but group-count compatible
    key = jax.random.PRNGKey(0)
    kx, kp = jax.random.split(key)
    x = jax.random.normal(kx, (2, in_channels, 16, 16), jnp.float32)
    params = init_params(kp, in_channels, out_channels, stride)

    fwd = jax.jit(lambda v: resnext_bottleneck_forward(
        v, params, in_channels, out_channels, stride))
    out = jax.block_until_ready(fwd(x))

    ref = reference(x, params, in_channels, out_channels, stride)
    assert out.shape == ref.shape, (out.shape, ref.shape)
    max_err = float(jnp.max(jnp.abs(out - ref)))
    # bf16 activations/weights with f32 accumulation vs. a pure-f32 reference.
    if max_err > 5e-2:
        raise AssertionError(f"Pallas output mismatch, max abs err = {max_err}")
    print("KERNEL_OK")
</pallas_src>

<mosaic_0001>
module attributes {stable_mosaic.version = 11 : i64} {
  func.func @_matmul_kernel(%arg0: i32, %arg1: memref<256x32xbf16, #tpu.memory_space<vmem>>, %arg2: memref<32x128xbf16, #tpu.memory_space<vmem>>, %arg3: memref<1x128xf32, #tpu.memory_space<vmem>>, %arg4: memref<256x128xbf16, #tpu.memory_space<vmem>>) attributes {dimension_semantics = [#tpu.dimension_semantics<parallel>], iteration_bounds = array<i64: 2>, scalar_prefetch = 0 : i64, scratch_operands = 0 : i64, tpu.core_type = #tpu.core_type<tc>, window_params = [{transform_indices = @transform_0, window_bounds = array<i64: 256, 32>}, {pipeline_mode = #tpu.pipeline_mode<synchronous>, transform_indices = @transform_1, window_bounds = array<i64: 32, 128>}, {pipeline_mode = #tpu.pipeline_mode<synchronous>, transform_indices = @transform_2, window_bounds = array<i64: 1, 128>}, {transform_indices = @transform_3, window_bounds = array<i64: 256, 128>}]} {
    %c0 = arith.constant 0 : index
    %c0_0 = arith.constant 0 : index
    %0 = vector.load %arg1[%c0, %c0_0] : memref<256x32xbf16, #tpu.memory_space<vmem>>, vector<256x32xbf16>
    %c0_1 = arith.constant 0 : index
    %c0_2 = arith.constant 0 : index
    %1 = vector.load %arg2[%c0_1, %c0_2] : memref<32x128xbf16, #tpu.memory_space<vmem>>, vector<32x128xbf16>
    %cst = arith.constant dense<0.000000e+00> : vector<256x128xf32>
    %2 = tpu.matmul %0, %1, %cst {dimension_numbers = #tpu.dot_dimension_numbers<[1], [0], [0], [1], [0, 0, 1, 1], [], []>} : vector<256x32xbf16>, vector<32x128xbf16>, vector<256x128xf32> -> vector<256x128xf32>
    %c0_3 = arith.constant 0 : index
    %c0_4 = arith.constant 0 : index
    %3 = vector.load %arg3[%c0_3, %c0_4] : memref<1x128xf32, #tpu.memory_space<vmem>>, vector<1x128xf32>
    %4 = vector.broadcast %3 : vector<1x128xf32> to vector<256x128xf32>
    %5 = arith.addf %2, %4 : vector<256x128xf32>
    %cst_5 = arith.constant 0.000000e+00 : f32
    %6 = vector.broadcast %cst_5 : f32 to vector<256x128xf32>
    %7 = arith.maximumf %5, %6 : vector<256x128xf32>
    %8 = arith.truncf %7 : vector<256x128xf32> to vector<256x128xbf16>
    %c0_6 = arith.constant 0 : index
    %c0_7 = arith.constant 0 : index
    %9 = vector.load %arg4[%c0_6, %c0_7] : memref<256x128xbf16, #tpu.memory_space<vmem>>, vector<256x128xbf16>
    tpu.vector_store %arg4[%c0_6, %c0_7], %8 {strides = array<i32>} : memref<256x128xbf16, #tpu.memory_space<vmem>>, vector<256x128xbf16>,
    return
  }
  func.func @transform_0(%arg0: i32) -> (i32, i32) {
    %c0_i32 = arith.constant 0 : i32
    %c0_i32_0 = arith.constant 0 : i32
    return %arg0, %c0_i32 : i32, i32
  }
  func.func @transform_1(%arg0: i32) -> (i32, i32) {
    %c0_i32 = arith.constant 0 : i32
    %c0_i32_0 = arith.constant 0 : i32
    %c0_i32_1 = arith.constant 0 : i32
    return %c0_i32, %c0_i32_0 : i32, i32
  }
  func.func @transform_2(%arg0: i32) -> (i32, i32) {
    %c0_i32 = arith.constant 0 : i32
    %c0_i32_0 = arith.constant 0 : i32
    %c0_i32_1 = arith.constant 0 : i32
    return %c0_i32, %c0_i32_0 : i32, i32
  }
  func.func @transform_3(%arg0: i32) -> (i32, i32) {
    %c0_i32 = arith.constant 0 : i32
    %c0_i32_0 = arith.constant 0 : i32
    return %arg0, %c0_i32 : i32, i32
  }
}

module attributes {stable_mosaic.version = 11 : i64} {
  func.func @_conv3x3_kernel(%arg0: i32, %arg1: memref<1x90x512xbf16, #tpu.memory_space<vmem>>, %arg2: memref<9x128x128xbf16, #tpu.memory_space<vmem>>, %arg3: memref<1x128xf32, #tpu.memory_space<vmem>>, %arg4: memref<1x8x8x128xbf16, #tpu.memory_space<vmem>>, %arg5: memref<72x128xf32, #tpu.memory_space<vmem>>) attributes {dimension_semantics = [#tpu.dimension_semantics<parallel>], iteration_bounds = array<i64: 2>, scalar_prefetch = 0 : i64, scratch_operands = 1 : i64, tpu.core_type = #tpu.core_type<tc>, window_params = [{transform_indices = @transform_0, window_bounds = array<i64: 1, 90, 512>}, {pipeline_mode = #tpu.pipeline_mode<synchronous>, transform_indices = @transform_1, window_bounds = array<i64: 9, 128, 128>}, {pipeline_mode = #tpu.pipeline_mode<synchronous>, transform_indices = @transform_2, window_bounds = array<i64: 1, 128>}, {transform_indices = @transform_3, window_bounds = array<i64: 1, 8, 8, 128>}]} {
    %c0 = arith.constant 0 : index
    %c0_0 = arith.constant 0 : index
    %c0_1 = arith.constant 0 : index
    %0 = vector.load %arg1[%c0, %c0_0, %c0_1] : memref<1x90x512xbf16, #tpu.memory_space<vmem>>, vector<1x72x128xbf16>
    %1 = vector.shape_cast %0 : vector<1x72x128xbf16> to vector<72x128xbf16>
    %c0_2 = arith.constant 0 : index
    %c0_3 = arith.constant 0 : index
    %c0_4 = arith.constant 0 : index
    %2 = vector.load %arg2[%c0_2, %c0_3, %c0_4] : memref<9x128x128xbf16, #tpu.memory_space<vmem>>, vector<1x128x128xbf16>
    %3 = vector.shape_cast %2 : vector<1x128x128xbf16> to vector<128x128xbf16>
    %cst = arith.constant dense<0.000000e+00> : vector<72x128xf32>
    %4 = tpu.matmul %1, %3, %cst {dimension_numbers = #tpu.dot_dimension_numbers<[1], [0], [0], [1], [0, 0, 1, 1], [], []>} : vector<72x128xbf16>, vector<128x128xbf16>, vector<72x128xf32> -> vector<72x128xf32>
    %c0_5 = arith.constant 0 : index
    %c0_6 = arith.constant 0 : index
    %5 = vector.load %arg5[%c0_5, %c0_6] : memref<72x128xf32, #tpu.memory_space<vmem>>, vector<72x128xf32>
    tpu.vector_store %arg5[%c0_5, %c0_6], %4 {strides = array<i32>} : memref<72x128xf32, #tpu.memory_space<vmem>>, vector<72x128xf32>,
    %c0_7 = arith.constant 0 : index
    %c0_8 = arith.constant 0 : index
    %c128 = arith.constant 128 : index
    %6 = vector.load %arg1[%c0_7, %c0_8, %c128] : memref<1x90x512xbf16, #tpu.memory_space<vmem>>, vector<1x72x128xbf16>
    %7 = vector.shape_cast %6 : vector<1x72x128xbf16> to vector<72x128xbf16>
    %c1 = arith.constant 1 : index
    %c0_9 = arith.constant 0 : index
    %c0_10 = arith.constant 0 : index
    %8 = vector.load %arg2[%c1, %c0_9, %c0_10] : memref<9x128x128xbf16, #tpu.memory_space<vmem>>, vector<1x128x128xbf16>
    %9 = vector.shape_cast %8 : vector<1x128x128xbf16> to vector<128x128xbf16>
    %cst_11 = arith.constant dense<0.000000e+00> : vector<72x128xf32>
    %10 = tpu.matmul %7, %9, %cst_11 {dimension_numbers = #tpu.dot_dimension_numbers<[1], [0], [0], [1], [0, 0, 1, 1], [], []>} : vector<72x128xbf16>, vector<128x128xbf16>, vector<72x128xf32> -> vector<72x128xf32>
    %c0_12 = arith.constant 0 : index
    %c0_13 = arith.constant 0 : index
    %11 = vector.load %arg5[%c0_12, %c0_13] : memref<72x128xf32, #tpu.memory_space<vmem>>, vector<72x128xf32>
    %12 = arith.addf %11, %10 : vector<72x128xf32>
    %c0_14 = arith.constant 0 : index
    %c0_15 = arith.constant 0 : index
    %13 = vector.load %arg5[%c0_14, %c0_15] : memref<72x128xf32, #tpu.memory_space<vmem>>, vector<72x128xf32>
    tpu.vector_store %arg5[%c0_14, %c0_15], %12 {strides = array<i32>} : memref<72x128xf32, #tpu.memory_space<vmem>>, vector<72x128xf32>,
    %c0_16 = arith.constant 0 : index
    %c1_17 = arith.constant 1 : index
    %c0_18 = arith.constant 0 : index
    %14 = vector.load %arg1[%c0_16, %c1_17, %c0_18] : memref<1x90x512xbf16, #tpu.memory_space<vmem>>, vector<1x72x128xbf16>
    %15 = vector.shape_cast %14 : vector<1x72x128xbf16> to vector<72x128xbf16>
    %c2 = arith.constant 2 : index
    %c0_19 = arith.constant 0 : index
    %c0_20 = arith.constant 0 : index
    %16 = vector.load %arg2[%c2, %c0_19, %c0_20] : memref<9x128x128xbf16, #tpu.memory_space<vmem>>, vector<1x128x128xbf16>
    %17 = vector.shape_cast %16 : vector<1x128x128xbf16> to vector<128x128xbf16>
    %cst_21 = arith.constant dense<0.000000e+00> : vector<72x128xf32>
    %18 = tpu.matmul %15, %17, %cst_21 {dimension_numbers = #tpu.dot_dimension_numbers<[1], [0], [0], [1], [0, 0, 1, 1], [], []>} : vector<72x128xbf16>, vector<128x128xbf16>, vector<72x128xf32> -> vector<72x128xf32>
    %c0_22 = arith.constant 0 : index
    %c0_23 = arith.constant 0 : index
    %19 = vector.load %arg5[%c0_22, %c0_23] : memref<72x128xf32, #tpu.memory_space<vmem>>, vector<72x128xf32>
    %20 = arith.addf %19, %18 : vector<72x128xf32>
    %c0_24 = arith.constant 0 : index
    %c0_25 = arith.constant 0 : index
    %21 = vector.load %arg5[%c0_24, %c0_25] : memref<72x128xf32, #tpu.memory_space<vmem>>, vector<72x128xf32>
    tpu.vector_store %arg5[%c0_24, %c0_25], %20 {strides = array<i32>} : memref<72x128xf32, #tpu.memory_space<vmem>>, vector<72x128xf32>,
    %c0_26 = arith.constant 0 : index
    %c0_27 = arith.constant 0 : index
    %c256 = arith.constant 256 : index
    %22 = vector.load %arg1[%c0_26, %c0_27, %c256] : memref<1x90x512xbf16, #tpu.memory_space<vmem>>, vector<1x72x128xbf16>
    %23 = vector.shape_cast %22 : vector<1x72x128xbf16> to vector<72x128xbf16>
    %c3 = arith.constant 3 : index
    %c0_28 = arith.constant 0 : index
    %c0_29 = arith.constant 0 : index
    %24 = vector.load %arg2[%c3, %c0_28, %c0_29] : memref<9x128x128xbf16, #tpu.memory_space<vmem>>, vector<1x128x128xbf16>
    %25 = vector.shape_cast %24 : vector<1x128x128xbf16> to vector<128x128xbf16>
    %cst_30 = arith.constant dense<0.000000e+00> : vector<72x128xf32>
    %26 = tpu.matmul %23, %25, %cst_30 {dimension_numbers = #tpu.dot_dimension_numbers<[1], [0], [0], [1], [0, 0, 1, 1], [], []>} : vector<72x128xbf16>, vector<128x128xbf16>, vector<72x128xf32> -> vector<72x128xf32>
    %c0_31 = arith.constant 0 : index
    %c0_32 = arith.constant 0 : index
    %27 = vector.load %arg5[%c0_31, %c0_32] : memref<72x128xf32, #tpu.memory_space<vmem>>, vector<72x128xf32>
    %28 = arith.addf %27, %26 : vector<72x128xf32>
    %c0_33 = arith.constant 0 : index
    %c0_34 = arith.constant 0 : index
    %29 = vector.load %arg5[%c0_33, %c0_34] : memref<72x128xf32, #tpu.memory_space<vmem>>, vector<72x128xf32>
    tpu.vector_store %arg5[%c0_33, %c0_34], %28 {strides = array<i32>} : memref<72x128xf32, #tpu.memory_space<vmem>>, vector<72x128xf32>,
    %c0_35 = arith.constant 0 : index
    %c0_36 = arith.constant 0 : index
    %c384 = arith.constant 384 : index
    %30 = vector.load %arg1[%c0_35, %c0_36, %c384] : memref<1x90x512xbf16, #tpu.memory_space<vmem>>, vector<1x72x128xbf16>
    %31 = vector.shape_cast %30 : vector<1x72x128xbf16> to vector<72x128xbf16>
    %c4 = arith.constant 4 : index
    %c0_37 = arith.constant 0 : index
    %c0_38 = arith.constant 0 : index
    %32 = vector.load %arg2[%c4, %c0_37, %c0_38] : memref<9x128x128xbf16, #tpu.memory_space<vmem>>, vector<1x128x128xbf16>
    %33 = vector.shape_cast %32 : vector<1x128x128xbf16> to vector<128x128xbf16>
    %cst_39 = arith.constant dense<0.000000e+00> : vector<72x128xf32>
    %34 = tpu.matmul %31, %33, %cst_39 {dimension_numbers = #tpu.dot_dimension_numbers<[1], [0], [0], [1], [0, 0, 1, 1], [], []>} : vector<72x128xbf16>, vector<128x128xbf16>, vector<72x128xf32> -> vector<72x128xf32>
    %c0_40 = arith.constant 0 : index
    %c0_41 = arith.constant 0 : index
    %35 = vector.load %arg5[%c0_40, %c0_41] : memref<72x128xf32, #tpu.memory_space<vmem>>, vector<72x128xf32>
    %36 = arith.addf %35, %34 : vector<72x128xf32>
    %c0_42 = arith.constant 0 : index
    %c0_43 = arith.constant 0 : index
    %37 = vector.load %arg5[%c0_42, %c0_43] : memref<72x128xf32, #tpu.memory_space<vmem>>, vector<72x128xf32>
    tpu.vector_store %arg5[%c0_42, %c0_43], %36 {strides = array<i32>} : memref<72x128xf32, #tpu.memory_space<vmem>>, vector<72x128xf32>,
    %c0_44 = arith.constant 0 : index
    %c1_45 = arith.constant 1 : index
    %c256_46 = arith.constant 256 : index
    %38 = vector.load %arg1[%c0_44, %c1_45, %c256_46] : memref<1x90x512xbf16, #tpu.memory_space<vmem>>, vector<1x72x128xbf16>
    %39 = vector.shape_cast %38 : vector<1x72x128xbf16> to vector<72x128xbf16>
    %c5 = arith.constant 5 : index
    %c0_47 = arith.constant 0 : index
    %c0_48 = arith.constant 0 : index
    %40 = vector.load %arg2[%c5, %c0_47, %c0_48] : memref<9x128x128xbf16, #tpu.memory_space<vmem>>, vector<1x128x128xbf16>
    %41 = vector.shape_cast %40 : vector<1x128x128xbf16> to vector<128x128xbf16>
    %cst_49 = arith.constant dense<0.000000e+00> : vector<72x128xf32>
    %42 = tpu.matmul %39, %41, %cst_49 {dimension_numbers = #tpu.dot_dimension_numbers<[1], [0], [0], [1], [0, 0, 1, 1], [], []>} : vector<72x128xbf16>, vector<128x128xbf16>, vector<72x128xf32> -> vector<72x128xf32>
    %c0_50 = arith.constant 0 : index
    %c0_51 = arith.constant 0 : index
    %43 = vector.load %arg5[%c0_50, %c0_51] : memref<72x128xf32, #tpu.memory_space<vmem>>, vector<72x128xf32>
    %44 = arith.addf %43, %42 : vector<72x128xf32>
    %c0_52 = arith.constant 0 : index
    %c0_53 = arith.constant 0 : index
    %45 = vector.load %arg5[%c0_52, %c0_53] : memref<72x128xf32, #tpu.memory_space<vmem>>, vector<72x128xf32>
    tpu.vector_store %arg5[%c0_52, %c0_53], %44 {strides = array<i32>} : memref<72x128xf32, #tpu.memory_space<vmem>>, vector<72x128xf32>,
    %c0_54 = arith.constant 0 : index
    %c9 = arith.constant 9 : index
    %c0_55 = arith.constant 0 : index
    %46 = vector.load %arg1[%c0_54, %c9, %c0_55] : memref<1x90x512xbf16, #tpu.memory_space<vmem>>, vector<1x72x128xbf16>
    %47 = vector.shape_cast %46 : vector<1x72x128xbf16> to vector<72x128xbf16>
    %c6 = arith.constant 6 : index
    %c0_56 = arith.constant 0 : index
    %c0_57 = arith.constant 0 : index
    %48 = vector.load %arg2[%c6, %c0_56, %c0_57] : memref<9x128x128xbf16, #tpu.memory_space<vmem>>, vector<1x128x128xbf16>
    %49 = vector.shape_cast %48 : vector<1x128x128xbf16> to vector<128x128xbf16>
    %cst_58 = arith.constant dense<0.000000e+00> : vector<72x128xf32>
    %50 = tpu.matmul %47, %49, %cst_58 {dimension_numbers = #tpu.dot_dimension_numbers<[1], [0], [0], [1], [0, 0, 1, 1], [], []>} : vector<72x128xbf16>, vector<128x128xbf16>, vector<72x128xf32> -> vector<72x128xf32>
    %c0_59 = arith.constant 0 : index
    %c0_60 = arith.constant 0 : index
    %51 = vector.load %arg5[%c0_59, %c0_60] : memref<72x128xf32, #tpu.memory_space<vmem>>, vector<72x128xf32>
    %52 = arith.addf %51, %50 : vector<72x128xf32>
    %c0_61 = arith.constant 0 : index
    %c0_62 = arith.constant 0 : index
    %53 = vector.load %arg5[%c0_61, %c0_62] : memref<72x128xf32, #tpu.memory_space<vmem>>, vector<72x128xf32>
    tpu.vector_store %arg5[%c0_61, %c0_62], %52 {strides = array<i32>} : memref<72x128xf32, #tpu.memory_space<vmem>>, vector<72x128xf32>,
    %c0_63 = arith.constant 0 : index
    %c9_64 = arith.constant 9 : index
    %c128_65 = arith.constant 128 : index
    %54 = vector.load %arg1[%c0_63, %c9_64, %c128_65] : memref<1x90x512xbf16, #tpu.memory_space<vmem>>, vector<1x72x128xbf16>
    %55 = vector.shape_cast %54 : vector<1x72x128xbf16> to vector<72x128xbf16>
    %c7 = arith.constant 7 : index
    %c0_66 = arith.constant 0 : index
    %c0_67 = arith.constant 0 : index
    %56 = vector.load %arg2[%c7, %c0_66, %c0_67] : memref<9x128x128xbf16, #tpu.memory_space<vmem>>, vector<1x128x128xbf16>
    %57 = vector.shape_cast %56 : vector<1x128x128xbf16> to vector<128x128xbf16>
    %cst_68 = arith.constant dense<0.000000e+00> : vector<72x128xf32>
    %58 = tpu.matmul %55, %57, %cst_68 {dimension_numbers = #tpu.dot_dimension_numbers<[1], [0], [0], [1], [0, 0, 1, 1], [], []>} : vector<72x128xbf16>, vector<128x128xbf16>, vector<72x128xf32> -> vector<72x128xf32>
    %c0_69 = arith.constant 0 : index
    %c0_70 = arith.constant 0 : index
    %59 = vector.load %arg5[%c0_69, %c0_70] : memref<72x128xf32, #tpu.memory_space<vmem>>, vector<72x128xf32>
    %60 = arith.addf %59, %58 : vector<72x128xf32>
    %c0_71 = arith.constant 0 : index
    %c0_72 = arith.constant 0 : index
    %61 = vector.load %arg5[%c0_71, %c0_72] : memref<72x128xf32, #tpu.memory_space<vmem>>, vector<72x128xf32>
    tpu.vector_store %arg5[%c0_71, %c0_72], %60 {strides = array<i32>} : memref<72x128xf32, #tpu.memory_space<vmem>>, vector<72x128xf32>,
    %c0_73 = arith.constant 0 : index
    %c10 = arith.constant 10 : index
    %c0_74 = arith.constant 0 : index
    %62 = vector.load %arg1[%c0_73, %c10, %c0_74] : memref<1x90x512xbf16, #tpu.memory_space<vmem>>, vector<1x72x128xbf16>
    %63 = vector.shape_cast %62 : vector<1x72x128xbf16> to vector<72x128xbf16>
    %c8 = arith.constant 8 : index
    %c0_75 = arith.constant 0 : index
    %c0_76 = arith.constant 0 : index
    %64 = vector.load %arg2[%c8, %c0_75, %c0_76] : memref<9x128x128xbf16, #tpu.memory_space<vmem>>, vector<1x128x128xbf16>
    %65 = vector.shape_cast %64 : vector<1x128x128xbf16> to vector<128x128xbf16>
    %cst_77 = arith.constant dense<0.000000e+00> : vector<72x128xf32>
    %66 = tpu.matmul %63, %65, %cst_77 {dimension_numbers = #tpu.dot_dimension_numbers<[1], [0], [0], [1], [0, 0, 1, 1], [], []>} : vector<72x128xbf16>, vector<128x128xbf16>, vector<72x128xf32> -> vector<72x128xf32>
    %c0_78 = arith.constant 0 : index
    %c0_79 = arith.constant 0 : index
    %67 = vector.load %arg5[%c0_78, %c0_79] : memref<72x128xf32, #tpu.memory_space<vmem>>, vector<72x128xf32>
    %68 = arith.addf %67, %66 : vector<72x128xf32>
    %c0_80 = arith.constant 0 : index
    %c0_81 = arith.constant 0 : index
    %69 = vector.load %arg5[%c0_80, %c0_81] : memref<72x128xf32, #tpu.memory_space<vmem>>, vector<72x128xf32>
    tpu.vector_store %arg5[%c0_80, %c0_81], %68 {strides = array<i32>} : memref<72x128xf32, #tpu.memory_space<vmem>>, vector<72x128xf32>,
    %c0_82 = arith.constant 0 : index
    %c0_83 = arith.constant 0 : index
    %70 = vector.load %arg3[%c0_82, %c0_83] : memref<1x128xf32, #tpu.memory_space<vmem>>, vector<1x128xf32>
    %c0_84 = arith.constant 0 : index
    %c0_85 = arith.constant 0 : index
    %71 = vector.load %arg5[%c0_84, %c0_85] : memref<72x128xf32, #tpu.memory_space<vmem>>, vector<8x128xf32>
    %72 = vector.broadcast %70 : vector<1x128xf32> to vector<8x128xf32>
    %73 = arith.addf %71, %72 : vector<8x128xf32>
    %cst_86 = arith.constant 0.000000e+00 : f32
    %74 = vector.broadcast %cst_86 : f32 to vector<8x128xf32>
    %75 = arith.maximumf %73, %74 : vector<8x128xf32>
    %76 = arith.truncf %75 : vector<8x128xf32> to vector<8x128xbf16>
    %c0_87 = arith.constant 0 : index
    %c0_88 = arith.constant 0 : index
    %c0_89 = arith.constant 0 : index
    %c0_90 = arith.constant 0 : index
    %77 = vector.load %arg4[%c0_87, %c0_88, %c0_89, %c0_90] : memref<1x8x8x128xbf16, #tpu.memory_space<vmem>>, vector<1x1x8x128xbf16>
    %78 = vector.shape_cast %77 : vector<1x1x8x128xbf16> to vector<8x128xbf16>
    %79 = vector.shape_cast %76 : vector<8x128xbf16> to vector<1x1x8x128xbf16>
    tpu.vector_store %arg4[%c0_87, %c0_88, %c0_89, %c0_90], %79 {strides = array<i32>} : memref<1x8x8x128xbf16, #tpu.memory_space<vmem>>, vector<1x1x8x128xbf16>,
    %c9_91 = arith.constant 9 : index
    %c0_92 = arith.constant 0 : index
    %80 = vector.load %arg5[%c9_91, %c0_92] : memref<72x128xf32, #tpu.memory_space<vmem>>, vector<8x128xf32>
    %81 = vector.broadcast %70 : vector<1x128xf32> to vector<8x128xf32>
    %82 = arith.addf %80, %81 : vector<8x128xf32>
    %cst_93 = arith.constant 0.000000e+00 : f32
    %83 = vector.broadcast %cst_93 : f32 to vector<8x128xf32>
    %84 = arith.maximumf %82, %83 : vector<8x128xf32>
    %85 = arith.truncf %84 : vector<8x128xf32> to vector<8x128xbf16>
    %c0_94 = arith.constant 0 : index
    %c1_95 = arith.constant 1 : index
    %c0_96 = arith.constant 0 : index
    %c0_97 = arith.constant 0 : index
    %86 = vector.load %arg4[%c0_94, %c1_95, %c0_96, %c0_97] : memref<1x8x8x128xbf16, #tpu.memory_space<vmem>>, vector<1x1x8x128xbf16>
    %87 = vector.shape_cast %86 : vector<1x1x8x128xbf16> to vector<8x128xbf16>
    %88 = vector.shape_cast %85 : vector<8x128xbf16> to vector<1x1x8x128xbf16>
    tpu.vector_store %arg4[%c0_94, %c1_95, %c0_96, %c0_97], %88 {strides = array<i32>} : memref<1x8x8x128xbf16, #tpu.memory_space<vmem>>, vector<1x1x8x128xbf16>,
    %c18 = arith.constant 18 : index
    %c0_98 = arith.constant 0 : index
    %89 = vector.load %arg5[%c18, %c0_98] : memref<72x128xf32, #tpu.memory_space<vmem>>, vector<8x128xf32>
    %90 = vector.broadcast %70 : vector<1x128xf32> to vector<8x128xf32>
    %91 = arith.addf %89, %90 : vector<8x128xf32>
    %cst_99 = arith.constant 0.000000e+00 : f32
    %92 = vector.broadcast %cst_99 : f32 to vector<8x128xf32>
    %93 = arith.maximumf %91, %92 : vector<8x128xf32>
    %94 = arith.truncf %93 : vector<8x128xf32> to vector<8x128xbf16>
    %c0_100 = arith.constant 0 : index
    %c2_101 = arith.constant 2 : index
    %c0_102 = arith.constant 0 : index
    %c0_103 = arith.constant 0 : index
    %95 = vector.load %arg4[%c0_100, %c2_101, %c0_102, %c0_103] : memref<1x8x8x128xbf16, #tpu.memory_space<vmem>>, vector<1x1x8x128xbf16>
    %96 = vector.shape_cast %95 : vector<1x1x8x128xbf16> to vector<8x128xbf16>
    %97 = vector.shape_cast %94 : vector<8x128xbf16> to vector<1x1x8x128xbf16>
    tpu.vector_store %arg4[%c0_100, %c2_101, %c0_102, %c0_103], %97 {strides = array<i32>} : memref<1x8x8x128xbf16, #tpu.memory_space<vmem>>, vector<1x1x8x128xbf16>,
    %c27 = arith.constant 27 : index
    %c0_104 = arith.constant 0 : index
    %98 = vector.load %arg5[%c27, %c0_104] : memref<72x128xf32, #tpu.memory_space<vmem>>, vector<8x128xf32>
    %99 = vector.broadcast %70 : vector<1x128xf32> to vector<8x128xf32>
    %100 = arith.addf %98, %99 : vector<8x128xf32>
    %cst_105 = arith.constant 0.000000e+00 : f32
    %101 = vector.broadcast %cst_105 : f32 to vector<8x128xf32>
    %102 = arith.maximumf %100, %101 : vector<8x128xf32>
    %103 = arith.truncf %102 : vector<8x128xf32> to vector<8x128xbf16>
    %c0_106 = arith.constant 0 : index
    %c3_107 = arith.constant 3 : index
    %c0_108 = arith.constant 0 : index
    %c0_109 = arith.constant 0 : index
    %104 = vector.load %arg4[%c0_106, %c3_107, %c0_108, %c0_109] : memref<1x8x8x128xbf16, #tpu.memory_space<vmem>>, vector<1x1x8x128xbf16>
    %105 = vector.shape_cast %104 : vector<1x1x8x128xbf16> to vector<8x128xbf16>
    %106 = vector.shape_cast %103 : vector<8x128xbf16> to vector<1x1x8x128xbf16>
    tpu.vector_store %arg4[%c0_106, %c3_107, %c0_108, %c0_109], %106 {strides = array<i32>} : memref<1x8x8x128xbf16, #tpu.memory_space<vmem>>, vector<1x1x8x128xbf16>,
    %c36 = arith.constant 36 : index
    %c0_110 = arith.constant 0 : index
    %107 = vector.load %arg5[%c36, %c0_110] : memref<72x128xf32, #tpu.memory_space<vmem>>, vector<8x128xf32>
    %108 = vector.broadcast %70 : vector<1x128xf32> to vector<8x128xf32>
    %109 = arith.addf %107, %108 : vector<8x128xf32>
    %cst_111 = arith.constant 0.000000e+00 : f32
    %110 = vector.broadcast %cst_111 : f32 to vector<8x128xf32>
    %111 = arith.maximumf %109, %110 : vector<8x128xf32>
    %112 = arith.truncf %111 : vector<8x128xf32> to vector<8x128xbf16>
    %c0_112 = arith.constant 0 : index
    %c4_113 = arith.constant 4 : index
    %c0_114 = arith.constant 0 : index
    %c0_115 = arith.constant 0 : index
    %113 = vector.load %arg4[%c0_112, %c4_113, %c0_114, %c0_115] : memref<1x8x8x128xbf16, #tpu.memory_space<vmem>>, vector<1x1x8x128xbf16>
    %114 = vector.shape_cast %113 : vector<1x1x8x128xbf16> to vector<8x128xbf16>
    %115 = vector.shape_cast %112 : vector<8x128xbf16> to vector<1x1x8x128xbf16>
    tpu.vector_store %arg4[%c0_112, %c4_113, %c0_114, %c0_115], %115 {strides = array<i32>} : memref<1x8x8x128xbf16, #tpu.memory_space<vmem>>, vector<1x1x8x128xbf16>,
    %c45 = arith.constant 45 : index
    %c0_116 = arith.constant 0 : index
    %116 = vector.load %arg5[%c45, %c0_116] : memref<72x128xf32, #tpu.memory_space<vmem>>, vector<8x128xf32>
    %117 = vector.broadcast %70 : vector<1x128xf32> to vector<8x128xf32>
    %118 = arith.addf %116, %117 : vector<8x128xf32>
    %cst_117 = arith.constant 0.000000e+00 : f32
    %119 = vector.broadcast %cst_117 : f32 to vector<8x128xf32>
    %120 = arith.maximumf %118, %119 : vector<8x128xf32>
    %121 = arith.truncf %120 : vector<8x128xf32> to vector<8x128xbf16>
    %c0_118 = arith.constant 0 : index
    %c5_119 = arith.constant 5 : index
    %c0_120 = arith.constant 0 : index
    %c0_121 = arith.constant 0 : index
    %122 = vector.load %arg4[%c0_118, %c5_119, %c0_120, %c0_121] : memref<1x8x8x128xbf16, #tpu.memory_space<vmem>>, vector<1x1x8x128xbf16>
    %123 = vector.shape_cast %122 : vector<1x1x8x128xbf16> to vector<8x128xbf16>
    %124 = vector.shape_cast %121 : vector<8x128xbf16> to vector<1x1x8x128xbf16>
    tpu.vector_store %arg4[%c0_118, %c5_119, %c0_120, %c0_121], %124 {strides = array<i32>} : memref<1x8x8x128xbf16, #tpu.memory_space<vmem>>, vector<1x1x8x128xbf16>,
    %c54 = arith.constant 54 : index
    %c0_122 = arith.constant 0 : index
    %125 = vector.load %arg5[%c54, %c0_122] : memref<72x128xf32, #tpu.memory_space<vmem>>, vector<8x128xf32>
    %126 = vector.broadcast %70 : vector<1x128xf32> to vector<8x128xf32>
    %127 = arith.addf %125, %126 : vector<8x128xf32>
    %cst_123 = arith.constant 0.000000e+00 : f32
    %128 = vector.broadcast %cst_123 : f32 to vector<8x128xf32>
    %129 = arith.maximumf %127, %128 : vector<8x128xf32>
    %130 = arith.truncf %129 : vector<8x128xf32> to vector<8x128xbf16>
    %c0_124 = arith.constant 0 : index
    %c6_125 = arith.constant 6 : index
    %c0_126 = arith.constant 0 : index
    %c0_127 = arith.constant 0 : index
    %131 = vector.load %arg4[%c0_124, %c6_125, %c0_126, %c0_127] : memref<1x8x8x128xbf16, #tpu.memory_space<vmem>>, vector<1x1x8x128xbf16>
    %132 = vector.shape_cast %131 : vector<1x1x8x128xbf16> to vector<8x128xbf16>
    %133 = vector.shape_cast %130 : vector<8x128xbf16> to vector<1x1x8x128xbf16>
    tpu.vector_store %arg4[%c0_124, %c6_125, %c0_126, %c0_127], %133 {strides = array<i32>} : memref<1x8x8x128xbf16, #tpu.memory_space<vmem>>, vector<1x1x8x128xbf16>,
    %c63 = arith.constant 63 : index
    %c0_128 = arith.constant 0 : index
    %134 = vector.load %arg5[%c63, %c0_128] : memref<72x128xf32, #tpu.memory_space<vmem>>, vector<8x128xf32>
    %135 = vector.broadcast %70 : vector<1x128xf32> to vector<8x128xf32>
    %136 = arith.addf %134, %135 : vector<8x128xf32>
    %cst_129 = arith.constant 0.000000e+00 : f32
    %137 = vector.broadcast %cst_129 : f32 to vector<8x128xf32>
    %138 = arith.maximumf %136, %137 : vector<8x128xf32>
    %139 = arith.truncf %138 : vector<8x128xf32> to vector<8x128xbf16>
    %c0_130 = arith.constant 0 : index
    %c7_131 = arith.constant 7 : index
    %c0_132 = arith.constant 0 : index
    %c0_133 = arith.constant 0 : index
    %140 = vector.load %arg4[%c0_130, %c7_131, %c0_132, %c0_133] : memref<1x8x8x128xbf16, #tpu.memory_space<vmem>>, vector<1x1x8x128xbf16>
    %141 = vector.shape_cast %140 : vector<1x1x8x128xbf16> to vector<8x128xbf16>
    %142 = vector.shape_cast %139 : vector<8x128xbf16> to vector<1x1x8x128xbf16>
    tpu.vector_store %arg4[%c0_130, %c7_131, %c0_132, %c0_133], %142 {strides = array<i32>} : memref<1x8x8x128xbf16, #tpu.memory_space<vmem>>, vector<1x1x8x128xbf16>,
    return
  }
  func.func @transform_0(%arg0: i32) -> (i32, i32, i32) {
    %c0_i32 = arith.constant 0 : i32
    %c0_i32_0 = arith.constant 0 : i32
    %c0_i32_1 = arith.constant 0 : i32
    return %arg0, %c0_i32, %c0_i32_0 : i32, i32, i32
  }
  func.func @transform_1(%arg0: i32) -> (i32, i32, i32) {
    %c0_i32 = arith.constant 0 : i32
    %c0_i32_0 = arith.constant 0 : i32
    %c0_i32_1 = arith.constant 0 : i32
    %c0_i32_2 = arith.constant 0 : i32
    return %c0_i32, %c0_i32_0, %c0_i32_1 : i32, i32, i32
  }
  func.func @transform_2(%arg0: i32) -> (i32, i32) {
    %c0_i32 = arith.constant 0 : i32
    %c0_i32_0 = arith.constant 0 : i32
    %c0_i32_1 = arith.constant 0 : i32
    return %c0_i32, %c0_i32_0 : i32, i32
  }
  func.func @transform_3(%arg0: i32) -> (i32, i32, i32, i32) {
    %c0_i32 = arith.constant 0 : i32
    %c0_i32_0 = arith.constant 0 : i32
    %c0_i32_1 = arith.constant 0 : i32
    %c0_i32_2 = arith.constant 0 : i32
    return %arg0, %c0_i32, %c0_i32_0, %c0_i32_1 : i32, i32, i32, i32
  }
}

module attributes {stable_mosaic.version = 11 : i64} {
  func.func @_dual_matmul_kernel(%arg0: i32, %arg1: memref<128x128xbf16, #tpu.memory_space<vmem>>, %arg2: memref<128x256xbf16, #tpu.memory_space<vmem>>, %arg3: memref<128x32xbf16, #tpu.memory_space<vmem>>, %arg4: memref<32x256xbf16, #tpu.memory_space<vmem>>, %arg5: memref<1x256xf32, #tpu.memory_space<vmem>>, %arg6: memref<128x256xbf16, #tpu.memory_space<vmem>>) attributes {dimension_semantics = [#tpu.dimension_semantics<parallel>], iteration_bounds = array<i64: 1>, scalar_prefetch = 0 : i64, scratch_operands = 0 : i64, tpu.core_type = #tpu.core_type<tc>, window_params = [{transform_indices = @transform_0, window_bounds = array<i64: 128, 128>}, {pipeline_mode = #tpu.pipeline_mode<synchronous>, transform_indices = @transform_1, window_bounds = array<i64: 128, 256>}, {transform_indices = @transform_2, window_bounds = array<i64: 128, 32>}, {pipeline_mode = #tpu.pipeline_mode<synchronous>, transform_indices = @transform_3, window_bounds = array<i64: 32, 256>}, {pipeline_mode = #tpu.pipeline_mode<synchronous>, transform_indices = @transform_4, window_bounds = array<i64: 1, 256>}, {transform_indices = @transform_5, window_bounds = array<i64: 128, 256>}]} {
    %c0 = arith.constant 0 : index
    %c0_0 = arith.constant 0 : index
    %0 = vector.load %arg1[%c0, %c0_0] : memref<128x128xbf16, #tpu.memory_space<vmem>>, vector<128x128xbf16>
    %c0_1 = arith.constant 0 : index
    %c0_2 = arith.constant 0 : index
    %1 = vector.load %arg2[%c0_1, %c0_2] : memref<128x256xbf16, #tpu.memory_space<vmem>>, vector<128x256xbf16>
    %cst = arith.constant dense<0.000000e+00> : vector<128x256xf32>
    %2 = tpu.matmul %0, %1, %cst {dimension_numbers = #tpu.dot_dimension_numbers<[1], [0], [0], [1], [0, 0, 1, 1], [], []>} : vector<128x128xbf16>, vector<128x256xbf16>, vector<128x256xf32> -> vector<128x256xf32>
    %c0_3 = arith.constant 0 : index
    %c0_4 = arith.constant 0 : index
    %3 = vector.load %arg3[%c0_3, %c0_4] : memref<128x32xbf16, #tpu.memory_space<vmem>>, vector<128x32xbf16>
    %c0_5 = arith.constant 0 : index
    %c0_6 = arith.constant 0 : index
    %4 = vector.load %arg4[%c0_5, %c0_6] : memref<32x256xbf16, #tpu.memory_space<vmem>>, vector<32x256xbf16>
    %cst_7 = arith.constant dense<0.000000e+00> : vector<128x256xf32>
    %5 = tpu.matmul %3, %4, %cst_7 {dimension_numbers = #tpu.dot_dimension_numbers<[1], [0], [0], [1], [0, 0, 1, 1], [], []>} : vector<128x32xbf16>, vector<32x256xbf16>, vector<128x256xf32> -> vector<128x256xf32>
    %6 = arith.addf %2, %5 : vector<128x256xf32>
    %c0_8 = arith.constant 0 : index
    %c0_9 = arith.constant 0 : index
    %7 = vector.load %arg5[%c0_8, %c0_9] : memref<1x256xf32, #tpu.memory_space<vmem>>, vector<1x256xf32>
    %8 = vector.broadcast %7 : vector<1x256xf32> to vector<128x256xf32>
    %9 = arith.addf %6, %8 : vector<128x256xf32>
    %cst_10 = arith.constant 0.000000e+00 : f32
    %10 = vector.broadcast %cst_10 : f32 to vector<128x256xf32>
    %11 = arith.maximumf %9, %10 : vector<128x256xf32>
    %12 = arith.truncf %11 : vector<128x256xf32> to vector<128x256xbf16>
    %c0_11 = arith.constant 0 : index
    %c0_12 = arith.constant 0 : index
    %13 = vector.load %arg6[%c0_11, %c0_12] : memref<128x256xbf16, #tpu.memory_space<vmem>>, vector<128x256xbf16>
    tpu.vector_store %arg6[%c0_11, %c0_12], %12 {strides = array<i32>} : memref<128x256xbf16, #tpu.memory_space<vmem>>, vector<128x256xbf16>,
    return
  }
  func.func @transform_0(%arg0: i32) -> (i32, i32) {
    %c0_i32 = arith.constant 0 : i32
    %c0_i32_0 = arith.constant 0 : i32
    return %arg0, %c0_i32 : i32, i32
  }
  func.func @transform_1(%arg0: i32) -> (i32, i32) {
    %c0_i32 = arith.constant 0 : i32
    %c0_i32_0 = arith.constant 0 : i32
    %c0_i32_1 = arith.constant 0 : i32
    return %c0_i32, %c0_i32_0 : i32, i32
  }
  func.func @transform_2(%arg0: i32) -> (i32, i32) {
    %c0_i32 = arith.constant 0 : i32
    %c0_i32_0 = arith.constant 0 : i32
    return %arg0, %c0_i32 : i32, i32
  }
  func.func @transform_3(%arg0: i32) -> (i32, i32) {
    %c0_i32 = arith.constant 0 : i32
    %c0_i32_0 = arith.constant 0 : i32
    %c0_i32_1 = arith.constant 0 : i32
    return %c0_i32, %c0_i32_0 : i32, i32
  }
  func.func @transform_4(%arg0: i32) -> (i32, i32) {
    %c0_i32 = arith.constant 0 : i32
    %c0_i32_0 = arith.constant 0 : i32
    %c0_i32_1 = arith.constant 0 : i32
    return %c0_i32, %c0_i32_0 : i32, i32
  }
  func.func @transform_5(%arg0: i32) -> (i32, i32) {
    %c0_i32 = arith.constant 0 : i32
    %c0_i32_0 = arith.constant 0 : i32
    return %arg0, %c0_i32 : i32, i32
  }
}

</mosaic_0001>

<llo_original>
// kernel: _lambda_.3
$region0: #{_lambda_.3}
  #allocation0 [shape = 'u32[]', space=smem, size = 0x4, offset = 0x4, fixed_abs, tag = 'smem constant byte address 0x4 - core index']
  #allocation1 [shape = 'u32[72,128]{1,0:T(1,128)}', space=vmem, size = 0x9000, scoped, tag = 'internal scratch']
  %s0 = inlined_call_operand.vmem [shape: bf16[512,32], index: 0, kind: input, shape index: {}]
  %s1 = inlined_call_operand.vmem [shape: bf16[32,128], index: 1, kind: input, shape index: {}]
  %s2 = inlined_call_operand.vmem [shape: f32[1,128], index: 2, kind: input, shape index: {}]
  %s3 = inlined_call_operand.vmem [shape: bf16[512,128], index: 3, kind: output, shape index: {}]
  %s4 = sld [smem:[#allocation0]]
  $region45: #{_lambda_.3} parent=0
    _
  %s6 = ssub.s32 1, %s4
  %s7 = scalar_select 0, %s6, %s4
  loop: start=0, step=1, limit=4
  $region2: #{_lambda_.3} parent=0 // loop_pre_header
    _
  $region3: #{_lambda_.3} parent=0 // loop_header
    %s9 = sphi 0, %s13
    %p10 = scmp.ge.s32.totalorder %s9, 4
    %s19 = sphi 0, %s21
    %s22 = sphi 0, %s19
    %s23 = sphi 0, %s22
    %s39 = sphi 0, %s23
    %s43 = sphi 0, %s43
    %s45 = sphi 0, %s43
    %s46 = sphi 0, %s45
    %s60 = sphi 0, %s46
    %s64 = sphi 0, %s64
    %s66 = sphi 0, %s64
    %s67 = sphi 0, %s66
    %s81 = sphi 0, %s67
    %s87 = sphi 0, %s89
    %s90 = sphi 0, %s87
    %s91 = sphi 0, %s90
    %s107 = sphi 0, %s91
  $region4: #{_lambda_.3} parent=0 // loop_header_branch
    %12 = sbr.rel (%p10) target = $region8
  $region5: #{_lambda_.3} parent=0 // loop_body
    %s14 = ssub.s32 %s9, 1
    %s15 = ssub.s32 %s9, 2
    %s16 = sadd.s32 %s9, 1
    %s17 = ssub.s32 %s9, %s16
    %p18 = scmp.eq.s32.totalorder %s17, 0
    %s20 = sadd.s32 %s19, 1
    %s21 = scalar_select %p18, %s19, %s20
    %p24 = pneg %p18
    %p25 = scmp.eq.s32.totalorder %s9, 1
    %p26 = por %p24, %p25
    %p27 = scmp.ne.s32.totalorder %s19, %s22
    %p28 = scmp.eq.s32.totalorder %s9, 0
    %p29 = por %p27, %p28
    %p30 = scmp.ne.s32.totalorder %s19, %s22
    %p31 = scmp.eq.s32.totalorder %s14, 1
    %p32 = por %p30, %p31
    %p33 = scmp.ne.s32.totalorder %s22, %s23
    %p34 = scmp.eq.s32.totalorder %s14, 0
    %p35 = por %p33, %p34
    %p36 = scmp.ne.s32.totalorder %s22, %s23
    %p37 = scmp.eq.s32.totalorder %s15, 1
    %p38 = por %p36, %p37
    %p40 = scmp.ne.s32.totalorder %s23, %s39
    %p41 = scmp.eq.s32.totalorder %s15, 0
    %p42 = por %p40, %p41
    %s44 = sadd.s32 %s43, 1
    %p47 = scmp.eq.s32.totalorder %s9, 1
    %p48 = scmp.ne.s32.totalorder %s43, %s45
    %p49 = scmp.eq.s32.totalorder %s9, 0
    %p50 = por %p48, %p49
    %p51 = scmp.ne.s32.totalorder %s43, %s45
    %p52 = scmp.eq.s32.totalorder %s14, 1
    %p53 = por %p51, %p52
    %p54 = scmp.ne.s32.totalorder %s45, %s46
    %p55 = scmp.eq.s32.totalorder %s14, 0
    %p56 = por %p54, %p55
    %p57 = scmp.ne.s32.totalorder %s45, %s46
    %p58 = scmp.eq.s32.totalorder %s15, 1
    %p59 = por %p57, %p58
    %p61 = scmp.ne.s32.totalorder %s46, %s60
    %p62 = scmp.eq.s32.totalorder %s15, 0
    %p63 = por %p61, %p62
    %s65 = sadd.s32 %s64, 1
    %p68 = scmp.eq.s32.totalorder %s9, 1
    %p69 = scmp.ne.s32.totalorder %s64, %s66
    %p70 = scmp.eq.s32.totalorder %s9, 0
    %p71 = por %p69, %p70
    %p72 = scmp.ne.s32.totalorder %s64, %s66
    %p73 = scmp.eq.s32.totalorder %s14, 1
    %p74 = por %p72, %p73
    %p75 = scmp.ne.s32.totalorder %s66, %s67
    %p76 = scmp.eq.s32.totalorder %s14, 0
    %p77 = por %p75, %p76
    %p78 = scmp.ne.s32.totalorder %s66, %s67
    %p79 = scmp.eq.s32.totalorder %s15, 1
    %p80 = por %p78, %p79
    %p82 = scmp.ne.s32.totalorder %s67, %s81
    %p83 = scmp.eq.s32.totalorder %s15, 0
    %p84 = por %p82, %p83
    %s85 = ssub.s32 %s9, %s16
    %p86 = scmp.eq.s32.totalorder %s85, 0
    %s88 = sadd.s32 %s87, 1
    %s89 = scalar_select %p86, %s87, %s88
    %p92 = pneg %p86
    %p93 = scmp.eq.s32.totalorder %s9, 1
    %p94 = por %p92, %p93
    %p95 = scmp.ne.s32.totalorder %s87, %s90
    %p96 = scmp.eq.s32.totalorder %s9, 0
    %p97 = por %p95, %p96
    %p98 = scmp.ne.s32.totalorder %s87, %s90
    %p99 = scmp.eq.s32.totalorder %s14, 1
    %p100 = por %p98, %p99
    %p101 = scmp.ne.s32.totalorder %s90, %s91
    %p102 = scmp.eq.s32.totalorder %s14, 0
    %p103 = por %p101, %p102
    %p104 = scmp.ne.s32.totalorder %s90, %s91
    %p105 = scmp.eq.s32.totalorder %s15, 1
    %p106 = por %p104, %p105
    %p108 = scmp.ne.s32.totalorder %s91, %s107
    %p109 = scmp.eq.s32.totalorder %s15, 0
    %p110 = por %p108, %p109
    %p111 = scmp.le.s32.totalorder 1, %s9
    %p112 = scmp.lt.s32.totalorder %s9, 3
    %p113 = pnand %p111, %p112
    %p114 = pneg %p113
    // Predicated region
    $region9: #{_lambda_.3} parent=5 // pred_check
      _
    $region10: #{_lambda_.3} parent=5 // pred_check_branch
      %116 = sbr.rel (%p113) target = $region12
    $region11: #{_lambda_.3} parent=5 // pred_region
      %s117 = ssub.s32 %s9, 1
      // Predicated region
      $region13: #{_lambda_.3} parent=11 // pred_check
        %p118 = pneg %p56
      $region14: #{_lambda_.3} parent=11 // pred_check_branch
        %120 = sbr.rel (%p118) target = $region16
      $region15: #{_lambda_.3} parent=11 // pred_region
        _
      $region16: #{_lambda_.3} parent=11 // pred_fallthru
        _
      // Predicated region
      $region17: #{_lambda_.3} parent=11 // pred_check
        %p121 = pneg %p77
      $region18: #{_lambda_.3} parent=11 // pred_check_branch
        %123 = sbr.rel (%p121) target = $region20
      $region19: #{_lambda_.3} parent=11 // pred_region
        _
      $region20: #{_lambda_.3} parent=11 // pred_fallthru
        _
    $region12: #{_lambda_.3} parent=5 // pred_fallthru
      _
    %p124 = scmp.lt.s32.totalorder %s9, 2
    // Predicated region
    $region21: #{_lambda_.3} parent=5 // pred_check
      %p125 = pneg %p124
    $region22: #{_lambda_.3} parent=5 // pred_check_branch
      %127 = sbr.rel (%p125) target = $region24
    $region23: #{_lambda_.3} parent=5 // pred_region
      // Predicated region
      $region25: #{_lambda_.3} parent=23 // pred_check
        %p128 = pneg %p29
      $region26: #{_lambda_.3} parent=23 // pred_check_branch
        %130 = sbr.rel (%p128) target = $region28
      $region27: #{_lambda_.3} parent=23 // pred_region
        %s131 = smul.u32 32, %s9
        %p132 = scmp.lt.s32.totalorder %s131, 63
        %s133 = scalar_select %p132, %s131, 63
        %s134 = smul.addr %s133, 4
        %s135 = scalar_lea.vmem %s0, %s134
        %s136 = smul.u32 32, %s9
      $region28: #{_lambda_.3} parent=23 // pred_fallthru
        _
    $region24: #{_lambda_.3} parent=5 // pred_fallthru
      _
    %p137 = scmp.le.s32.totalorder 1, %s9
    %p138 = scmp.lt.s32.totalorder %s9, 3
    %p139 = pnand %p137, %p138
    %p140 = pneg %p139
    // Predicated region
    $region29: #{_lambda_.3} parent=5 // pred_check
      _
    $region30: #{_lambda_.3} parent=5 // pred_check_branch
      %142 = sbr.rel (%p139) target = $region32
    $region31: #{_lambda_.3} parent=5 // pred_region
      %s143 = ssub.s32 %s9, 1
      %s144 = smul.u32 32, %s14
      %p145 = scmp.lt.s32.totalorder %s144, 63
      %s146 = scalar_select %p145, %s144, 63
      %s147 = smul.addr %s146, 4
      %s148 = scalar_lea.vmem %s0, %s147
      %p149 = pneg %p35
      %p150 = pneg %p32
      %p151 = pneg %p56
      %p152 = pneg %p53
      %p153 = pneg %p77
      %p154 = pneg %p74
      %p155 = pneg %p103
      %p156 = pneg %p100
      %s157 = smul.u32 32, %s14
      %p158 = scmp.lt.s32.totalorder %s157, 63
      %s159 = scalar_select %p158, %s157, 63
      %s160 = smul.addr %s159, 4
      %s161 = scalar_lea.vmem %s3, %s160
      %s162 = smul.u32 32, %s14
      %p163 = scmp.lt.s32.totalorder %s162, 63
      %s164 = scalar_select %p163, %s162, 63
      %s165 = smul.addr %s164, 4
      %s166 = scalar_lea.vmem %s0, %s165
      %s167 = smul.u32 32, %s14
      %s168 = smul.u32 32, %s14
      %p169 = scmp.lt.s32.totalorder %s168, 63
      %s170 = scalar_select %p169, %s168, 63
      %s171 = smul.addr %s170, 4
      %s172 = scalar_lea.vmem %s3, %s171
      %s173 = smul.u32 32, %s14
      %v175 = vld [vmem:[%s166] sm:$0xf]
      %v176 = vld [vmem:[%s166 + $0x4] sm:$0xf]
      %v177 = vld [vmem:[%s166 + $0x8] sm:$0xf]
      %v178 = vld [vmem:[%s166 + $0xc] sm:$0xf]
      %v179 = vld [vmem:[%s166 + $0x10] sm:$0xf]
      %v180 = vld [vmem:[%s166 + $0x14] sm:$0xf]
      %v181 = vld [vmem:[%s166 + $0x18] sm:$0xf]
      %v182 = vld [vmem:[%s166 + $0x1c] sm:$0xf]
      %v183 = vld [vmem:[%s166 + $0x20] sm:$0xf]
      %v184 = vld [vmem:[%s166 + $0x24] sm:$0xf]
      %v185 = vld [vmem:[%s166 + $0x28] sm:$0xf]
      %v186 = vld [vmem:[%s166 + $0x2c] sm:$0xf]
      %v187 = vld [vmem:[%s166 + $0x30] sm:$0xf]
      %v188 = vld [vmem:[%s166 + $0x34] sm:$0xf]
      %v189 = vld [vmem:[%s166 + $0x38] sm:$0xf]
      %v190 = vld [vmem:[%s166 + $0x3c] sm:$0xf]
      %v191 = vld [vmem:[%s166 + $0x40] sm:$0xf]
      %v192 = vld [vmem:[%s166 + $0x44] sm:$0xf]
      %v193 = vld [vmem:[%s166 + $0x48] sm:$0xf]
      %v194 = vld [vmem:[%s166 + $0x4c] sm:$0xf]
      %v195 = vld [vmem:[%s166 + $0x50] sm:$0xf]
      %v196 = vld [vmem:[%s166 + $0x54] sm:$0xf]
      %v197 = vld [vmem:[%s166 + $0x58] sm:$0xf]
      %v198 = vld [vmem:[%s166 + $0x5c] sm:$0xf]
      %v199 = vld [vmem:[%s166 + $0x60] sm:$0xf]
      %v200 = vld [vmem:[%s166 + $0x64] sm:$0xf]
      %v201 = vld [vmem:[%s166 + $0x68] sm:$0xf]
      %v202 = vld [vmem:[%s166 + $0x6c] sm:$0xf]
      %v203 = vld [vmem:[%s166 + $0x70] sm:$0xf]
      %v204 = vld [vmem:[%s166 + $0x74] sm:$0xf]
      %v205 = vld [vmem:[%s166 + $0x78] sm:$0xf]
      %v206 = vld [vmem:[%s166 + $0x7c] sm:$0xf]
      %v207 = vld [vmem:[%s1] sm:$0xf]
      %v208 = vld [vmem:[%s1 + $0x4] sm:$0xf]
      %v209 = vld [vmem:[%s1 + $0x8] sm:$0xf]
      %v210 = vld [vmem:[%s1 + $0xc] sm:$0xf]
      %v211 = vld [vmem:[%s2] sm:$0x1]
      %v213 = vperm.slane %v211, 0
      %v247 = vunpack.c.l.b16 %v175
      %v248 = vunpack.c.l.b16 %v176
      %v249 = vunpack.c.l.b16 %v177
      %v250 = vunpack.c.l.b16 %v178
      %v251 = vunpack.c.l.b16 %v179
      %v252 = vunpack.c.l.b16 %v180
      %v253 = vunpack.c.l.b16 %v181
      %v254 = vunpack.c.l.b16 %v182
      %v255 = vunpack.c.l.b16 %v183
      %v256 = vunpack.c.l.b16 %v184
      %v257 = vunpack.c.l.b16 %v185
      %v258 = vunpack.c.l.b16 %v186
      %v259 = vunpack.c.l.b16 %v187
      %v260 = vunpack.c.l.b16 %v188
      %v261 = vunpack.c.l.b16 %v189
      %v262 = vunpack.c.l.b16 %v190
      %v263 = vunpack.c.l.b16 %v191
      %v264 = vunpack.c.l.b16 %v192
      %v265 = vunpack.c.l.b16 %v193
      %v266 = vunpack.c.l.b16 %v194
      %v267 = vunpack.c.l.b16 %v195
      %v268 = vunpack.c.l.b16 %v196
      %v269 = vunpack.c.l.b16 %v197
      %v270 = vunpack.c.l.b16 %v198
      %v271 = vunpack.c.l.b16 %v199
      %v272 = vunpack.c.l.b16 %v200
      %v273 = vunpack.c.l.b16 %v201
      %v274 = vunpack.c.l.b16 %v202
      %v275 = vunpack.c.l.b16 %v203
      %v276 = vunpack.c.l.b16 %v204
      %v277 = vunpack.c.l.b16 %v205
      %v278 = vunpack.c.l.b16 %v206
      %v279 = vpack.c.b16 %v248, %v247
      %v280 = vpack.c.b16 %v250, %v249
      %v281 = vpack.c.b16 %v252, %v251
      %v282 = vpack.c.b16 %v254, %v253
      %v283 = vpack.c.b16 %v256, %v255
      %v284 = vpack.c.b16 %v258, %v257
      %v285 = vpack.c.b16 %v260, %v259
      %v286 = vpack.c.b16 %v262, %v261
      %v287 = vpack.c.b16 %v264, %v263
      %v288 = vpack.c.b16 %v266, %v265
      %v289 = vpack.c.b16 %v268, %v267
      %v290 = vpack.c.b16 %v270, %v269
      %v291 = vpack.c.b16 %v272, %v271
      %v292 = vpack.c.b16 %v274, %v273
      %v293 = vpack.c.b16 %v276, %v275
      %v294 = vpack.c.b16 %v278, %v277
      %v299 = vunpack.c.l.b16 %v207
      %v300 = vunpack.c.l.b16 %v208
      %v301 = vunpack.c.l.b16 %v209
      %v302 = vunpack.c.l.b16 %v210
      %v303 = vpack.c.b16 %v300, %v299
      %v304 = vpack.c.b16 %v302, %v301
      %vm307 = vcmask 261120
      %v309 = vsel %vm307, %v279, 0
      %v312 = vsel %vm307, %v280, 0
      %v315 = vsel %vm307, %v281, 0
      %v318 = vsel %vm307, %v282, 0
      %v321 = vsel %vm307, %v283, 0
      %v324 = vsel %vm307, %v284, 0
      %v327 = vsel %vm307, %v285, 0
      %v330 = vsel %vm307, %v286, 0
      %v333 = vsel %vm307, %v287, 0
      %v336 = vsel %vm307, %v288, 0
      %v339 = vsel %vm307, %v289, 0
      %v342 = vsel %vm307, %v290, 0
      %v345 = vsel %vm307, %v291, 0
      %v348 = vsel %vm307, %v292, 0
      %v351 = vsel %vm307, %v293, 0
      %v354 = vsel %vm307, %v294, 0
      %356 = vmatpush.bf16.msra.mxu0 0
      %357 = vmatpush.bf16.msra.mxu0 0
      %358 = vmatpush.bf16.msra.mxu0 0
      %359 = vmatpush.bf16.msra.mxu0 0
      %360 = vmatpush.bf16.msra.mxu0 0
      %361 = vmatpush.bf16.msra.mxu0 0
      %362 = vmatpush.bf16.msra.mxu0 %v304
      %363 = vmatpush.bf16.msra.mxu0 %v303
      %364 = vmatmul.bf16.gmra.mxu0 %v309
      %v365 = vpop.f32.mrf.mxu0
      %v366 = vadd.f32 %v213, %v365
      %v367 = vpop.f32.mrf.mxu0
      %v368 = vadd.f32 %v213, %v367
      %369 = vmatmul.bf16.gmra.mxu0 %v312
      %v370 = vpop.f32.mrf.mxu0
      %v371 = vadd.f32 %v213, %v370
      %v372 = vpop.f32.mrf.mxu0
      %v373 = vadd.f32 %v213, %v372
      %374 = vmatmul.bf16.gmra.mxu0 %v315
      %v375 = vpop.f32.mrf.mxu0
      %v376 = vadd.f32 %v213, %v375
      %v377 = vpop.f32.mrf.mxu0
      %v378 = vadd.f32 %v213, %v377
      %379 = vmatmul.bf16.gmra.mxu0 %v318
      %v380 = vpop.f32.mrf.mxu0
      %v381 = vadd.f32 %v213, %v380
      %v382 = vpop.f32.mrf.mxu0
      %v383 = vadd.f32 %v213, %v382
      %384 = vmatmul.bf16.gmra.mxu0 %v321
      %v385 = vpop.f32.mrf.mxu0
      %v386 = vadd.f32 %v213, %v385
      %v387 = vpop.f32.mrf.mxu0
      %v388 = vadd.f32 %v213, %v387
      %389 = vmatmul.bf16.gmra.mxu0 %v324
      %v390 = vpop.f32.mrf.mxu0
      %v391 = vadd.f32 %v213, %v390
      %v392 = vpop.f32.mrf.mxu0
      %v393 = vadd.f32 %v213, %v392
      %394 = vmatmul.bf16.gmra.mxu0 %v327
      %v395 = vpop.f32.mrf.mxu0
      %v396 = vadd.f32 %v213, %v395
      %v397 = vpop.f32.mrf.mxu0
      %v398 = vadd.f32 %v213, %v397
      %399 = vmatmul.bf16.gmra.mxu0 %v330
      %v400 = vpop.f32.mrf.mxu0
      %v401 = vadd.f32 %v213, %v400
      %v402 = vpop.f32.mrf.mxu0
      %v403 = vadd.f32 %v213, %v402
      %404 = vmatmul.bf16.gmra.mxu0 %v333
      %v405 = vpop.f32.mrf.mxu0
      %v406 = vadd.f32 %v213, %v405
      %v407 = vpop.f32.mrf.mxu0
      %v408 = vadd.f32 %v213, %v407
      %409 = vmatmul.bf16.gmra.mxu0 %v336
      %v410 = vpop.f32.mrf.mxu0
      %v411 = vadd.f32 %v213, %v410
      %v412 = vpop.f32.mrf.mxu0
      %v413 = vadd.f32 %v213, %v412
      %414 = vmatmul.bf16.gmra.mxu0 %v339
      %v415 = vpop.f32.mrf.mxu0
      %v416 = vadd.f32 %v213, %v415
      %v417 = vpop.f32.mrf.mxu0
      %v418 = vadd.f32 %v213, %v417
      %419 = vmatmul.bf16.gmra.mxu0 %v342
      %v420 = vpop.f32.mrf.mxu0
      %v421 = vadd.f32 %v213, %v420
      %v422 = vpop.f32.mrf.mxu0
      %v423 = vadd.f32 %v213, %v422
      %424 = vmatmul.bf16.gmra.mxu0 %v345
      %v425 = vpop.f32.mrf.mxu0
      %v426 = vadd.f32 %v213, %v425
      %v427 = vpop.f32.mrf.mxu0
      %v428 = vadd.f32 %v213, %v427
      %429 = vmatmul.bf16.gmra.mxu0 %v348
      %v430 = vpop.f32.mrf.mxu0
      %v431 = vadd.f32 %v213, %v430
      %v432 = vpop.f32.mrf.mxu0
      %v433 = vadd.f32 %v213, %v432
      %434 = vmatmul.bf16.gmra.mxu0 %v351
      %v435 = vpop.f32.mrf.mxu0
      %v436 = vadd.f32 %v213, %v435
      %v437 = vpop.f32.mrf.mxu0
      %v438 = vadd.f32 %v213, %v437
      %439 = vmatmul.bf16.gmra.mxu0 %v354
      %v440 = vpop.f32.mrf.mxu0
      %v441 = vadd.f32 %v213, %v440
      %v442 = vpop.f32.mrf.mxu0
      %v443 = vadd.f32 %v213, %v442
      %444 = vdwg.mxu0
      %v445 = vmax.f32 %v366, 0.0
      %v446 = vmax.f32 %v368, 0.0
      %v447 = vmax.f32 %v371, 0.0
      %v448 = vmax.f32 %v373, 0.0
      %v449 = vmax.f32 %v376, 0.0
      %v450 = vmax.f32 %v378, 0.0
      %v451 = vmax.f32 %v381, 0.0
      %v452 = vmax.f32 %v383, 0.0
      %v453 = vmax.f32 %v386, 0.0
      %v454 = vmax.f32 %v388, 0.0
      %v455 = vmax.f32 %v391, 0.0
      %v456 = vmax.f32 %v393, 0.0
      %v457 = vmax.f32 %v396, 0.0
      %v458 = vmax.f32 %v398, 0.0
      %v459 = vmax.f32 %v401, 0.0
      %v460 = vmax.f32 %v403, 0.0
      %v461 = vmax.f32 %v406, 0.0
      %v462 = vmax.f32 %v408, 0.0
      %v463 = vmax.f32 %v411, 0.0
      %v464 = vmax.f32 %v413, 0.0
      %v465 = vmax.f32 %v416, 0.0
      %v466 = vmax.f32 %v418, 0.0
      %v467 = vmax.f32 %v421, 0.0
      %v468 = vmax.f32 %v423, 0.0
      %v469 = vmax.f32 %v426, 0.0
      %v470 = vmax.f32 %v428, 0.0
      %v471 = vmax.f32 %v431, 0.0
      %v472 = vmax.f32 %v433, 0.0
      %v473 = vmax.f32 %v436, 0.0
      %v474 = vmax.f32 %v438, 0.0
      %v475 = vmax.f32 %v441, 0.0
      %v476 = vmax.f32 %v443, 0.0
      %v477 = vpack.c.bf16 %v445, %v445
      %v478 = vpack.c.bf16 %v446, %v446
      %v479 = vpack.c.bf16 %v447, %v447
      %v480 = vpack.c.bf16 %v448, %v448
      %v481 = vpack.c.bf16 %v449, %v449
      %v482 = vpack.c.bf16 %v450, %v450
      %v483 = vpack.c.bf16 %v451, %v451
      %v484 = vpack.c.bf16 %v452, %v452
      %v485 = vpack.c.bf16 %v453, %v453
      %v486 = vpack.c.bf16 %v454, %v454
      %v487 = vpack.c.bf16 %v455, %v455
      %v488 = vpack.c.bf16 %v456, %v456
      %v489 = vpack.c.bf16 %v457, %v457
      %v490 = vpack.c.bf16 %v458, %v458
      %v491 = vpack.c.bf16 %v459, %v459
      %v492 = vpack.c.bf16 %v460, %v460
      %v493 = vpack.c.bf16 %v461, %v461
      %v494 = vpack.c.bf16 %v462, %v462
      %v495 = vpack.c.bf16 %v463, %v463
      %v496 = vpack.c.bf16 %v464, %v464
      %v497 = vpack.c.bf16 %v465, %v465
      %v498 = vpack.c.bf16 %v466, %v466
      %v499 = vpack.c.bf16 %v467, %v467
      %v500 = vpack.c.bf16 %v468, %v468
      %v501 = vpack.c.bf16 %v469, %v469
      %v502 = vpack.c.bf16 %v470, %v470
      %v503 = vpack.c.bf16 %v471, %v471
      %v504 = vpack.c.bf16 %v472, %v472
      %v505 = vpack.c.bf16 %v473, %v473
      %v506 = vpack.c.bf16 %v474, %v474
      %v507 = vpack.c.bf16 %v475, %v475
      %v508 = vpack.c.bf16 %v476, %v476
      %509 = vst [vmem:[%s172] sm:$0xf] %v477
      %510 = vst [vmem:[%s172 + $0x4] sm:$0xf] %v478
      %511 = vst [vmem:[%s172 + $0x8] sm:$0xf] %v479
      %512 = vst [vmem:[%s172 + $0xc] sm:$0xf] %v480
      %513 = vst [vmem:[%s172 + $0x10] sm:$0xf] %v481
      %514 = vst [vmem:[%s172 + $0x14] sm:$0xf] %v482
      %515 = vst [vmem:[%s172 + $0x18] sm:$0xf] %v483
      %516 = vst [vmem:[%s172 + $0x1c] sm:$0xf] %v484
      %517 = vst [vmem:[%s172 + $0x20] sm:$0xf] %v485
      %518 = vst [vmem:[%s172 + $0x24] sm:$0xf] %v486
      %519 = vst [vmem:[%s172 + $0x28] sm:$0xf] %v487
      %520 = vst [vmem:[%s172 + $0x2c] sm:$0xf] %v488
      %521 = vst [vmem:[%s172 + $0x30] sm:$0xf] %v489
      %522 = vst [vmem:[%s172 + $0x34] sm:$0xf] %v490
      %523 = vst [vmem:[%s172 + $0x38] sm:$0xf] %v491
      %524 = vst [vmem:[%s172 + $0x3c] sm:$0xf] %v492
      %525 = vst [vmem:[%s172 + $0x40] sm:$0xf] %v493
      %526 = vst [vmem:[%s172 + $0x44] sm:$0xf] %v494
      %527 = vst [vmem:[%s172 + $0x48] sm:$0xf] %v495
      %528 = vst [vmem:[%s172 + $0x4c] sm:$0xf] %v496
      %529 = vst [vmem:[%s172 + $0x50] sm:$0xf] %v497
      %530 = vst [vmem:[%s172 + $0x54] sm:$0xf] %v498
      %531 = vst [vmem:[%s172 + $0x58] sm:$0xf] %v499
      %532 = vst [vmem:[%s172 + $0x5c] sm:$0xf] %v500
      %533 = vst [vmem:[%s172 + $0x60] sm:$0xf] %v501
      %534 = vst [vmem:[%s172 + $0x64] sm:$0xf] %v502
      %535 = vst [vmem:[%s172 + $0x68] sm:$0xf] %v503
      %536 = vst [vmem:[%s172 + $0x6c] sm:$0xf] %v504
      %537 = vst [vmem:[%s172 + $0x70] sm:$0xf] %v505
      %538 = vst [vmem:[%s172 + $0x74] sm:$0xf] %v506
      %539 = vst [vmem:[%s172 + $0x78] sm:$0xf] %v507
      %540 = vst [vmem:[%s172 + $0x7c] sm:$0xf] %v508
      %s541 = smul.u32 32, %s14
      %p542 = scmp.lt.s32.totalorder %s541, 63
      %s543 = scalar_select %p542, %s541, 63
      %s544 = smul.addr %s543, 4
      %s545 = scalar_lea.vmem %s3, %s544
      // Predicated region
      $region33: #{_lambda_.3} parent=31 // pred_check
        %p546 = pneg %p100
      $region34: #{_lambda_.3} parent=31 // pred_check_branch
        %548 = sbr.rel (%p546) target = $region36
      $region35: #{_lambda_.3} parent=31 // pred_region
        %s549 = smul.u32 32, %s14
      $region36: #{_lambda_.3} parent=31 // pred_fallthru
        _
    $region32: #{_lambda_.3} parent=5 // pred_fallthru
      _
    %p550 = scmp.le.s32.totalorder 2, %s9
    // Predicated region
    $region37: #{_lambda_.3} parent=5 // pred_check
      %p551 = pneg %p550
    $region38: #{_lambda_.3} parent=5 // pred_check_branch
      %553 = sbr.rel (%p551) target = $region40
    $region39: #{_lambda_.3} parent=5 // pred_region
      %s554 = ssub.s32 %s9, 2
      // Predicated region
      $region41: #{_lambda_.3} parent=39 // pred_check
        %p555 = pneg %p106
      $region42: #{_lambda_.3} parent=39 // pred_check_branch
        %557 = sbr.rel (%p555) target = $region44
      $region43: #{_lambda_.3} parent=39 // pred_region
        %s558 = smul.u32 32, %s15
        %p559 = scmp.lt.s32.totalorder %s558, 63
        %s560 = scalar_select %p559, %s558, 63
        %s561 = smul.addr %s560, 4
        %s562 = scalar_lea.vmem %s3, %s561
      $region44: #{_lambda_.3} parent=39 // pred_fallthru
        _
    $region40: #{_lambda_.3} parent=5 // pred_fallthru
      _
  $region6: #{_lambda_.3} parent=0 // loop_footer
    %s13 = sadd.s32 1, %s9
  $region7: #{_lambda_.3} parent=0 // loop_footer_branch
    %8 = sbr.rel target = $region3
  $region8: #{_lambda_.3} parent=0 // loop_exit
    _

// kernel: _lambda_.5
$region0: #{_lambda_.5}
  #allocation0 [shape = 'u32[]', space=smem, size = 0x4, offset = 0x4, fixed_abs, tag = 'smem constant byte address 0x4 - core index']
  #allocation1 [shape = 'u32[72,128]{1,0:T(1,128)}', space=vmem, size = 0x9000, scoped, tag = 'internal scratch']
  %s0 = inlined_call_operand.vmem [shape: bf16[128,128], index: 0, kind: input, shape index: {}]
  %s1 = inlined_call_operand.vmem [shape: bf16[128,256], index: 1, kind: input, shape index: {}]
  %s2 = inlined_call_operand.vmem [shape: bf16[128,32], index: 2, kind: input, shape index: {}]
  %s3 = inlined_call_operand.vmem [shape: bf16[32,256], index: 3, kind: input, shape index: {}]
  %s4 = inlined_call_operand.vmem [shape: f32[1,256], index: 4, kind: input, shape index: {}]
  %s5 = inlined_call_operand.vmem [shape: bf16[128,256], index: 5, kind: output, shape index: {}]
  %s6 = sld [smem:[#allocation0]]
  $region30: #{_lambda_.5} parent=0
    _
  %s8 = ssub.s32 1, %s6
  %s9 = scalar_select 0, %s8, %s6
  // Predicated region
  $region2: #{_lambda_.5} parent=0 // pred_check
    _
  $region3: #{_lambda_.5} parent=0 // pred_check_branch
    %11 = sbr.rel (0) target = $region5
  $region4: #{_lambda_.5} parent=0 // pred_region
    _
  $region5: #{_lambda_.5} parent=0 // pred_fallthru
    _
  // Predicated region
  $region6: #{_lambda_.5} parent=0 // pred_check
    _
  $region7: #{_lambda_.5} parent=0 // pred_check_branch
    %13 = sbr.rel (0) target = $region9
  $region8: #{_lambda_.5} parent=0 // pred_region
    _
  $region9: #{_lambda_.5} parent=0 // pred_fallthru
    _
  // Predicated region
  $region10: #{_lambda_.5} parent=0 // pred_check
    _
  $region11: #{_lambda_.5} parent=0 // pred_check_branch
    %15 = sbr.rel (0) target = $region13
  $region12: #{_lambda_.5} parent=0 // pred_region
    _
  $region13: #{_lambda_.5} parent=0 // pred_fallthru
    _
  // Predicated region
  $region14: #{_lambda_.5} parent=0 // pred_check
    _
  $region15: #{_lambda_.5} parent=0 // pred_check_branch
    %17 = sbr.rel (0) target = $region17
  $region16: #{_lambda_.5} parent=0 // pred_region
    _
  $region17: #{_lambda_.5} parent=0 // pred_fallthru
    _
  // Predicated region
  $region18: #{_lambda_.5} parent=0 // pred_check
    _
  $region19: #{_lambda_.5} parent=0 // pred_check_branch
    %19 = sbr.rel (0) target = $region21
  $region20: #{_lambda_.5} parent=0 // pred_region
    _
  $region21: #{_lambda_.5} parent=0 // pred_fallthru
    _
  %v21 = vld [vmem:[%s0] sm:$0xf]
  %v22 = vld [vmem:[%s0 + $0x4] sm:$0xf]
  %v23 = vld [vmem:[%s0 + $0x8] sm:$0xf]
  %v24 = vld [vmem:[%s0 + $0xc] sm:$0xf]
  %v25 = vld [vmem:[%s0 + $0x10] sm:$0xf]
  %v26 = vld [vmem:[%s0 + $0x14] sm:$0xf]
  %v27 = vld [vmem:[%s0 + $0x18] sm:$0xf]
  %v28 = vld [vmem:[%s0 + $0x1c] sm:$0xf]
  %v29 = vld [vmem:[%s0 + $0x20] sm:$0xf]
  %v30 = vld [vmem:[%s0 + $0x24] sm:$0xf]
  %v31 = vld [vmem:[%s0 + $0x28] sm:$0xf]
  %v32 = vld [vmem:[%s0 + $0x2c] sm:$0xf]
  %v33 = vld [vmem:[%s0 + $0x30] sm:$0xf]
  %v34 = vld [vmem:[%s0 + $0x34] sm:$0xf]
  %v35 = vld [vmem:[%s0 + $0x38] sm:$0xf]
  %v36 = vld [vmem:[%s0 + $0x3c] sm:$0xf]
  %v37 = vld [vmem:[%s1] sm:$0xff]
  %v38 = vld [vmem:[%s1 + $0x8] sm:$0xff]
  %v39 = vld [vmem:[%s1 + $0x10] sm:$0xff]
  %v40 = vld [vmem:[%s1 + $0x18] sm:$0xff]
  %v41 = vld [vmem:[%s1 + $0x20] sm:$0xff]
  %v42 = vld [vmem:[%s1 + $0x28] sm:$0xff]
  %v43 = vld [vmem:[%s1 + $0x30] sm:$0xff]
  %v44 = vld [vmem:[%s1 + $0x38] sm:$0xff]
  %v45 = vld [vmem:[%s1 + $0x40] sm:$0xff]
  %v46 = vld [vmem:[%s1 + $0x48] sm:$0xff]
  %v47 = vld [vmem:[%s1 + $0x50] sm:$0xff]
  %v48 = vld [vmem:[%s1 + $0x58] sm:$0xff]
  %v49 = vld [vmem:[%s1 + $0x60] sm:$0xff]
  %v50 = vld [vmem:[%s1 + $0x68] sm:$0xff]
  %v51 = vld [vmem:[%s1 + $0x70] sm:$0xff]
  %v52 = vld [vmem:[%s1 + $0x78] sm:$0xff]
  %v53 = vld [vmem:[%s2] sm:$0xf]
  %v54 = vld [vmem:[%s2 + $0x4] sm:$0xf]
  %v55 = vld [vmem:[%s2 + $0x8] sm:$0xf]
  %v56 = vld [vmem:[%s2 + $0xc] sm:$0xf]
  %v57 = vld [vmem:[%s2 + $0x10] sm:$0xf]
  %v58 = vld [vmem:[%s2 + $0x14] sm:$0xf]
  %v59 = vld [vmem:[%s2 + $0x18] sm:$0xf]
  %v60 = vld [vmem:[%s2 + $0x1c] sm:$0xf]
  %v61 = vld [vmem:[%s2 + $0x20] sm:$0xf]
  %v62 = vld [vmem:[%s2 + $0x24] sm:$0xf]
  %v63 = vld [vmem:[%s2 + $0x28] sm:$0xf]
  %v64 = vld [vmem:[%s2 + $0x2c] sm:$0xf]
  %v65 = vld [vmem:[%s2 + $0x30] sm:$0xf]
  %v66 = vld [vmem:[%s2 + $0x34] sm:$0xf]
  %v67 = vld [vmem:[%s2 + $0x38] sm:$0xf]
  %v68 = vld [vmem:[%s2 + $0x3c] sm:$0xf]
  %v69 = vld [vmem:[%s3] sm:$0xff]
  %v70 = vld [vmem:[%s3 + $0x8] sm:$0xff]
  %v71 = vld [vmem:[%s3 + $0x10] sm:$0xff]
  %v72 = vld [vmem:[%s3 + $0x18] sm:$0xff]
  %v89 = vunpack.c.l.b16 %v53
  %v90 = vunpack.c.l.b16 %v54
  %v91 = vunpack.c.l.b16 %v55
  %v92 = vunpack.c.l.b16 %v56
  %v93 = vunpack.c.l.b16 %v57
  %v94 = vunpack.c.l.b16 %v58
  %v95 = vunpack.c.l.b16 %v59
  %v96 = vunpack.c.l.b16 %v60
  %v97 = vunpack.c.l.b16 %v61
  %v98 = vunpack.c.l.b16 %v62
  %v99 = vunpack.c.l.b16 %v63
  %v100 = vunpack.c.l.b16 %v64
  %v101 = vunpack.c.l.b16 %v65
  %v102 = vunpack.c.l.b16 %v66
  %v103 = vunpack.c.l.b16 %v67
  %v104 = vunpack.c.l.b16 %v68
  %v105 = vpack.c.b16 %v90, %v89
  %v106 = vpack.c.b16 %v92, %v91
  %v107 = vpack.c.b16 %v94, %v93
  %v108 = vpack.c.b16 %v96, %v95
  %v109 = vpack.c.b16 %v98, %v97
  %v110 = vpack.c.b16 %v100, %v99
  %v111 = vpack.c.b16 %v102, %v101
  %v112 = vpack.c.b16 %v104, %v103
  %v117 = vunpack.c.l.b16 %v69
  %v118 = vunpack.c.h.b16 %v69
  %v119 = vunpack.c.l.b16 %v70
  %v120 = vunpack.c.h.b16 %v70
  %v121 = vunpack.c.l.b16 %v71
  %v122 = vunpack.c.h.b16 %v71
  %v123 = vunpack.c.l.b16 %v72
  %v124 = vunpack.c.h.b16 %v72
  %v125 = vpack.c.b16 %v119, %v117
  %v126 = vpack.c.b16 %v120, %v118
  %v127 = vpack.c.b16 %v123, %v121
  %v128 = vpack.c.b16 %v124, %v122
  %vm133 = vcmask 261120
  %v135 = vsel %vm133, %v105, 0
  %v138 = vsel %vm133, %v106, 0
  %v141 = vsel %vm133, %v107, 0
  %v144 = vsel %vm133, %v108, 0
  %v147 = vsel %vm133, %v109, 0
  %v150 = vsel %vm133, %v110, 0
  %v153 = vsel %vm133, %v111, 0
  %v156 = vsel %vm133, %v112, 0
  %158 = vmatpush.bf16.msra.mxu0 0
  %159 = vmatpush.bf16.msra.mxu0 0
  %160 = vmatpush.bf16.msra.mxu0 0
  %161 = vmatpush.bf16.msra.mxu0 0
  %162 = vmatpush.bf16.msra.mxu0 0
  %163 = vmatpush.bf16.msra.mxu0 0
  %164 = vmatpush.bf16.msra.mxu0 %v127
  %165 = vmatpush.bf16.msra.mxu0 %v125
  %166 = vmatmul.bf16.gmra.mxu0 %v135
  %v167 = vpop.f32.mrf.mxu0
  %v168 = vadd.f32 0.0, %v167
  %v169 = vpop.f32.mrf.mxu0
  %v170 = vadd.f32 0.0, %v169
  %171 = vmatmul.bf16.gmra.mxu0 %v138
  %v172 = vpop.f32.mrf.mxu0
  %v173 = vadd.f32 0.0, %v172
  %v174 = vpop.f32.mrf.mxu0
  %v175 = vadd.f32 0.0, %v174
  %176 = vmatmul.bf16.gmra.mxu0 %v141
  %v177 = vpop.f32.mrf.mxu0
  %v178 = vadd.f32 0.0, %v177
  %v179 = vpop.f32.mrf.mxu0
  %v180 = vadd.f32 0.0, %v179
  %181 = vmatmul.bf16.gmra.mxu0 %v144
  %v182 = vpop.f32.mrf.mxu0
  %v183 = vadd.f32 0.0, %v182
  %v184 = vpop.f32.mrf.mxu0
  %v185 = vadd.f32 0.0, %v184
  %186 = vmatmul.bf16.gmra.mxu0 %v147
  %v187 = vpop.f32.mrf.mxu0
  %v188 = vadd.f32 0.0, %v187
  %v189 = vpop.f32.mrf.mxu0
  %v190 = vadd.f32 0.0, %v189
  %191 = vmatmul.bf16.gmra.mxu0 %v150
  %v192 = vpop.f32.mrf.mxu0
  %v193 = vadd.f32 0.0, %v192
  %v194 = vpop.f32.mrf.mxu0
  %v195 = vadd.f32 0.0, %v194
  %196 = vmatmul.bf16.gmra.mxu0 %v153
  %v197 = vpop.f32.mrf.mxu0
  %v198 = vadd.f32 0.0, %v197
  %v199 = vpop.f32.mrf.mxu0
  %v200 = vadd.f32 0.0, %v199
  %201 = vmatmul.bf16.gmra.mxu0 %v156
  %v202 = vpop.f32.mrf.mxu0
  %v203 = vadd.f32 0.0, %v202
  %v204 = vpop.f32.mrf.mxu0
  %v205 = vadd.f32 0.0, %v204
  %206 = vdwg.mxu0
  %207 = vmatpush.bf16.msra.mxu0 0
  %208 = vmatpush.bf16.msra.mxu0 0
  %209 = vmatpush.bf16.msra.mxu0 0
  %210 = vmatpush.bf16.msra.mxu0 0
  %211 = vmatpush.bf16.msra.mxu0 0
  %212 = vmatpush.bf16.msra.mxu0 0
  %213 = vmatpush.bf16.msra.mxu0 %v128
  %214 = vmatpush.bf16.msra.mxu0 %v126
  %215 = vmatmul.bf16.gmra.mxu0 %v135
  %v216 = vpop.f32.mrf.mxu0
  %v217 = vadd.f32 0.0, %v216
  %v218 = vpop.f32.mrf.mxu0
  %v219 = vadd.f32 0.0, %v218
  %220 = vmatmul.bf16.gmra.mxu0 %v138
  %v221 = vpop.f32.mrf.mxu0
  %v222 = vadd.f32 0.0, %v221
  %v223 = vpop.f32.mrf.mxu0
  %v224 = vadd.f32 0.0, %v223
  %225 = vmatmul.bf16.gmra.mxu0 %v141
  %v226 = vpop.f32.mrf.mxu0
  %v227 = vadd.f32 0.0, %v226
  %v228 = vpop.f32.mrf.mxu0
  %v229 = vadd.f32 0.0, %v228
  %230 = vmatmul.bf16.gmra.mxu0 %v144
  %v231 = vpop.f32.mrf.mxu0
  %v232 = vadd.f32 0.0, %v231
  %v233 = vpop.f32.mrf.mxu0
  %v234 = vadd.f32 0.0, %v233
  %235 = vmatmul.bf16.gmra.mxu0 %v147
  %v236 = vpop.f32.mrf.mxu0
  %v237 = vadd.f32 0.0, %v236
  %v238 = vpop.f32.mrf.mxu0
  %v239 = vadd.f32 0.0, %v238
  %240 = vmatmul.bf16.gmra.mxu0 %v150
  %v241 = vpop.f32.mrf.mxu0
  %v242 = vadd.f32 0.0, %v241
  %v243 = vpop.f32.mrf.mxu0
  %v244 = vadd.f32 0.0, %v243
  %245 = vmatmul.bf16.gmra.mxu0 %v153
  %v246 = vpop.f32.mrf.mxu0
  %v247 = vadd.f32 0.0, %v246
  %v248 = vpop.f32.mrf.mxu0
  %v249 = vadd.f32 0.0, %v248
  %250 = vmatmul.bf16.gmra.mxu0 %v156
  %v251 = vpop.f32.mrf.mxu0
  %v252 = vadd.f32 0.0, %v251
  %v253 = vpop.f32.mrf.mxu0
  %v254 = vadd.f32 0.0, %v253
  %255 = vdwg.mxu0
  %v272 = vunpack.c.l.b16 %v21
  %v273 = vunpack.c.l.b16 %v22
  %v274 = vunpack.c.l.b16 %v23
  %v275 = vunpack.c.l.b16 %v24
  %v276 = vunpack.c.l.b16 %v25
  %v277 = vunpack.c.l.b16 %v26
  %v278 = vunpack.c.l.b16 %v27
  %v279 = vunpack.c.l.b16 %v28
  %v280 = vunpack.c.l.b16 %v29
  %v281 = vunpack.c.l.b16 %v30
  %v282 = vunpack.c.l.b16 %v31
  %v283 = vunpack.c.l.b16 %v32
  %v284 = vunpack.c.l.b16 %v33
  %v285 = vunpack.c.l.b16 %v34
  %v286 = vunpack.c.l.b16 %v35
  %v287 = vunpack.c.l.b16 %v36
  %v288 = vpack.c.b16 %v273, %v272
  %v289 = vpack.c.b16 %v275, %v274
  %v290 = vpack.c.b16 %v277, %v276
  %v291 = vpack.c.b16 %v279, %v278
  %v292 = vpack.c.b16 %v281, %v280
  %v293 = vpack.c.b16 %v283, %v282
  %v294 = vpack.c.b16 %v285, %v284
  %v295 = vpack.c.b16 %v287, %v286
  %v320 = vunpack.c.l.b16 %v37
  %v321 = vunpack.c.h.b16 %v37
  %v322 = vunpack.c.l.b16 %v38
  %v323 = vunpack.c.h.b16 %v38
  %v324 = vunpack.c.l.b16 %v39
  %v325 = vunpack.c.h.b16 %v39
  %v326 = vunpack.c.l.b16 %v40
  %v327 = vunpack.c.h.b16 %v40
  %v328 = vunpack.c.l.b16 %v41
  %v329 = vunpack.c.h.b16 %v41
  %v330 = vunpack.c.l.b16 %v42
  %v331 = vunpack.c.h.b16 %v42
  %v332 = vunpack.c.l.b16 %v43
  %v333 = vunpack.c.h.b16 %v43
  %v334 = vunpack.c.l.b16 %v44
  %v335 = vunpack.c.h.b16 %v44
  %v336 = vunpack.c.l.b16 %v45
  %v337 = vunpack.c.h.b16 %v45
  %v338 = vunpack.c.l.b16 %v46
  %v339 = vunpack.c.h.b16 %v46
  %v340 = vunpack.c.l.b16 %v47
  %v341 = vunpack.c.h.b16 %v47
  %v342 = vunpack.c.l.b16 %v48
  %v343 = vunpack.c.h.b16 %v48
  %v344 = vunpack.c.l.b16 %v49
  %v345 = vunpack.c.h.b16 %v49
  %v346 = vunpack.c.l.b16 %v50
  %v347 = vunpack.c.h.b16 %v50
  %v348 = vunpack.c.l.b16 %v51
  %v349 = vunpack.c.h.b16 %v51
  %v350 = vunpack.c.l.b16 %v52
  %v351 = vunpack.c.h.b16 %v52
  %v352 = vpack.c.b16 %v322, %v320
  %v353 = vpack.c.b16 %v323, %v321
  %v354 = vpack.c.b16 %v326, %v324
  %v355 = vpack.c.b16 %v327, %v325
  %v356 = vpack.c.b16 %v330, %v328
  %v357 = vpack.c.b16 %v331, %v329
  %v358 = vpack.c.b16 %v334, %v332
  %v359 = vpack.c.b16 %v335, %v333
  %v360 = vpack.c.b16 %v338, %v336
  %v361 = vpack.c.b16 %v339, %v337
  %v362 = vpack.c.b16 %v342, %v340
  %v363 = vpack.c.b16 %v343, %v341
  %v364 = vpack.c.b16 %v346, %v344
  %v365 = vpack.c.b16 %v347, %v345
  %v366 = vpack.c.b16 %v350, %v348
  %v367 = vpack.c.b16 %v351, %v349
  %384 = vmatpush.bf16.msra.mxu0 %v366
  %385 = vmatpush.bf16.msra.mxu0 %v364
  %386 = vmatpush.bf16.msra.mxu0 %v362
  %387 = vmatpush.bf16.msra.mxu0 %v360
  %388 = vmatpush.bf16.msra.mxu0 %v358
  %389 = vmatpush.bf16.msra.mxu0 %v356
  %390 = vmatpush.bf16.msra.mxu0 %v354
  %391 = vmatpush.bf16.msra.mxu0 %v352
  %392 = vmatmul.bf16.gmra.mxu0 %v288
  %v393 = vpop.f32.mrf.mxu0
  %v394 = vadd.f32 %v168, %v393
  %v395 = vpop.f32.mrf.mxu0
  %v396 = vadd.f32 %v170, %v395
  %397 = vmatmul.bf16.gmra.mxu0 %v289
  %v398 = vpop.f32.mrf.mxu0
  %v399 = vadd.f32 %v173, %v398
  %v400 = vpop.f32.mrf.mxu0
  %v401 = vadd.f32 %v175, %v400
  %402 = vmatmul.bf16.gmra.mxu0 %v290
  %v403 = vpop.f32.mrf.mxu0
  %v404 = vadd.f32 %v178, %v403
  %v405 = vpop.f32.mrf.mxu0
  %v406 = vadd.f32 %v180, %v405
  %407 = vmatmul.bf16.gmra.mxu0 %v291
  %v408 = vpop.f32.mrf.mxu0
  %v409 = vadd.f32 %v183, %v408
  %v410 = vpop.f32.mrf.mxu0
  %v411 = vadd.f32 %v185, %v410
  %412 = vmatmul.bf16.gmra.mxu0 %v292
  %v413 = vpop.f32.mrf.mxu0
  %v414 = vadd.f32 %v188, %v413
  %v415 = vpop.f32.mrf.mxu0
  %v416 = vadd.f32 %v190, %v415
  %417 = vmatmul.bf16.gmra.mxu0 %v293
  %v418 = vpop.f32.mrf.mxu0
  %v419 = vadd.f32 %v193, %v418
  %v420 = vpop.f32.mrf.mxu0
  %v421 = vadd.f32 %v195, %v420
  %422 = vmatmul.bf16.gmra.mxu0 %v294
  %v423 = vpop.f32.mrf.mxu0
  %v424 = vadd.f32 %v198, %v423
  %v425 = vpop.f32.mrf.mxu0
  %v426 = vadd.f32 %v200, %v425
  %427 = vmatmul.bf16.gmra.mxu0 %v295
  %v428 = vpop.f32.mrf.mxu0
  %v429 = vadd.f32 %v203, %v428
  %v430 = vpop.f32.mrf.mxu0
  %v431 = vadd.f32 %v205, %v430
  %432 = vdwg.mxu0
  %433 = vmatpush.bf16.msra.mxu0 %v367
  %434 = vmatpush.bf16.msra.mxu0 %v365
  %435 = vmatpush.bf16.msra.mxu0 %v363
  %436 = vmatpush.bf16.msra.mxu0 %v361
  %437 = vmatpush.bf16.msra.mxu0 %v359
  %438 = vmatpush.bf16.msra.mxu0 %v357
  %439 = vmatpush.bf16.msra.mxu0 %v355
  %440 = vmatpush.bf16.msra.mxu0 %v353
  %441 = vmatmul.bf16.gmra.mxu0 %v288
  %v442 = vpop.f32.mrf.mxu0
  %v443 = vadd.f32 %v217, %v442
  %v444 = vpop.f32.mrf.mxu0
  %v445 = vadd.f32 %v219, %v444
  %446 = vmatmul.bf16.gmra.mxu0 %v289
  %v447 = vpop.f32.mrf.mxu0
  %v448 = vadd.f32 %v222, %v447
  %v449 = vpop.f32.mrf.mxu0
  %v450 = vadd.f32 %v224, %v449
  %451 = vmatmul.bf16.gmra.mxu0 %v290
  %v452 = vpop.f32.mrf.mxu0
  %v453 = vadd.f32 %v227, %v452
  %v454 = vpop.f32.mrf.mxu0
  %v455 = vadd.f32 %v229, %v454
  %456 = vmatmul.bf16.gmra.mxu0 %v291
  %v457 = vpop.f32.mrf.mxu0
  %v458 = vadd.f32 %v232, %v457
  %v459 = vpop.f32.mrf.mxu0
  %v460 = vadd.f32 %v234, %v459
  %461 = vmatmul.bf16.gmra.mxu0 %v292
  %v462 = vpop.f32.mrf.mxu0
  %v463 = vadd.f32 %v237, %v462
  %v464 = vpop.f32.mrf.mxu0
  %v465 = vadd.f32 %v239, %v464
  %466 = vmatmul.bf16.gmra.mxu0 %v293
  %v467 = vpop.f32.mrf.mxu0
  %v468 = vadd.f32 %v242, %v467
  %v469 = vpop.f32.mrf.mxu0
  %v470 = vadd.f32 %v244, %v469
  %471 = vmatmul.bf16.gmra.mxu0 %v294
  %v472 = vpop.f32.mrf.mxu0
  %v473 = vadd.f32 %v247, %v472
  %v474 = vpop.f32.mrf.mxu0
  %v475 = vadd.f32 %v249, %v474
  %476 = vmatmul.bf16.gmra.mxu0 %v295
  %v477 = vpop.f32.mrf.mxu0
  %v478 = vadd.f32 %v252, %v477
  %v479 = vpop.f32.mrf.mxu0
  %v480 = vadd.f32 %v254, %v479
  %481 = vdwg.mxu0
  %v482 = vld [vmem:[%s4] sm:$0x3]
  %v484 = vperm.slane %v482, 0
  %v485 = vperm.slane %v482, 1
  %v488 = vadd.f32 %v394, %v484
  %v489 = vadd.f32 %v443, %v485
  %v490 = vadd.f32 %v396, %v484
  %v491 = vadd.f32 %v445, %v485
  %v492 = vadd.f32 %v399, %v484
  %v493 = vadd.f32 %v448, %v485
  %v494 = vadd.f32 %v401, %v484
  %v495 = vadd.f32 %v450, %v485
  %v496 = vadd.f32 %v404, %v484
  %v497 = vadd.f32 %v453, %v485
  %v498 = vadd.f32 %v406, %v484
  %v499 = vadd.f32 %v455, %v485
  %v500 = vadd.f32 %v409, %v484
  %v501 = vadd.f32 %v458, %v485
  %v502 = vadd.f32 %v411, %v484
  %v503 = vadd.f32 %v460, %v485
  %v504 = vadd.f32 %v414, %v484
  %v505 = vadd.f32 %v463, %v485
  %v506 = vadd.f32 %v416, %v484
  %v507 = vadd.f32 %v465, %v485
  %v508 = vadd.f32 %v419, %v484
  %v509 = vadd.f32 %v468, %v485
  %v510 = vadd.f32 %v421, %v484
  %v511 = vadd.f32 %v470, %v485
  %v512 = vadd.f32 %v424, %v484
  %v513 = vadd.f32 %v473, %v485
  %v514 = vadd.f32 %v426, %v484
  %v515 = vadd.f32 %v475, %v485
  %v516 = vadd.f32 %v429, %v484
  %v517 = vadd.f32 %v478, %v485
  %v518 = vadd.f32 %v431, %v484
  %v519 = vadd.f32 %v480, %v485
  %v520 = vmax.f32 %v488, 0.0
  %v521 = vmax.f32 %v489, 0.0
  %v522 = vmax.f32 %v490, 0.0
  %v523 = vmax.f32 %v491, 0.0
  %v524 = vmax.f32 %v492, 0.0
  %v525 = vmax.f32 %v493, 0.0
  %v526 = vmax.f32 %v494, 0.0
  %v527 = vmax.f32 %v495, 0.0
  %v528 = vmax.f32 %v496, 0.0
  %v529 = vmax.f32 %v497, 0.0
  %v530 = vmax.f32 %v498, 0.0
  %v531 = vmax.f32 %v499, 0.0
  %v532 = vmax.f32 %v500, 0.0
  %v533 = vmax.f32 %v501, 0.0
  %v534 = vmax.f32 %v502, 0.0
  %v535 = vmax.f32 %v503, 0.0
  %v536 = vmax.f32 %v504, 0.0
  %v537 = vmax.f32 %v505, 0.0
  %v538 = vmax.f32 %v506, 0.0
  %v539 = vmax.f32 %v507, 0.0
  %v540 = vmax.f32 %v508, 0.0
  %v541 = vmax.f32 %v509, 0.0
  %v542 = vmax.f32 %v510, 0.0
  %v543 = vmax.f32 %v511, 0.0
  %v544 = vmax.f32 %v512, 0.0
  %v545 = vmax.f32 %v513, 0.0
  %v546 = vmax.f32 %v514, 0.0
  %v547 = vmax.f32 %v515, 0.0
  %v548 = vmax.f32 %v516, 0.0
  %v549 = vmax.f32 %v517, 0.0
  %v550 = vmax.f32 %v518, 0.0
  %v551 = vmax.f32 %v519, 0.0
  %v552 = vpack.c.bf16 %v521, %v520
  %v553 = vpack.c.bf16 %v523, %v522
  %v554 = vpack.c.bf16 %v525, %v524
  %v555 = vpack.c.bf16 %v527, %v526
  %v556 = vpack.c.bf16 %v529, %v528
  %v557 = vpack.c.bf16 %v531, %v530
  %v558 = vpack.c.bf16 %v533, %v532
  %v559 = vpack.c.bf16 %v535, %v534
  %v560 = vpack.c.bf16 %v537, %v536
  %v561 = vpack.c.bf16 %v539, %v538
  %v562 = vpack.c.bf16 %v541, %v540
  %v563 = vpack.c.bf16 %v543, %v542
  %v564 = vpack.c.bf16 %v545, %v544
  %v565 = vpack.c.bf16 %v547, %v546
  %v566 = vpack.c.bf16 %v549, %v548
  %v567 = vpack.c.bf16 %v551, %v550
  %568 = vst [vmem:[%s5] sm:$0xff] %v552
  %569 = vst [vmem:[%s5 + $0x8] sm:$0xff] %v553
  %570 = vst [vmem:[%s5 + $0x10] sm:$0xff] %v554
  %571 = vst [vmem:[%s5 + $0x18] sm:$0xff] %v555
  %572 = vst [vmem:[%s5 + $0x20] sm:$0xff] %v556
  %573 = vst [vmem:[%s5 + $0x28] sm:$0xff] %v557
  %574 = vst [vmem:[%s5 + $0x30] sm:$0xff] %v558
  %575 = vst [vmem:[%s5 + $0x38] sm:$0xff] %v559
  %576 = vst [vmem:[%s5 + $0x40] sm:$0xff] %v560
  %577 = vst [vmem:[%s5 + $0x48] sm:$0xff] %v561
  %578 = vst [vmem:[%s5 + $0x50] sm:$0xff] %v562
  %579 = vst [vmem:[%s5 + $0x58] sm:$0xff] %v563
  %580 = vst [vmem:[%s5 + $0x60] sm:$0xff] %v564
  %581 = vst [vmem:[%s5 + $0x68] sm:$0xff] %v565
  %582 = vst [vmem:[%s5 + $0x70] sm:$0xff] %v566
  %583 = vst [vmem:[%s5 + $0x78] sm:$0xff] %v567
  // Predicated region
  $region22: #{_lambda_.5} parent=0 // pred_check
    _
  $region23: #{_lambda_.5} parent=0 // pred_check_branch
    %585 = sbr.rel (0) target = $region25
  $region24: #{_lambda_.5} parent=0 // pred_region
    _
  $region25: #{_lambda_.5} parent=0 // pred_fallthru
    _
  // Predicated region
  $region26: #{_lambda_.5} parent=0 // pred_check
    _
  $region27: #{_lambda_.5} parent=0 // pred_check_branch
    %587 = sbr.rel (0) target = $region29
  $region28: #{_lambda_.5} parent=0 // pred_region
    _
  $region29: #{_lambda_.5} parent=0 // pred_fallthru
    _

// kernel: _lambda_.4
$region0: #{_lambda_.4}
  #allocation0 [shape = 'u32[]', space=smem, size = 0x4, offset = 0x4, fixed_abs, tag = 'smem constant byte address 0x4 - core index']
  #allocation1 [shape = 'u32[72,128]{1,0:T(1,128)}', space=vmem, size = 0x9000, scoped, tag = 'internal scratch']
  #allocation2 [shape = 'f32[72,128]{1,0:T(8,128)}', space=vmem, size = 0x9000, scoped, tag = 'scratch operand']
  %s0 = inlined_call_operand.vmem [shape: bf16[2,90,512], index: 0, kind: input, shape index: {}]
  %s1 = inlined_call_operand.vmem [shape: bf16[9,128,128], index: 1, kind: input, shape index: {}]
  %s2 = inlined_call_operand.vmem [shape: f32[1,128], index: 2, kind: input, shape index: {}]
  %s3 = inlined_call_operand.vmem [shape: bf16[2,8,8,128], index: 3, kind: output, shape index: {}]
  %s4 = sld [smem:[#allocation0]]
  $region45: #{_lambda_.4} parent=0
    _
  %s6 = ssub.s32 1, %s4
  %s7 = scalar_select 0, %s6, %s4
  loop: start=0, step=1, limit=4
  $region2: #{_lambda_.4} parent=0 // loop_pre_header
    _
  $region3: #{_lambda_.4} parent=0 // loop_header
    %s9 = sphi 0, %s13
    %p10 = scmp.ge.s32.totalorder %s9, 4
    %s19 = sphi 0, %s21
    %s22 = sphi 0, %s19
    %s23 = sphi 0, %s22
    %s39 = sphi 0, %s23
    %s43 = sphi 0, %s43
    %s45 = sphi 0, %s43
    %s46 = sphi 0, %s45
    %s60 = sphi 0, %s46
    %s64 = sphi 0, %s64
    %s66 = sphi 0, %s64
    %s67 = sphi 0, %s66
    %s81 = sphi 0, %s67
    %s87 = sphi 0, %s89
    %s90 = sphi 0, %s87
    %s91 = sphi 0, %s90
    %s107 = sphi 0, %s91
  $region4: #{_lambda_.4} parent=0 // loop_header_branch
    %12 = sbr.rel (%p10) target = $region8
  $region5: #{_lambda_.4} parent=0 // loop_body
    %s14 = ssub.s32 %s9, 1
    %s15 = ssub.s32 %s9, 2
    %s16 = sadd.s32 %s9, 1
    %s17 = ssub.s32 %s9, %s16
    %p18 = scmp.eq.s32.totalorder %s17, 0
    %s20 = sadd.s32 %s19, 1
    %s21 = scalar_select %p18, %s19, %s20
    %p24 = pneg %p18
    %p25 = scmp.eq.s32.totalorder %s9, 1
    %p26 = por %p24, %p25
    %p27 = scmp.ne.s32.totalorder %s19, %s22
    %p28 = scmp.eq.s32.totalorder %s9, 0
    %p29 = por %p27, %p28
    %p30 = scmp.ne.s32.totalorder %s19, %s22
    %p31 = scmp.eq.s32.totalorder %s14, 1
    %p32 = por %p30, %p31
    %p33 = scmp.ne.s32.totalorder %s22, %s23
    %p34 = scmp.eq.s32.totalorder %s14, 0
    %p35 = por %p33, %p34
    %p36 = scmp.ne.s32.totalorder %s22, %s23
    %p37 = scmp.eq.s32.totalorder %s15, 1
    %p38 = por %p36, %p37
    %p40 = scmp.ne.s32.totalorder %s23, %s39
    %p41 = scmp.eq.s32.totalorder %s15, 0
    %p42 = por %p40, %p41
    %s44 = sadd.s32 %s43, 1
    %p47 = scmp.eq.s32.totalorder %s9, 1
    %p48 = scmp.ne.s32.totalorder %s43, %s45
    %p49 = scmp.eq.s32.totalorder %s9, 0
    %p50 = por %p48, %p49
    %p51 = scmp.ne.s32.totalorder %s43, %s45
    %p52 = scmp.eq.s32.totalorder %s14, 1
    %p53 = por %p51, %p52
    %p54 = scmp.ne.s32.totalorder %s45, %s46
    %p55 = scmp.eq.s32.totalorder %s14, 0
    %p56 = por %p54, %p55
    %p57 = scmp.ne.s32.totalorder %s45, %s46
    %p58 = scmp.eq.s32.totalorder %s15, 1
    %p59 = por %p57, %p58
    %p61 = scmp.ne.s32.totalorder %s46, %s60
    %p62 = scmp.eq.s32.totalorder %s15, 0
    %p63 = por %p61, %p62
    %s65 = sadd.s32 %s64, 1
    %p68 = scmp.eq.s32.totalorder %s9, 1
    %p69 = scmp.ne.s32.totalorder %s64, %s66
    %p70 = scmp.eq.s32.totalorder %s9, 0
    %p71 = por %p69, %p70
    %p72 = scmp.ne.s32.totalorder %s64, %s66
    %p73 = scmp.eq.s32.totalorder %s14, 1
    %p74 = por %p72, %p73
    %p75 = scmp.ne.s32.totalorder %s66, %s67
    %p76 = scmp.eq.s32.totalorder %s14, 0
    %p77 = por %p75, %p76
    %p78 = scmp.ne.s32.totalorder %s66, %s67
    %p79 = scmp.eq.s32.totalorder %s15, 1
    %p80 = por %p78, %p79
    %p82 = scmp.ne.s32.totalorder %s67, %s81
    %p83 = scmp.eq.s32.totalorder %s15, 0
    %p84 = por %p82, %p83
    %s85 = ssub.s32 %s9, %s16
    %p86 = scmp.eq.s32.totalorder %s85, 0
    %s88 = sadd.s32 %s87, 1
    %s89 = scalar_select %p86, %s87, %s88
    %p92 = pneg %p86
    %p93 = scmp.eq.s32.totalorder %s9, 1
    %p94 = por %p92, %p93
    %p95 = scmp.ne.s32.totalorder %s87, %s90
    %p96 = scmp.eq.s32.totalorder %s9, 0
    %p97 = por %p95, %p96
    %p98 = scmp.ne.s32.totalorder %s87, %s90
    %p99 = scmp.eq.s32.totalorder %s14, 1
    %p100 = por %p98, %p99
    %p101 = scmp.ne.s32.totalorder %s90, %s91
    %p102 = scmp.eq.s32.totalorder %s14, 0
    %p103 = por %p101, %p102
    %p104 = scmp.ne.s32.totalorder %s90, %s91
    %p105 = scmp.eq.s32.totalorder %s15, 1
    %p106 = por %p104, %p105
    %p108 = scmp.ne.s32.totalorder %s91, %s107
    %p109 = scmp.eq.s32.totalorder %s15, 0
    %p110 = por %p108, %p109
    %p111 = scmp.le.s32.totalorder 1, %s9
    %p112 = scmp.lt.s32.totalorder %s9, 3
    %p113 = pnand %p111, %p112
    %p114 = pneg %p113
    // Predicated region
    $region9: #{_lambda_.4} parent=5 // pred_check
      _
    $region10: #{_lambda_.4} parent=5 // pred_check_branch
      %116 = sbr.rel (%p113) target = $region12
    $region11: #{_lambda_.4} parent=5 // pred_region
      %s117 = ssub.s32 %s9, 1
      // Predicated region
      $region13: #{_lambda_.4} parent=11 // pred_check
        %p118 = pneg %p56
      $region14: #{_lambda_.4} parent=11 // pred_check_branch
        %120 = sbr.rel (%p118) target = $region16
      $region15: #{_lambda_.4} parent=11 // pred_region
        _
      $region16: #{_lambda_.4} parent=11 // pred_fallthru
        _
      // Predicated region
      $region17: #{_lambda_.4} parent=11 // pred_check
        %p121 = pneg %p77
      $region18: #{_lambda_.4} parent=11 // pred_check_branch
        %123 = sbr.rel (%p121) target = $region20
      $region19: #{_lambda_.4} parent=11 // pred_region
        _
      $region20: #{_lambda_.4} parent=11 // pred_fallthru
        _
    $region12: #{_lambda_.4} parent=5 // pred_fallthru
      _
    %p124 = scmp.lt.s32.totalorder %s9, 2
    // Predicated region
    $region21: #{_lambda_.4} parent=5 // pred_check
      %p125 = pneg %p124
    $region22: #{_lambda_.4} parent=5 // pred_check_branch
      %127 = sbr.rel (%p125) target = $region24
    $region23: #{_lambda_.4} parent=5 // pred_region
      // Predicated region
      $region25: #{_lambda_.4} parent=23 // pred_check
        %p128 = pneg %p29
      $region26: #{_lambda_.4} parent=23 // pred_check_branch
        %130 = sbr.rel (%p128) target = $region28
      $region27: #{_lambda_.4} parent=23 // pred_region
        %p131 = scmp.lt.s32.totalorder %s9, 1
        %s132 = scalar_select %p131, %s9, 1
        %s133 = smul.addr %s132, 48
        %s134 = smul.addr %s133, 4
        %s135 = scalar_lea.vmem %s0, %s134
      $region28: #{_lambda_.4} parent=23 // pred_fallthru
        _
    $region24: #{_lambda_.4} parent=5 // pred_fallthru
      _
    %p136 = scmp.le.s32.totalorder 1, %s9
    %p137 = scmp.lt.s32.totalorder %s9, 3
    %p138 = pnand %p136, %p137
    %p139 = pneg %p138
    // Predicated region
    $region29: #{_lambda_.4} parent=5 // pred_check
      _
    $region30: #{_lambda_.4} parent=5 // pred_check_branch
      %141 = sbr.rel (%p138) target = $region32
    $region31: #{_lambda_.4} parent=5 // pred_region
      %s142 = ssub.s32 %s9, 1
      %p143 = scmp.lt.s32.totalorder %s14, 1
      %s144 = scalar_select %p143, %s14, 1
      %s145 = smul.addr %s144, 48
      %s146 = smul.addr %s145, 4
      %s147 = scalar_lea.vmem %s0, %s146
      %p148 = pneg %p35
      %p149 = pneg %p32
      %p150 = pneg %p56
      %p151 = pneg %p53
      %p152 = pneg %p77
      %p153 = pneg %p74
      %p154 = pneg %p103
      %p155 = pneg %p100
      %p156 = scmp.lt.s32.totalorder %s14, 1
      %s157 = scalar_select %p156, %s14, 1
      %s158 = smul.addr %s157, 8
      %s159 = smul.addr %s158, 4
      %s160 = scalar_lea.vmem %s3, %s159
      %p161 = scmp.lt.s32.totalorder %s14, 1
      %s162 = scalar_select %p161, %s14, 1
      %s163 = smul.addr %s162, 48
      %s164 = smul.addr %s163, 4
      %s165 = scalar_lea.vmem %s0, %s164
      %p166 = scmp.lt.s32.totalorder %s14, 1
      %s167 = scalar_select %p166, %s14, 1
      %s168 = smul.addr %s167, 8
      %s169 = smul.addr %s168, 4
      %s170 = scalar_lea.vmem %s3, %s169
      %v171 = vld [vmem:[%s165] sm:$0xf]
      %v172 = vld [vmem:[%s165 + $0x10] sm:$0xf]
      %v173 = vld [vmem:[%s165 + $0x20] sm:$0xf]
      %v174 = vld [vmem:[%s165 + $0x30] sm:$0xf]
      %v175 = vld [vmem:[%s165 + $0x40] sm:$0xf]
      %v176 = vld [vmem:[%s165 + $0x50] sm:$0xf]
      %v177 = vld [vmem:[%s165 + $0x60] sm:$0xf]
      %v178 = vld [vmem:[%s165 + $0x70] sm:$0xf]
      %v179 = vld [vmem:[%s165 + $0x80] sm:$0xf]
      %v180 = vld [vmem:[%s1] sm:$0xf]
      %v181 = vld [vmem:[%s1 + $0x4] sm:$0xf]
      %v182 = vld [vmem:[%s1 + $0x8] sm:$0xf]
      %v183 = vld [vmem:[%s1 + $0xc] sm:$0xf]
      %v184 = vld [vmem:[%s1 + $0x10] sm:$0xf]
      %v185 = vld [vmem:[%s1 + $0x14] sm:$0xf]
      %v186 = vld [vmem:[%s1 + $0x18] sm:$0xf]
      %v187 = vld [vmem:[%s1 + $0x1c] sm:$0xf]
      %v188 = vld [vmem:[%s1 + $0x20] sm:$0xf]
      %v189 = vld [vmem:[%s1 + $0x24] sm:$0xf]
      %v190 = vld [vmem:[%s1 + $0x28] sm:$0xf]
      %v191 = vld [vmem:[%s1 + $0x2c] sm:$0xf]
      %v192 = vld [vmem:[%s1 + $0x30] sm:$0xf]
      %v193 = vld [vmem:[%s1 + $0x34] sm:$0xf]
      %v194 = vld [vmem:[%s1 + $0x38] sm:$0xf]
      %v195 = vld [vmem:[%s1 + $0x3c] sm:$0xf]
      %v205 = vunpack.c.l.b16 %v171
      %v206 = vunpack.c.l.b16 %v172
      %v207 = vunpack.c.l.b16 %v173
      %v208 = vunpack.c.l.b16 %v174
      %v209 = vunpack.c.l.b16 %v175
      %v210 = vunpack.c.l.b16 %v176
      %v211 = vunpack.c.l.b16 %v177
      %v212 = vunpack.c.l.b16 %v178
      %v213 = vunpack.c.l.b16 %v179
      %v214 = vpack.c.b16 %v206, %v205
      %v215 = vpack.c.b16 %v208, %v207
      %v216 = vpack.c.b16 %v210, %v209
      %v217 = vpack.c.b16 %v212, %v211
      %v218 = vpack.c.b16 %v213, %v213
      %v240 = vunpack.c.l.b16 %v180
      %v241 = vunpack.c.l.b16 %v181
      %v242 = vunpack.c.l.b16 %v182
      %v243 = vunpack.c.l.b16 %v183
      %v244 = vunpack.c.l.b16 %v184
      %v245 = vunpack.c.l.b16 %v185
      %v246 = vunpack.c.l.b16 %v186
      %v247 = vunpack.c.l.b16 %v187
      %v248 = vunpack.c.l.b16 %v188
      %v249 = vunpack.c.l.b16 %v189
      %v250 = vunpack.c.l.b16 %v190
      %v251 = vunpack.c.l.b16 %v191
      %v252 = vunpack.c.l.b16 %v192
      %v253 = vunpack.c.l.b16 %v193
      %v254 = vunpack.c.l.b16 %v194
      %v255 = vunpack.c.l.b16 %v195
      %v256 = vpack.c.b16 %v241, %v240
      %v257 = vpack.c.b16 %v243, %v242
      %v258 = vpack.c.b16 %v245, %v244
      %v259 = vpack.c.b16 %v247, %v246
      %v260 = vpack.c.b16 %v249, %v248
      %v261 = vpack.c.b16 %v251, %v250
      %v262 = vpack.c.b16 %v253, %v252
      %v263 = vpack.c.b16 %v255, %v254
      %272 = vmatpush.bf16.msra.mxu0 %v263
      %273 = vmatpush.bf16.msra.mxu0 %v262
      %274 = vmatpush.bf16.msra.mxu0 %v261
      %275 = vmatpush.bf16.msra.mxu0 %v260
      %276 = vmatpush.bf16.msra.mxu0 %v259
      %277 = vmatpush.bf16.msra.mxu0 %v258
      %278 = vmatpush.bf16.msra.mxu0 %v257
      %279 = vmatpush.bf16.msra.mxu0 %v256
      %280 = vmatmul.bf16.gmra.mxu0 %v214
      %v281 = vpop.f32.mrf.mxu0
      %v282 = vadd.f32 0.0, %v281
      %v283 = vpop.f32.mrf.mxu0
      %v284 = vadd.f32 0.0, %v283
      %285 = vmatmul.bf16.gmra.mxu0 %v215
      %v286 = vpop.f32.mrf.mxu0
      %v287 = vadd.f32 0.0, %v286
      %v288 = vpop.f32.mrf.mxu0
      %v289 = vadd.f32 0.0, %v288
      %290 = vmatmul.bf16.gmra.mxu0 %v216
      %v291 = vpop.f32.mrf.mxu0
      %v292 = vadd.f32 0.0, %v291
      %v293 = vpop.f32.mrf.mxu0
      %v294 = vadd.f32 0.0, %v293
      %295 = vmatmul.bf16.gmra.mxu0 %v217
      %v296 = vpop.f32.mrf.mxu0
      %v297 = vadd.f32 0.0, %v296
      %v298 = vpop.f32.mrf.mxu0
      %v299 = vadd.f32 0.0, %v298
      %300 = vmatmul.bf16.gmra.mxu0 %v218
      %v301 = vpop.f32.mrf.mxu0
      %v302 = vadd.f32 0.0, %v301
      %v303 = vpop.f32.mrf.mxu0
      %304 = vdwg.mxu0
      %305 = vst [vmem:[#allocation2] sm:$0xff] %v282
      %306 = vst [vmem:[#allocation2 + $0x8] sm:$0xff] %v284
      %307 = vst [vmem:[#allocation2 + $0x10] sm:$0xff] %v287
      %308 = vst [vmem:[#allocation2 + $0x18] sm:$0xff] %v289
      %309 = vst [vmem:[#allocation2 + $0x20] sm:$0xff] %v292
      %310 = vst [vmem:[#allocation2 + $0x28] sm:$0xff] %v294
      %311 = vst [vmem:[#allocation2 + $0x30] sm:$0xff] %v297
      %312 = vst [vmem:[#allocation2 + $0x38] sm:$0xff] %v299
      %313 = vst [vmem:[#allocation2 + $0x40] sm:$0xff] %v302
      %v314 = vld [vmem:[%s165 + $0x4] sm:$0xf]
      %v315 = vld [vmem:[%s165 + $0x14] sm:$0xf]
      %v316 = vld [vmem:[%s165 + $0x24] sm:$0xf]
      %v317 = vld [vmem:[%s165 + $0x34] sm:$0xf]
      %v318 = vld [vmem:[%s165 + $0x44] sm:$0xf]
      %v319 = vld [vmem:[%s165 + $0x54] sm:$0xf]
      %v320 = vld [vmem:[%s165 + $0x64] sm:$0xf]
      %v321 = vld [vmem:[%s165 + $0x74] sm:$0xf]
      %v322 = vld [vmem:[%s165 + $0x84] sm:$0xf]
      %s323 = scalar_lea.vmem %s1, 64
      %v324 = vld [vmem:[%s323] sm:$0xf]
      %v325 = vld [vmem:[%s323 + $0x4] sm:$0xf]
      %v326 = vld [vmem:[%s323 + $0x8] sm:$0xf]
      %v327 = vld [vmem:[%s323 + $0xc] sm:$0xf]
      %v328 = vld [vmem:[%s323 + $0x10] sm:$0xf]
      %v329 = vld [vmem:[%s323 + $0x14] sm:$0xf]
      %v330 = vld [vmem:[%s323 + $0x18] sm:$0xf]
      %v331 = vld [vmem:[%s323 + $0x1c] sm:$0xf]
      %v332 = vld [vmem:[%s323 + $0x20] sm:$0xf]
      %v333 = vld [vmem:[%s323 + $0x24] sm:$0xf]
      %v334 = vld [vmem:[%s323 + $0x28] sm:$0xf]
      %v335 = vld [vmem:[%s323 + $0x2c] sm:$0xf]
      %v336 = vld [vmem:[%s323 + $0x30] sm:$0xf]
      %v337 = vld [vmem:[%s323 + $0x34] sm:$0xf]
      %v338 = vld [vmem:[%s323 + $0x38] sm:$0xf]
      %v339 = vld [vmem:[%s323 + $0x3c] sm:$0xf]
      %v349 = vunpack.c.l.b16 %v314
      %v350 = vunpack.c.l.b16 %v315
      %v351 = vunpack.c.l.b16 %v316
      %v352 = vunpack.c.l.b16 %v317
      %v353 = vunpack.c.l.b16 %v318
      %v354 = vunpack.c.l.b16 %v319
      %v355 = vunpack.c.l.b16 %v320
      %v356 = vunpack.c.l.b16 %v321
      %v357 = vunpack.c.l.b16 %v322
      %v358 = vpack.c.b16 %v350, %v349
      %v359 = vpack.c.b16 %v352, %v351
      %v360 = vpack.c.b16 %v354, %v353
      %v361 = vpack.c.b16 %v356, %v355
      %v362 = vpack.c.b16 %v357, %v357
      %v384 = vunpack.c.l.b16 %v324
      %v385 = vunpack.c.l.b16 %v325
      %v386 = vunpack.c.l.b16 %v326
      %v387 = vunpack.c.l.b16 %v327
      %v388 = vunpack.c.l.b16 %v328
      %v389 = vunpack.c.l.b16 %v329
      %v390 = vunpack.c.l.b16 %v330
      %v391 = vunpack.c.l.b16 %v331
      %v392 = vunpack.c.l.b16 %v332
      %v393 = vunpack.c.l.b16 %v333
      %v394 = vunpack.c.l.b16 %v334
      %v395 = vunpack.c.l.b16 %v335
      %v396 = vunpack.c.l.b16 %v336
      %v397 = vunpack.c.l.b16 %v337
      %v398 = vunpack.c.l.b16 %v338
      %v399 = vunpack.c.l.b16 %v339
      %v400 = vpack.c.b16 %v385, %v384
      %v401 = vpack.c.b16 %v387, %v386
      %v402 = vpack.c.b16 %v389, %v388
      %v403 = vpack.c.b16 %v391, %v390
      %v404 = vpack.c.b16 %v393, %v392
      %v405 = vpack.c.b16 %v395, %v394
      %v406 = vpack.c.b16 %v397, %v396
      %v407 = vpack.c.b16 %v399, %v398
      %416 = vmatpush.bf16.msra.mxu0 %v407
      %417 = vmatpush.bf16.msra.mxu0 %v406
      %418 = vmatpush.bf16.msra.mxu0 %v405
      %419 = vmatpush.bf16.msra.mxu0 %v404
      %420 = vmatpush.bf16.msra.mxu0 %v403
      %421 = vmatpush.bf16.msra.mxu0 %v402
      %422 = vmatpush.bf16.msra.mxu0 %v401
      %423 = vmatpush.bf16.msra.mxu0 %v400
      %424 = vmatmul.bf16.gmra.mxu0 %v358
      %v425 = vpop.f32.mrf.mxu0
      %v426 = vadd.f32 0.0, %v425
      %v427 = vpop.f32.mrf.mxu0
      %v428 = vadd.f32 0.0, %v427
      %429 = vmatmul.bf16.gmra.mxu0 %v359
      %v430 = vpop.f32.mrf.mxu0
      %v431 = vadd.f32 0.0, %v430
      %v432 = vpop.f32.mrf.mxu0
      %v433 = vadd.f32 0.0, %v432
      %434 = vmatmul.bf16.gmra.mxu0 %v360
      %v435 = vpop.f32.mrf.mxu0
      %v436 = vadd.f32 0.0, %v435
      %v437 = vpop.f32.mrf.mxu0
      %v438 = vadd.f32 0.0, %v437
      %439 = vmatmul.bf16.gmra.mxu0 %v361
      %v440 = vpop.f32.mrf.mxu0
      %v441 = vadd.f32 0.0, %v440
      %v442 = vpop.f32.mrf.mxu0
      %v443 = vadd.f32 0.0, %v442
      %444 = vmatmul.bf16.gmra.mxu0 %v362
      %v445 = vpop.f32.mrf.mxu0
      %v446 = vadd.f32 0.0, %v445
      %v447 = vpop.f32.mrf.mxu0
      %448 = vdwg.mxu0
      %v449 = vld [vmem:[#allocation2] sm:$0xff]
      %v450 = vld [vmem:[#allocation2 + $0x8] sm:$0xff]
      %v451 = vld [vmem:[#allocation2 + $0x10] sm:$0xff]
      %v452 = vld [vmem:[#allocation2 + $0x18] sm:$0xff]
      %v453 = vld [vmem:[#allocation2 + $0x20] sm:$0xff]
      %v454 = vld [vmem:[#allocation2 + $0x28] sm:$0xff]
      %v455 = vld [vmem:[#allocation2 + $0x30] sm:$0xff]
      %v456 = vld [vmem:[#allocation2 + $0x38] sm:$0xff]
      %v457 = vld [vmem:[#allocation2 + $0x40] sm:$0xff]
      %v458 = vadd.f32 %v449, %v426
      %v459 = vadd.f32 %v450, %v428
      %v460 = vadd.f32 %v451, %v431
      %v461 = vadd.f32 %v452, %v433
      %v462 = vadd.f32 %v453, %v436
      %v463 = vadd.f32 %v454, %v438
      %v464 = vadd.f32 %v455, %v441
      %v465 = vadd.f32 %v456, %v443
      %v466 = vadd.f32 %v457, %v446
      %467 = vst [vmem:[#allocation2] sm:$0xff] %v458
      %468 = vst [vmem:[#allocation2 + $0x8] sm:$0xff] %v459
      %469 = vst [vmem:[#allocation2 + $0x10] sm:$0xff] %v460
      %470 = vst [vmem:[#allocation2 + $0x18] sm:$0xff] %v461
      %471 = vst [vmem:[#allocation2 + $0x20] sm:$0xff] %v462
      %472 = vst [vmem:[#allocation2 + $0x28] sm:$0xff] %v463
      %473 = vst [vmem:[#allocation2 + $0x30] sm:$0xff] %v464
      %474 = vst [vmem:[#allocation2 + $0x38] sm:$0xff] %v465
      %475 = vst [vmem:[#allocation2 + $0x40] sm:$0xff] %v466
      %v476 = vld [vmem:[%s165] sm:$0xf]
      %v477 = vld [vmem:[%s165 + $0x10] sm:$0xf]
      %v478 = vld [vmem:[%s165 + $0x20] sm:$0xf]
      %v479 = vld [vmem:[%s165 + $0x30] sm:$0xf]
      %v480 = vld [vmem:[%s165 + $0x40] sm:$0xf]
      %v481 = vld [vmem:[%s165 + $0x50] sm:$0xf]
      %v482 = vld [vmem:[%s165 + $0x60] sm:$0xf]
      %v483 = vld [vmem:[%s165 + $0x70] sm:$0xf]
      %v484 = vld [vmem:[%s165 + $0x80] sm:$0xf]
      %v485 = vld [vmem:[%s165 + $0x90] sm:$0x1]
      %s486 = scalar_lea.vmem %s1, 128
      %v487 = vld [vmem:[%s486] sm:$0xf]
      %v488 = vld [vmem:[%s486 + $0x4] sm:$0xf]
      %v489 = vld [vmem:[%s486 + $0x8] sm:$0xf]
      %v490 = vld [vmem:[%s486 + $0xc] sm:$0xf]
      %v491 = vld [vmem:[%s486 + $0x10] sm:$0xf]
      %v492 = vld [vmem:[%s486 + $0x14] sm:$0xf]
      %v493 = vld [vmem:[%s486 + $0x18] sm:$0xf]
      %v494 = vld [vmem:[%s486 + $0x1c] sm:$0xf]
      %v495 = vld [vmem:[%s486 + $0x20] sm:$0xf]
      %v496 = vld [vmem:[%s486 + $0x24] sm:$0xf]
      %v497 = vld [vmem:[%s486 + $0x28] sm:$0xf]
      %v498 = vld [vmem:[%s486 + $0x2c] sm:$0xf]
      %v499 = vld [vmem:[%s486 + $0x30] sm:$0xf]
      %v500 = vld [vmem:[%s486 + $0x34] sm:$0xf]
      %v501 = vld [vmem:[%s486 + $0x38] sm:$0xf]
      %v502 = vld [vmem:[%s486 + $0x3c] sm:$0xf]
      %v513 = vunpack.c.l.b16 %v476
      %v514 = vunpack.c.l.b16 %v477
      %v515 = vunpack.c.l.b16 %v478
      %v516 = vunpack.c.l.b16 %v479
      %v517 = vunpack.c.l.b16 %v480
      %v518 = vunpack.c.l.b16 %v481
      %v519 = vunpack.c.l.b16 %v482
      %v520 = vunpack.c.l.b16 %v483
      %v521 = vunpack.c.l.b16 %v484
      %v522 = vunpack.c.l.b16 %v485
      %v523 = vpack.c.b16 %v514, %v513
      %v524 = vpack.c.b16 %v516, %v515
      %v525 = vpack.c.b16 %v518, %v517
      %v526 = vpack.c.b16 %v520, %v519
      %v527 = vpack.c.b16 %v522, %v521
      %vm528 = vsmask.f32 7424
      %v530 = vshrl.u32 %v523, 16
      %v532 = vshll.u32 %v523, 16
      %v534 = vrot.slane %v532, 1
      %v535 = vor.u32 %v530, %v534
      %v537 = vshll.u32 %v524, 16
      %v539 = vrot.slane %v537, 1
      %v540 = vsel %vm528, %v535, %v539
      %v541 = vshrl.u32 %v524, 16
      %v543 = vor.u32 %v541, %v539
      %v545 = vshll.u32 %v525, 16
      %v547 = vrot.slane %v545, 1
      %v548 = vsel %vm528, %v543, %v547
      %v549 = vshrl.u32 %v525, 16
      %v551 = vor.u32 %v549, %v547
      %v553 = vshll.u32 %v526, 16
      %v555 = vrot.slane %v553, 1
      %v556 = vsel %vm528, %v551, %v555
      %v557 = vshrl.u32 %v526, 16
      %v559 = vor.u32 %v557, %v555
      %v561 = vshll.u32 %v527, 16
      %v563 = vrot.slane %v561, 1
      %v564 = vsel %vm528, %v559, %v563
      %v565 = vshrl.u32 %v527, 16
      %v567 = vor.u32 %v565, %v563
      %v589 = vunpack.c.l.b16 %v487
      %v590 = vunpack.c.l.b16 %v488
      %v591 = vunpack.c.l.b16 %v489
      %v592 = vunpack.c.l.b16 %v490
      %v593 = vunpack.c.l.b16 %v491
      %v594 = vunpack.c.l.b16 %v492
      %v595 = vunpack.c.l.b16 %v493
      %v596 = vunpack.c.l.b16 %v494
      %v597 = vunpack.c.l.b16 %v495
      %v598 = vunpack.c.l.b16 %v496
      %v599 = vunpack.c.l.b16 %v497
      %v600 = vunpack.c.l.b16 %v498
      %v601 = vunpack.c.l.b16 %v499
      %v602 = vunpack.c.l.b16 %v500
      %v603 = vunpack.c.l.b16 %v501
      %v604 = vunpack.c.l.b16 %v502
      %v605 = vpack.c.b16 %v590, %v589
      %v606 = vpack.c.b16 %v592, %v591
      %v607 = vpack.c.b16 %v594, %v593
      %v608 = vpack.c.b16 %v596, %v595
      %v609 = vpack.c.b16 %v598, %v597
      %v610 = vpack.c.b16 %v600, %v599
      %v611 = vpack.c.b16 %v602, %v601
      %v612 = vpack.c.b16 %v604, %v603
      %621 = vmatpush.bf16.msra.mxu0 %v612
      %622 = vmatpush.bf16.msra.mxu0 %v611
      %623 = vmatpush.bf16.msra.mxu0 %v610
      %624 = vmatpush.bf16.msra.mxu0 %v609
      %625 = vmatpush.bf16.msra.mxu0 %v608
      %626 = vmatpush.bf16.msra.mxu0 %v607
      %627 = vmatpush.bf16.msra.mxu0 %v606
      %628 = vmatpush.bf16.msra.mxu0 %v605
      %629 = vmatmul.bf16.gmra.mxu0 %v540
      %v630 = vpop.f32.mrf.mxu0
      %v631 = vadd.f32 0.0, %v630
      %v632 = vpop.f32.mrf.mxu0
      %v633 = vadd.f32 0.0, %v632
      %634 = vmatmul.bf16.gmra.mxu0 %v548
      %v635 = vpop.f32.mrf.mxu0
      %v636 = vadd.f32 0.0, %v635
      %v637 = vpop.f32.mrf.mxu0
      %v638 = vadd.f32 0.0, %v637
      %639 = vmatmul.bf16.gmra.mxu0 %v556
      %v640 = vpop.f32.mrf.mxu0
      %v641 = vadd.f32 0.0, %v640
      %v642 = vpop.f32.mrf.mxu0
      %v643 = vadd.f32 0.0, %v642
      %644 = vmatmul.bf16.gmra.mxu0 %v564
      %v645 = vpop.f32.mrf.mxu0
      %v646 = vadd.f32 0.0, %v645
      %v647 = vpop.f32.mrf.mxu0
      %v648 = vadd.f32 0.0, %v647
      %649 = vmatmul.bf16.gmra.mxu0 %v567
      %v650 = vpop.f32.mrf.mxu0
      %v651 = vadd.f32 0.0, %v650
      %v652 = vpop.f32.mrf.mxu0
      %653 = vdwg.mxu0
      %v654 = vld [vmem:[#allocation2] sm:$0xff]
      %v655 = vld [vmem:[#allocation2 + $0x8] sm:$0xff]
      %v656 = vld [vmem:[#allocation2 + $0x10] sm:$0xff]
      %v657 = vld [vmem:[#allocation2 + $0x18] sm:$0xff]
      %v658 = vld [vmem:[#allocation2 + $0x20] sm:$0xff]
      %v659 = vld [vmem:[#allocation2 + $0x28] sm:$0xff]
      %v660 = vld [vmem:[#allocation2 + $0x30] sm:$0xff]
      %v661 = vld [vmem:[#allocation2 + $0x38] sm:$0xff]
      %v662 = vld [vmem:[#allocation2 + $0x40] sm:$0xff]
      %v663 = vadd.f32 %v654, %v631
      %v664 = vadd.f32 %v655, %v633
      %v665 = vadd.f32 %v656, %v636
      %v666 = vadd.f32 %v657, %v638
      %v667 = vadd.f32 %v658, %v641
      %v668 = vadd.f32 %v659, %v643
      %v669 = vadd.f32 %v660, %v646
      %v670 = vadd.f32 %v661, %v648
      %v671 = vadd.f32 %v662, %v651
      %672 = vst [vmem:[#allocation2] sm:$0xff] %v663
      %673 = vst [vmem:[#allocation2 + $0x8] sm:$0xff] %v664
      %674 = vst [vmem:[#allocation2 + $0x10] sm:$0xff] %v665
      %675 = vst [vmem:[#allocation2 + $0x18] sm:$0xff] %v666
      %676 = vst [vmem:[#allocation2 + $0x20] sm:$0xff] %v667
      %677 = vst [vmem:[#allocation2 + $0x28] sm:$0xff] %v668
      %678 = vst [vmem:[#allocation2 + $0x30] sm:$0xff] %v669
      %679 = vst [vmem:[#allocation2 + $0x38] sm:$0xff] %v670
      %680 = vst [vmem:[#allocation2 + $0x40] sm:$0xff] %v671
      %v681 = vld [vmem:[%s165 + $0x8] sm:$0xf]
      %v682 = vld [vmem:[%s165 + $0x18] sm:$0xf]
      %v683 = vld [vmem:[%s165 + $0x28] sm:$0xf]
      %v684 = vld [vmem:[%s165 + $0x38] sm:$0xf]
      %v685 = vld [vmem:[%s165 + $0x48] sm:$0xf]
      %v686 = vld [vmem:[%s165 + $0x58] sm:$0xf]
      %v687 = vld [vmem:[%s165 + $0x68] sm:$0xf]
      %v688 = vld [vmem:[%s165 + $0x78] sm:$0xf]
      %v689 = vld [vmem:[%s165 + $0x88] sm:$0xf]
      %s690 = scalar_lea.vmem %s1, 192
      %v691 = vld [vmem:[%s690] sm:$0xf]
      %v692 = vld [vmem:[%s690 + $0x4] sm:$0xf]
      %v693 = vld [vmem:[%s690 + $0x8] sm:$0xf]
      %v694 = vld [vmem:[%s690 + $0xc] sm:$0xf]
      %v695 = vld [vmem:[%s690 + $0x10] sm:$0xf]
      %v696 = vld [vmem:[%s690 + $0x14] sm:$0xf]
      %v697 = vld [vmem:[%s690 + $0x18] sm:$0xf]
      %v698 = vld [vmem:[%s690 + $0x1c] sm:$0xf]
      %v699 = vld [vmem:[%s690 + $0x20] sm:$0xf]
      %v700 = vld [vmem:[%s690 + $0x24] sm:$0xf]
      %v701 = vld [vmem:[%s690 + $0x28] sm:$0xf]
      %v702 = vld [vmem:[%s690 + $0x2c] sm:$0xf]
      %v703 = vld [vmem:[%s690 + $0x30] sm:$0xf]
      %v704 = vld [vmem:[%s690 + $0x34] sm:$0xf]
      %v705 = vld [vmem:[%s690 + $0x38] sm:$0xf]
      %v706 = vld [vmem:[%s690 + $0x3c] sm:$0xf]
      %v716 = vunpack.c.l.b16 %v681
      %v717 = vunpack.c.l.b16 %v682
      %v718 = vunpack.c.l.b16 %v683
      %v719 = vunpack.c.l.b16 %v684
      %v720 = vunpack.c.l.b16 %v685
      %v721 = vunpack.c.l.b16 %v686
      %v722 = vunpack.c.l.b16 %v687
      %v723 = vunpack.c.l.b16 %v688
      %v724 = vunpack.c.l.b16 %v689
      %v725 = vpack.c.b16 %v717, %v716
      %v726 = vpack.c.b16 %v719, %v718
      %v727 = vpack.c.b16 %v721, %v720
      %v728 = vpack.c.b16 %v723, %v722
      %v729 = vpack.c.b16 %v724, %v724
      %v751 = vunpack.c.l.b16 %v691
      %v752 = vunpack.c.l.b16 %v692
      %v753 = vunpack.c.l.b16 %v693
      %v754 = vunpack.c.l.b16 %v694
      %v755 = vunpack.c.l.b16 %v695
      %v756 = vunpack.c.l.b16 %v696
      %v757 = vunpack.c.l.b16 %v697
      %v758 = vunpack.c.l.b16 %v698
      %v759 = vunpack.c.l.b16 %v699
      %v760 = vunpack.c.l.b16 %v700
      %v761 = vunpack.c.l.b16 %v701
      %v762 = vunpack.c.l.b16 %v702
      %v763 = vunpack.c.l.b16 %v703
      %v764 = vunpack.c.l.b16 %v704
      %v765 = vunpack.c.l.b16 %v705
      %v766 = vunpack.c.l.b16 %v706
      %v767 = vpack.c.b16 %v752, %v751
      %v768 = vpack.c.b16 %v754, %v753
      %v769 = vpack.c.b16 %v756, %v755
      %v770 = vpack.c.b16 %v758, %v757
      %v771 = vpack.c.b16 %v760, %v759
      %v772 = vpack.c.b16 %v762, %v761
      %v773 = vpack.c.b16 %v764, %v763
      %v774 = vpack.c.b16 %v766, %v765
      %783 = vmatpush.bf16.msra.mxu0 %v774
      %784 = vmatpush.bf16.msra.mxu0 %v773
      %785 = vmatpush.bf16.msra.mxu0 %v772
      %786 = vmatpush.bf16.msra.mxu0 %v771
      %787 = vmatpush.bf16.msra.mxu0 %v770
      %788 = vmatpush.bf16.msra.mxu0 %v769
      %789 = vmatpush.bf16.msra.mxu0 %v768
      %790 = vmatpush.bf16.msra.mxu0 %v767
      %791 = vmatmul.bf16.gmra.mxu0 %v725
      %v792 = vpop.f32.mrf.mxu0
      %v793 = vadd.f32 0.0, %v792
      %v794 = vpop.f32.mrf.mxu0
      %v795 = vadd.f32 0.0, %v794
      %796 = vmatmul.bf16.gmra.mxu0 %v726
      %v797 = vpop.f32.mrf.mxu0
      %v798 = vadd.f32 0.0, %v797
      %v799 = vpop.f32.mrf.mxu0
      %v800 = vadd.f32 0.0, %v799
      %801 = vmatmul.bf16.gmra.mxu0 %v727
      %v802 = vpop.f32.mrf.mxu0
      %v803 = vadd.f32 0.0, %v802
      %v804 = vpop.f32.mrf.mxu0
      %v805 = vadd.f32 0.0, %v804
      %806 = vmatmul.bf16.gmra.mxu0 %v728
      %v807 = vpop.f32.mrf.mxu0
      %v808 = vadd.f32 0.0, %v807
      %v809 = vpop.f32.mrf.mxu0
      %v810 = vadd.f32 0.0, %v809
      %811 = vmatmul.bf16.gmra.mxu0 %v729
      %v812 = vpop.f32.mrf.mxu0
      %v813 = vadd.f32 0.0, %v812
      %v814 = vpop.f32.mrf.mxu0
      %815 = vdwg.mxu0
      %v816 = vld [vmem:[#allocation2] sm:$0xff]
      %v817 = vld [vmem:[#allocation2 + $0x8] sm:$0xff]
      %v818 = vld [vmem:[#allocation2 + $0x10] sm:$0xff]
      %v819 = vld [vmem:[#allocation2 + $0x18] sm:$0xff]
      %v820 = vld [vmem:[#allocation2 + $0x20] sm:$0xff]
      %v821 = vld [vmem:[#allocation2 + $0x28] sm:$0xff]
      %v822 = vld [vmem:[#allocation2 + $0x30] sm:$0xff]
      %v823 = vld [vmem:[#allocation2 + $0x38] sm:$0xff]
      %v824 = vld [vmem:[#allocation2 + $0x40] sm:$0xff]
      %v825 = vadd.f32 %v816, %v793
      %v826 = vadd.f32 %v817, %v795
      %v827 = vadd.f32 %v818, %v798
      %v828 = vadd.f32 %v819, %v800
      %v829 = vadd.f32 %v820, %v803
      %v830 = vadd.f32 %v821, %v805
      %v831 = vadd.f32 %v822, %v808
      %v832 = vadd.f32 %v823, %v810
      %v833 = vadd.f32 %v824, %v813
      %834 = vst [vmem:[#allocation2] sm:$0xff] %v825
      %835 = vst [vmem:[#allocation2 + $0x8] sm:$0xff] %v826
      %836 = vst [vmem:[#allocation2 + $0x10] sm:$0xff] %v827
      %837 = vst [vmem:[#allocation2 + $0x18] sm:$0xff] %v828
      %838 = vst [vmem:[#allocation2 + $0x20] sm:$0xff] %v829
      %839 = vst [vmem:[#allocation2 + $0x28] sm:$0xff] %v830
      %840 = vst [vmem:[#allocation2 + $0x30] sm:$0xff] %v831
      %841 = vst [vmem:[#allocation2 + $0x38] sm:$0xff] %v832
      %842 = vst [vmem:[#allocation2 + $0x40] sm:$0xff] %v833
      %v843 = vld [vmem:[%s165 + $0xc] sm:$0xf]
      %v844 = vld [vmem:[%s165 + $0x1c] sm:$0xf]
      %v845 = vld [vmem:[%s165 + $0x2c] sm:$0xf]
      %v846 = vld [vmem:[%s165 + $0x3c] sm:$0xf]
      %v847 = vld [vmem:[%s165 + $0x4c] sm:$0xf]
      %v848 = vld [vmem:[%s165 + $0x5c] sm:$0xf]
      %v849 = vld [vmem:[%s165 + $0x6c] sm:$0xf]
      %v850 = vld [vmem:[%s165 + $0x7c] sm:$0xf]
      %v851 = vld [vmem:[%s165 + $0x8c] sm:$0xf]
      %s852 = scalar_lea.vmem %s1, 256
      %v853 = vld [vmem:[%s852] sm:$0xf]
      %v854 = vld [vmem:[%s852 + $0x4] sm:$0xf]
      %v855 = vld [vmem:[%s852 + $0x8] sm:$0xf]
      %v856 = vld [vmem:[%s852 + $0xc] sm:$0xf]
      %v857 = vld [vmem:[%s852 + $0x10] sm:$0xf]
      %v858 = vld [vmem:[%s852 + $0x14] sm:$0xf]
      %v859 = vld [vmem:[%s852 + $0x18] sm:$0xf]
      %v860 = vld [vmem:[%s852 + $0x1c] sm:$0xf]
      %v861 = vld [vmem:[%s852 + $0x20] sm:$0xf]
      %v862 = vld [vmem:[%s852 + $0x24] sm:$0xf]
      %v863 = vld [vmem:[%s852 + $0x28] sm:$0xf]
      %v864 = vld [vmem:[%s852 + $0x2c] sm:$0xf]
      %v865 = vld [vmem:[%s852 + $0x30] sm:$0xf]
      %v866 = vld [vmem:[%s852 + $0x34] sm:$0xf]
      %v867 = vld [vmem:[%s852 + $0x38] sm:$0xf]
      %v868 = vld [vmem:[%s852 + $0x3c] sm:$0xf]
      %v878 = vunpack.c.l.b16 %v843
      %v879 = vunpack.c.l.b16 %v844
      %v880 = vunpack.c.l.b16 %v845
      %v881 = vunpack.c.l.b16 %v846
      %v882 = vunpack.c.l.b16 %v847
      %v883 = vunpack.c.l.b16 %v848
      %v884 = vunpack.c.l.b16 %v849
      %v885 = vunpack.c.l.b16 %v850
      %v886 = vunpack.c.l.b16 %v851
      %v887 = vpack.c.b16 %v879, %v878
      %v888 = vpack.c.b16 %v881, %v880
      %v889 = vpack.c.b16 %v883, %v882
      %v890 = vpack.c.b16 %v885, %v884
      %v891 = vpack.c.b16 %v886, %v886
      %v913 = vunpack.c.l.b16 %v853
      %v914 = vunpack.c.l.b16 %v854
      %v915 = vunpack.c.l.b16 %v855
      %v916 = vunpack.c.l.b16 %v856
      %v917 = vunpack.c.l.b16 %v857
      %v918 = vunpack.c.l.b16 %v858
      %v919 = vunpack.c.l.b16 %v859
      %v920 = vunpack.c.l.b16 %v860
      %v921 = vunpack.c.l.b16 %v861
      %v922 = vunpack.c.l.b16 %v862
      %v923 = vunpack.c.l.b16 %v863
      %v924 = vunpack.c.l.b16 %v864
      %v925 = vunpack.c.l.b16 %v865
      %v926 = vunpack.c.l.b16 %v866
      %v927 = vunpack.c.l.b16 %v867
      %v928 = vunpack.c.l.b16 %v868
      %v929 = vpack.c.b16 %v914, %v913
      %v930 = vpack.c.b16 %v916, %v915
      %v931 = vpack.c.b16 %v918, %v917
      %v932 = vpack.c.b16 %v920, %v919
      %v933 = vpack.c.b16 %v922, %v921
      %v934 = vpack.c.b16 %v924, %v923
      %v935 = vpack.c.b16 %v926, %v925
      %v936 = vpack.c.b16 %v928, %v927
      %945 = vmatpush.bf16.msra.mxu0 %v936
      %946 = vmatpush.bf16.msra.mxu0 %v935
      %947 = vmatpush.bf16.msra.mxu0 %v934
      %948 = vmatpush.bf16.msra.mxu0 %v933
      %949 = vmatpush.bf16.msra.mxu0 %v932
      %950 = vmatpush.bf16.msra.mxu0 %v931
      %951 = vmatpush.bf16.msra.mxu0 %v930
      %952 = vmatpush.bf16.msra.mxu0 %v929
      %953 = vmatmul.bf16.gmra.mxu0 %v887
      %v954 = vpop.f32.mrf.mxu0
      %v955 = vadd.f32 0.0, %v954
      %v956 = vpop.f32.mrf.mxu0
      %v957 = vadd.f32 0.0, %v956
      %958 = vmatmul.bf16.gmra.mxu0 %v888
      %v959 = vpop.f32.mrf.mxu0
      %v960 = vadd.f32 0.0, %v959
      %v961 = vpop.f32.mrf.mxu0
      %v962 = vadd.f32 0.0, %v961
      %963 = vmatmul.bf16.gmra.mxu0 %v889
      %v964 = vpop.f32.mrf.mxu0
      %v965 = vadd.f32 0.0, %v964
      %v966 = vpop.f32.mrf.mxu0
      %v967 = vadd.f32 0.0, %v966
      %968 = vmatmul.bf16.gmra.mxu0 %v890
      %v969 = vpop.f32.mrf.mxu0
      %v970 = vadd.f32 0.0, %v969
      %v971 = vpop.f32.mrf.mxu0
      %v972 = vadd.f32 0.0, %v971
      %973 = vmatmul.bf16.gmra.mxu0 %v891
      %v974 = vpop.f32.mrf.mxu0
      %v975 = vadd.f32 0.0, %v974
      %v976 = vpop.f32.mrf.mxu0
      %977 = vdwg.mxu0
      %v978 = vld [vmem:[#allocation2] sm:$0xff]
      %v979 = vld [vmem:[#allocation2 + $0x8] sm:$0xff]
      %v980 = vld [vmem:[#allocation2 + $0x10] sm:$0xff]
      %v981 = vld [vmem:[#allocation2 + $0x18] sm:$0xff]
      %v982 = vld [vmem:[#allocation2 + $0x20] sm:$0xff]
      %v983 = vld [vmem:[#allocation2 + $0x28] sm:$0xff]
      %v984 = vld [vmem:[#allocation2 + $0x30] sm:$0xff]
      %v985 = vld [vmem:[#allocation2 + $0x38] sm:$0xff]
      %v986 = vld [vmem:[#allocation2 + $0x40] sm:$0xff]
      %v987 = vadd.f32 %v978, %v955
      %v988 = vadd.f32 %v979, %v957
      %v989 = vadd.f32 %v980, %v960
      %v990 = vadd.f32 %v981, %v962
      %v991 = vadd.f32 %v982, %v965
      %v992 = vadd.f32 %v983, %v967
      %v993 = vadd.f32 %v984, %v970
      %v994 = vadd.f32 %v985, %v972
      %v995 = vadd.f32 %v986, %v975
      %996 = vst [vmem:[#allocation2] sm:$0xff] %v987
      %997 = vst [vmem:[#allocation2 + $0x8] sm:$0xff] %v988
      %998 = vst [vmem:[#allocation2 + $0x10] sm:$0xff] %v989
      %999 = vst [vmem:[#allocation2 + $0x18] sm:$0xff] %v990
      %1000 = vst [vmem:[#allocation2 + $0x20] sm:$0xff] %v991
      %1001 = vst [vmem:[#allocation2 + $0x28] sm:$0xff] %v992
      %1002 = vst [vmem:[#allocation2 + $0x30] sm:$0xff] %v993
      %1003 = vst [vmem:[#allocation2 + $0x38] sm:$0xff] %v994
      %1004 = vst [vmem:[#allocation2 + $0x40] sm:$0xff] %v995
      %v1005 = vld [vmem:[%s165 + $0x8] sm:$0xf]
      %v1006 = vld [vmem:[%s165 + $0x18] sm:$0xf]
      %v1007 = vld [vmem:[%s165 + $0x28] sm:$0xf]
      %v1008 = vld [vmem:[%s165 + $0x38] sm:$0xf]
      %v1009 = vld [vmem:[%s165 + $0x48] sm:$0xf]
      %v1010 = vld [vmem:[%s165 + $0x58] sm:$0xf]
      %v1011 = vld [vmem:[%s165 + $0x68] sm:$0xf]
      %v1012 = vld [vmem:[%s165 + $0x78] sm:$0xf]
      %v1013 = vld [vmem:[%s165 + $0x88] sm:$0xf]
      %v1014 = vld [vmem:[%s165 + $0x98] sm:$0x1]
      %s1015 = scalar_lea.vmem %s1, 320
      %v1016 = vld [vmem:[%s1015] sm:$0xf]
      %v1017 = vld [vmem:[%s1015 + $0x4] sm:$0xf]
      %v1018 = vld [vmem:[%s1015 + $0x8] sm:$0xf]
      %v1019 = vld [vmem:[%s1015 + $0xc] sm:$0xf]
      %v1020 = vld [vmem:[%s1015 + $0x10] sm:$0xf]
      %v1021 = vld [vmem:[%s1015 + $0x14] sm:$0xf]
      %v1022 = vld [vmem:[%s1015 + $0x18] sm:$0xf]
      %v1023 = vld [vmem:[%s1015 + $0x1c] sm:$0xf]
      %v1024 = vld [vmem:[%s1015 + $0x20] sm:$0xf]
      %v1025 = vld [vmem:[%s1015 + $0x24] sm:$0xf]
      %v1026 = vld [vmem:[%s1015 + $0x28] sm:$0xf]
      %v1027 = vld [vmem:[%s1015 + $0x2c] sm:$0xf]
      %v1028 = vld [vmem:[%s1015 + $0x30] sm:$0xf]
      %v1029 = vld [vmem:[%s1015 + $0x34] sm:$0xf]
      %v1030 = vld [vmem:[%s1015 + $0x38] sm:$0xf]
      %v1031 = vld [vmem:[%s1015 + $0x3c] sm:$0xf]
      %v1042 = vunpack.c.l.b16 %v1005
      %v1043 = vunpack.c.l.b16 %v1006
      %v1044 = vunpack.c.l.b16 %v1007
      %v1045 = vunpack.c.l.b16 %v1008
      %v1046 = vunpack.c.l.b16 %v1009
      %v1047 = vunpack.c.l.b16 %v1010
      %v1048 = vunpack.c.l.b16 %v1011
      %v1049 = vunpack.c.l.b16 %v1012
      %v1050 = vunpack.c.l.b16 %v1013
      %v1051 = vunpack.c.l.b16 %v1014
      %v1052 = vpack.c.b16 %v1043, %v1042
      %v1053 = vpack.c.b16 %v1045, %v1044
      %v1054 = vpack.c.b16 %v1047, %v1046
      %v1055 = vpack.c.b16 %v1049, %v1048
      %v1056 = vpack.c.b16 %v1051, %v1050
      %v1058 = vshrl.u32 %v1052, 16
      %v1060 = vshll.u32 %v1052, 16
      %v1062 = vrot.slane %v1060, 1
      %v1063 = vor.u32 %v1058, %v1062
      %v1065 = vshll.u32 %v1053, 16
      %v1067 = vrot.slane %v1065, 1
      %v1068 = vsel %vm528, %v1063, %v1067
      %v1069 = vshrl.u32 %v1053, 16
      %v1071 = vor.u32 %v1069, %v1067
      %v1073 = vshll.u32 %v1054, 16
      %v1075 = vrot.slane %v1073, 1
      %v1076 = vsel %vm528, %v1071, %v1075
      %v1077 = vshrl.u32 %v1054, 16
      %v1079 = vor.u32 %v1077, %v1075
      %v1081 = vshll.u32 %v1055, 16
      %v1083 = vrot.slane %v1081, 1
      %v1084 = vsel %vm528, %v1079, %v1083
      %v1085 = vshrl.u32 %v1055, 16
      %v1087 = vor.u32 %v1085, %v1083
      %v1089 = vshll.u32 %v1056, 16
      %v1091 = vrot.slane %v1089, 1
      %v1092 = vsel %vm528, %v1087, %v1091
      %v1093 = vshrl.u32 %v1056, 16
      %v1095 = vor.u32 %v1093, %v1091
      %v1117 = vunpack.c.l.b16 %v1016
      %v1118 = vunpack.c.l.b16 %v1017
      %v1119 = vunpack.c.l.b16 %v1018
      %v1120 = vunpack.c.l.b16 %v1019
      %v1121 = vunpack.c.l.b16 %v1020
      %v1122 = vunpack.c.l.b16 %v1021
      %v1123 = vunpack.c.l.b16 %v1022
      %v1124 = vunpack.c.l.b16 %v1023
      %v1125 = vunpack.c.l.b16 %v1024
      %v1126 = vunpack.c.l.b16 %v1025
      %v1127 = vunpack.c.l.b16 %v1026
      %v1128 = vunpack.c.l.b16 %v1027
      %v1129 = vunpack.c.l.b16 %v1028
      %v1130 = vunpack.c.l.b16 %v1029
      %v1131 = vunpack.c.l.b16 %v1030
      %v1132 = vunpack.c.l.b16 %v1031
      %v1133 = vpack.c.b16 %v1118, %v1117
      %v1134 = vpack.c.b16 %v1120, %v1119
      %v1135 = vpack.c.b16 %v1122, %v1121
      %v1136 = vpack.c.b16 %v1124, %v1123
      %v1137 = vpack.c.b16 %v1126, %v1125
      %v1138 = vpack.c.b16 %v1128, %v1127
      %v1139 = vpack.c.b16 %v1130, %v1129
      %v1140 = vpack.c.b16 %v1132, %v1131
      %1149 = vmatpush.bf16.msra.mxu0 %v1140
      %1150 = vmatpush.bf16.msra.mxu0 %v1139
      %1151 = vmatpush.bf16.msra.mxu0 %v1138
      %1152 = vmatpush.bf16.msra.mxu0 %v1137
      %1153 = vmatpush.bf16.msra.mxu0 %v1136
      %1154 = vmatpush.bf16.msra.mxu0 %v1135
      %1155 = vmatpush.bf16.msra.mxu0 %v1134
      %1156 = vmatpush.bf16.msra.mxu0 %v1133
      %1157 = vmatmul.bf16.gmra.mxu0 %v1068
      %v1158 = vpop.f32.mrf.mxu0
      %v1159 = vadd.f32 0.0, %v1158
      %v1160 = vpop.f32.mrf.mxu0
      %v1161 = vadd.f32 0.0, %v1160
      %1162 = vmatmul.bf16.gmra.mxu0 %v1076
      %v1163 = vpop.f32.mrf.mxu0
      %v1164 = vadd.f32 0.0, %v1163
      %v1165 = vpop.f32.mrf.mxu0
      %v1166 = vadd.f32 0.0, %v1165
      %1167 = vmatmul.bf16.gmra.mxu0 %v1084
      %v1168 = vpop.f32.mrf.mxu0
      %v1169 = vadd.f32 0.0, %v1168
      %v1170 = vpop.f32.mrf.mxu0
      %v1171 = vadd.f32 0.0, %v1170
      %1172 = vmatmul.bf16.gmra.mxu0 %v1092
      %v1173 = vpop.f32.mrf.mxu0
      %v1174 = vadd.f32 0.0, %v1173
      %v1175 = vpop.f32.mrf.mxu0
      %v1176 = vadd.f32 0.0, %v1175
      %1177 = vmatmul.bf16.gmra.mxu0 %v1095
      %v1178 = vpop.f32.mrf.mxu0
      %v1179 = vadd.f32 0.0, %v1178
      %v1180 = vpop.f32.mrf.mxu0
      %1181 = vdwg.mxu0
      %v1182 = vld [vmem:[#allocation2] sm:$0xff]
      %v1183 = vld [vmem:[#allocation2 + $0x8] sm:$0xff]
      %v1184 = vld [vmem:[#allocation2 + $0x10] sm:$0xff]
      %v1185 = vld [vmem:[#allocation2 + $0x18] sm:$0xff]
      %v1186 = vld [vmem:[#allocation2 + $0x20] sm:$0xff]
      %v1187 = vld [vmem:[#allocation2 + $0x28] sm:$0xff]
      %v1188 = vld [vmem:[#allocation2 + $0x30] sm:$0xff]
      %v1189 = vld [vmem:[#allocation2 + $0x38] sm:$0xff]
      %v1190 = vld [vmem:[#allocation2 + $0x40] sm:$0xff]
      %v1191 = vadd.f32 %v1182, %v1159
      %v1192 = vadd.f32 %v1183, %v1161
      %v1193 = vadd.f32 %v1184, %v1164
      %v1194 = vadd.f32 %v1185, %v1166
      %v1195 = vadd.f32 %v1186, %v1169
      %v1196 = vadd.f32 %v1187, %v1171
      %v1197 = vadd.f32 %v1188, %v1174
      %v1198 = vadd.f32 %v1189, %v1176
      %v1199 = vadd.f32 %v1190, %v1179
      %1200 = vst [vmem:[#allocation2] sm:$0xff] %v1191
      %1201 = vst [vmem:[#allocation2 + $0x8] sm:$0xff] %v1192
      %1202 = vst [vmem:[#allocation2 + $0x10] sm:$0xff] %v1193
      %1203 = vst [vmem:[#allocation2 + $0x18] sm:$0xff] %v1194
      %1204 = vst [vmem:[#allocation2 + $0x20] sm:$0xff] %v1195
      %1205 = vst [vmem:[#allocation2 + $0x28] sm:$0xff] %v1196
      %1206 = vst [vmem:[#allocation2 + $0x30] sm:$0xff] %v1197
      %1207 = vst [vmem:[#allocation2 + $0x38] sm:$0xff] %v1198
      %1208 = vst [vmem:[#allocation2 + $0x40] sm:$0xff] %v1199
      %v1209 = vld [vmem:[%s165 + $0x10] sm:$0xf]
      %v1210 = vld [vmem:[%s165 + $0x20] sm:$0xf]
      %v1211 = vld [vmem:[%s165 + $0x30] sm:$0xf]
      %v1212 = vld [vmem:[%s165 + $0x40] sm:$0xf]
      %v1213 = vld [vmem:[%s165 + $0x50] sm:$0xf]
      %v1214 = vld [vmem:[%s165 + $0x60] sm:$0xf]
      %v1215 = vld [vmem:[%s165 + $0x70] sm:$0xf]
      %v1216 = vld [vmem:[%s165 + $0x80] sm:$0xf]
      %v1217 = vld [vmem:[%s165 + $0x90] sm:$0xf]
      %v1218 = vld [vmem:[%s165 + $0xa0] sm:$0x1]
      %s1219 = scalar_lea.vmem %s1, 384
      %v1220 = vld [vmem:[%s1219] sm:$0xf]
      %v1221 = vld [vmem:[%s1219 + $0x4] sm:$0xf]
      %v1222 = vld [vmem:[%s1219 + $0x8] sm:$0xf]
      %v1223 = vld [vmem:[%s1219 + $0xc] sm:$0xf]
      %v1224 = vld [vmem:[%s1219 + $0x10] sm:$0xf]
      %v1225 = vld [vmem:[%s1219 + $0x14] sm:$0xf]
      %v1226 = vld [vmem:[%s1219 + $0x18] sm:$0xf]
      %v1227 = vld [vmem:[%s1219 + $0x1c] sm:$0xf]
      %v1228 = vld [vmem:[%s1219 + $0x20] sm:$0xf]
      %v1229 = vld [vmem:[%s1219 + $0x24] sm:$0xf]
      %v1230 = vld [vmem:[%s1219 + $0x28] sm:$0xf]
      %v1231 = vld [vmem:[%s1219 + $0x2c] sm:$0xf]
      %v1232 = vld [vmem:[%s1219 + $0x30] sm:$0xf]
      %v1233 = vld [vmem:[%s1219 + $0x34] sm:$0xf]
      %v1234 = vld [vmem:[%s1219 + $0x38] sm:$0xf]
      %v1235 = vld [vmem:[%s1219 + $0x3c] sm:$0xf]
      %v1246 = vunpack.c.l.b16 %v1209
      %v1247 = vunpack.c.l.b16 %v1210
      %v1248 = vunpack.c.l.b16 %v1211
      %v1249 = vunpack.c.l.b16 %v1212
      %v1250 = vunpack.c.l.b16 %v1213
      %v1251 = vunpack.c.l.b16 %v1214
      %v1252 = vunpack.c.l.b16 %v1215
      %v1253 = vunpack.c.l.b16 %v1216
      %v1254 = vunpack.c.l.b16 %v1217
      %v1255 = vunpack.c.l.b16 %v1218
      %v1256 = vpack.c.b16 %v1247, %v1246
      %v1257 = vpack.c.b16 %v1249, %v1248
      %v1258 = vpack.c.b16 %v1251, %v1250
      %v1259 = vpack.c.b16 %v1253, %v1252
      %v1260 = vpack.c.b16 %v1255, %v1254
      %v1262 = vshrl.u32 %v1256, 16
      %v1264 = vshll.u32 %v1256, 16
      %v1266 = vrot.slane %v1264, 1
      %v1267 = vor.u32 %v1262, %v1266
      %v1269 = vshll.u32 %v1257, 16
      %v1271 = vrot.slane %v1269, 1
      %v1272 = vsel %vm528, %v1267, %v1271
      %v1273 = vshrl.u32 %v1257, 16
      %v1275 = vor.u32 %v1273, %v1271
      %v1277 = vshll.u32 %v1258, 16
      %v1279 = vrot.slane %v1277, 1
      %v1280 = vsel %vm528, %v1275, %v1279
      %v1281 = vshrl.u32 %v1258, 16
      %v1283 = vor.u32 %v1281, %v1279
      %v1285 = vshll.u32 %v1259, 16
      %v1287 = vrot.slane %v1285, 1
      %v1288 = vsel %vm528, %v1283, %v1287
      %v1289 = vshrl.u32 %v1259, 16
      %v1291 = vor.u32 %v1289, %v1287
      %v1293 = vshll.u32 %v1260, 16
      %v1295 = vrot.slane %v1293, 1
      %v1296 = vsel %vm528, %v1291, %v1295
      %v1297 = vshrl.u32 %v1260, 16
      %v1299 = vor.u32 %v1297, %v1295
      %v1321 = vunpack.c.l.b16 %v1220
      %v1322 = vunpack.c.l.b16 %v1221
      %v1323 = vunpack.c.l.b16 %v1222
      %v1324 = vunpack.c.l.b16 %v1223
      %v1325 = vunpack.c.l.b16 %v1224
      %v1326 = vunpack.c.l.b16 %v1225
      %v1327 = vunpack.c.l.b16 %v1226
      %v1328 = vunpack.c.l.b16 %v1227
      %v1329 = vunpack.c.l.b16 %v1228
      %v1330 = vunpack.c.l.b16 %v1229
      %v1331 = vunpack.c.l.b16 %v1230
      %v1332 = vunpack.c.l.b16 %v1231
      %v1333 = vunpack.c.l.b16 %v1232
      %v1334 = vunpack.c.l.b16 %v1233
      %v1335 = vunpack.c.l.b16 %v1234
      %v1336 = vunpack.c.l.b16 %v1235
      %v1337 = vpack.c.b16 %v1322, %v1321
      %v1338 = vpack.c.b16 %v1324, %v1323
      %v1339 = vpack.c.b16 %v1326, %v1325
      %v1340 = vpack.c.b16 %v1328, %v1327
      %v1341 = vpack.c.b16 %v1330, %v1329
      %v1342 = vpack.c.b16 %v1332, %v1331
      %v1343 = vpack.c.b16 %v1334, %v1333
      %v1344 = vpack.c.b16 %v1336, %v1335
      %1353 = vmatpush.bf16.msra.mxu0 %v1344
      %1354 = vmatpush.bf16.msra.mxu0 %v1343
      %1355 = vmatpush.bf16.msra.mxu0 %v1342
      %1356 = vmatpush.bf16.msra.mxu0 %v1341
      %1357 = vmatpush.bf16.msra.mxu0 %v1340
      %1358 = vmatpush.bf16.msra.mxu0 %v1339
      %1359 = vmatpush.bf16.msra.mxu0 %v1338
      %1360 = vmatpush.bf16.msra.mxu0 %v1337
      %1361 = vmatmul.bf16.gmra.mxu0 %v1272
      %v1362 = vpop.f32.mrf.mxu0
      %v1363 = vadd.f32 0.0, %v1362
      %v1364 = vpop.f32.mrf.mxu0
      %v1365 = vadd.f32 0.0, %v1364
      %1366 = vmatmul.bf16.gmra.mxu0 %v1280
      %v1367 = vpop.f32.mrf.mxu0
      %v1368 = vadd.f32 0.0, %v1367
      %v1369 = vpop.f32.mrf.mxu0
      %v1370 = vadd.f32 0.0, %v1369
      %1371 = vmatmul.bf16.gmra.mxu0 %v1288
      %v1372 = vpop.f32.mrf.mxu0
      %v1373 = vadd.f32 0.0, %v1372
      %v1374 = vpop.f32.mrf.mxu0
      %v1375 = vadd.f32 0.0, %v1374
      %1376 = vmatmul.bf16.gmra.mxu0 %v1296
      %v1377 = vpop.f32.mrf.mxu0
      %v1378 = vadd.f32 0.0, %v1377
      %v1379 = vpop.f32.mrf.mxu0
      %v1380 = vadd.f32 0.0, %v1379
      %1381 = vmatmul.bf16.gmra.mxu0 %v1299
      %v1382 = vpop.f32.mrf.mxu0
      %v1383 = vadd.f32 0.0, %v1382
      %v1384 = vpop.f32.mrf.mxu0
      %1385 = vdwg.mxu0
      %v1386 = vld [vmem:[#allocation2] sm:$0xff]
      %v1387 = vld [vmem:[#allocation2 + $0x8] sm:$0xff]
      %v1388 = vld [vmem:[#allocation2 + $0x10] sm:$0xff]
      %v1389 = vld [vmem:[#allocation2 + $0x18] sm:$0xff]
      %v1390 = vld [vmem:[#allocation2 + $0x20] sm:$0xff]
      %v1391 = vld [vmem:[#allocation2 + $0x28] sm:$0xff]
      %v1392 = vld [vmem:[#allocation2 + $0x30] sm:$0xff]
      %v1393 = vld [vmem:[#allocation2 + $0x38] sm:$0xff]
      %v1394 = vld [vmem:[#allocation2 + $0x40] sm:$0xff]
      %v1395 = vadd.f32 %v1386, %v1363
      %v1396 = vadd.f32 %v1387, %v1365
      %v1397 = vadd.f32 %v1388, %v1368
      %v1398 = vadd.f32 %v1389, %v1370
      %v1399 = vadd.f32 %v1390, %v1373
      %v1400 = vadd.f32 %v1391, %v1375
      %v1401 = vadd.f32 %v1392, %v1378
      %v1402 = vadd.f32 %v1393, %v1380
      %v1403 = vadd.f32 %v1394, %v1383
      %1404 = vst [vmem:[#allocation2] sm:$0xff] %v1395
      %1405 = vst [vmem:[#allocation2 + $0x8] sm:$0xff] %v1396
      %1406 = vst [vmem:[#allocation2 + $0x10] sm:$0xff] %v1397
      %1407 = vst [vmem:[#allocation2 + $0x18] sm:$0xff] %v1398
      %1408 = vst [vmem:[#allocation2 + $0x20] sm:$0xff] %v1399
      %1409 = vst [vmem:[#allocation2 + $0x28] sm:$0xff] %v1400
      %1410 = vst [vmem:[#allocation2 + $0x30] sm:$0xff] %v1401
      %1411 = vst [vmem:[#allocation2 + $0x38] sm:$0xff] %v1402
      %1412 = vst [vmem:[#allocation2 + $0x40] sm:$0xff] %v1403
      %v1413 = vld [vmem:[%s165 + $0x14] sm:$0xf]
      %v1414 = vld [vmem:[%s165 + $0x24] sm:$0xf]
      %v1415 = vld [vmem:[%s165 + $0x34] sm:$0xf]
      %v1416 = vld [vmem:[%s165 + $0x44] sm:$0xf]
      %v1417 = vld [vmem:[%s165 + $0x54] sm:$0xf]
      %v1418 = vld [vmem:[%s165 + $0x64] sm:$0xf]
      %v1419 = vld [vmem:[%s165 + $0x74] sm:$0xf]
      %v1420 = vld [vmem:[%s165 + $0x84] sm:$0xf]
      %v1421 = vld [vmem:[%s165 + $0x94] sm:$0xf]
      %v1422 = vld [vmem:[%s165 + $0xa4] sm:$0x1]
      %s1423 = scalar_lea.vmem %s1, 448
      %v1424 = vld [vmem:[%s1423] sm:$0xf]
      %v1425 = vld [vmem:[%s1423 + $0x4] sm:$0xf]
      %v1426 = vld [vmem:[%s1423 + $0x8] sm:$0xf]
      %v1427 = vld [vmem:[%s1423 + $0xc] sm:$0xf]
      %v1428 = vld [vmem:[%s1423 + $0x10] sm:$0xf]
      %v1429 = vld [vmem:[%s1423 + $0x14] sm:$0xf]
      %v1430 = vld [vmem:[%s1423 + $0x18] sm:$0xf]
      %v1431 = vld [vmem:[%s1423 + $0x1c] sm:$0xf]
      %v1432 = vld [vmem:[%s1423 + $0x20] sm:$0xf]
      %v1433 = vld [vmem:[%s1423 + $0x24] sm:$0xf]
      %v1434 = vld [vmem:[%s1423 + $0x28] sm:$0xf]
      %v1435 = vld [vmem:[%s1423 + $0x2c] sm:$0xf]
      %v1436 = vld [vmem:[%s1423 + $0x30] sm:$0xf]
      %v1437 = vld [vmem:[%s1423 + $0x34] sm:$0xf]
      %v1438 = vld [vmem:[%s1423 + $0x38] sm:$0xf]
      %v1439 = vld [vmem:[%s1423 + $0x3c] sm:$0xf]
      %v1450 = vunpack.c.l.b16 %v1413
      %v1451 = vunpack.c.l.b16 %v1414
      %v1452 = vunpack.c.l.b16 %v1415
      %v1453 = vunpack.c.l.b16 %v1416
      %v1454 = vunpack.c.l.b16 %v1417
      %v1455 = vunpack.c.l.b16 %v1418
      %v1456 = vunpack.c.l.b16 %v1419
      %v1457 = vunpack.c.l.b16 %v1420
      %v1458 = vunpack.c.l.b16 %v1421
      %v1459 = vunpack.c.l.b16 %v1422
      %v1460 = vpack.c.b16 %v1451, %v1450
      %v1461 = vpack.c.b16 %v1453, %v1452
      %v1462 = vpack.c.b16 %v1455, %v1454
      %v1463 = vpack.c.b16 %v1457, %v1456
      %v1464 = vpack.c.b16 %v1459, %v1458
      %v1466 = vshrl.u32 %v1460, 16
      %v1468 = vshll.u32 %v1460, 16
      %v1470 = vrot.slane %v1468, 1
      %v1471 = vor.u32 %v1466, %v1470
      %v1473 = vshll.u32 %v1461, 16
      %v1475 = vrot.slane %v1473, 1
      %v1476 = vsel %vm528, %v1471, %v1475
      %v1477 = vshrl.u32 %v1461, 16
      %v1479 = vor.u32 %v1477, %v1475
      %v1481 = vshll.u32 %v1462, 16
      %v1483 = vrot.slane %v1481, 1
      %v1484 = vsel %vm528, %v1479, %v1483
      %v1485 = vshrl.u32 %v1462, 16
      %v1487 = vor.u32 %v1485, %v1483
      %v1489 = vshll.u32 %v1463, 16
      %v1491 = vrot.slane %v1489, 1
      %v1492 = vsel %vm528, %v1487, %v1491
      %v1493 = vshrl.u32 %v1463, 16
      %v1495 = vor.u32 %v1493, %v1491
      %v1497 = vshll.u32 %v1464, 16
      %v1499 = vrot.slane %v1497, 1
      %v1500 = vsel %vm528, %v1495, %v1499
      %v1501 = vshrl.u32 %v1464, 16
      %v1503 = vor.u32 %v1501, %v1499
      %v1525 = vunpack.c.l.b16 %v1424
      %v1526 = vunpack.c.l.b16 %v1425
      %v1527 = vunpack.c.l.b16 %v1426
      %v1528 = vunpack.c.l.b16 %v1427
      %v1529 = vunpack.c.l.b16 %v1428
      %v1530 = vunpack.c.l.b16 %v1429
      %v1531 = vunpack.c.l.b16 %v1430
      %v1532 = vunpack.c.l.b16 %v1431
      %v1533 = vunpack.c.l.b16 %v1432
      %v1534 = vunpack.c.l.b16 %v1433
      %v1535 = vunpack.c.l.b16 %v1434
      %v1536 = vunpack.c.l.b16 %v1435
      %v1537 = vunpack.c.l.b16 %v1436
      %v1538 = vunpack.c.l.b16 %v1437
      %v1539 = vunpack.c.l.b16 %v1438
      %v1540 = vunpack.c.l.b16 %v1439
      %v1541 = vpack.c.b16 %v1526, %v1525
      %v1542 = vpack.c.b16 %v1528, %v1527
      %v1543 = vpack.c.b16 %v1530, %v1529
      %v1544 = vpack.c.b16 %v1532, %v1531
      %v1545 = vpack.c.b16 %v1534, %v1533
      %v1546 = vpack.c.b16 %v1536, %v1535
      %v1547 = vpack.c.b16 %v1538, %v1537
      %v1548 = vpack.c.b16 %v1540, %v1539
      %1557 = vmatpush.bf16.msra.mxu0 %v1548
      %1558 = vmatpush.bf16.msra.mxu0 %v1547
      %1559 = vmatpush.bf16.msra.mxu0 %v1546
      %1560 = vmatpush.bf16.msra.mxu0 %v1545
      %1561 = vmatpush.bf16.msra.mxu0 %v1544
      %1562 = vmatpush.bf16.msra.mxu0 %v1543
      %1563 = vmatpush.bf16.msra.mxu0 %v1542
      %1564 = vmatpush.bf16.msra.mxu0 %v1541
      %1565 = vmatmul.bf16.gmra.mxu0 %v1476
      %v1566 = vpop.f32.mrf.mxu0
      %v1567 = vadd.f32 0.0, %v1566
      %v1568 = vpop.f32.mrf.mxu0
      %v1569 = vadd.f32 0.0, %v1568
      %1570 = vmatmul.bf16.gmra.mxu0 %v1484
      %v1571 = vpop.f32.mrf.mxu0
      %v1572 = vadd.f32 0.0, %v1571
      %v1573 = vpop.f32.mrf.mxu0
      %v1574 = vadd.f32 0.0, %v1573
      %1575 = vmatmul.bf16.gmra.mxu0 %v1492
      %v1576 = vpop.f32.mrf.mxu0
      %v1577 = vadd.f32 0.0, %v1576
      %v1578 = vpop.f32.mrf.mxu0
      %v1579 = vadd.f32 0.0, %v1578
      %1580 = vmatmul.bf16.gmra.mxu0 %v1500
      %v1581 = vpop.f32.mrf.mxu0
      %v1582 = vadd.f32 0.0, %v1581
      %v1583 = vpop.f32.mrf.mxu0
      %v1584 = vadd.f32 0.0, %v1583
      %1585 = vmatmul.bf16.gmra.mxu0 %v1503
      %v1586 = vpop.f32.mrf.mxu0
      %v1587 = vadd.f32 0.0, %v1586
      %v1588 = vpop.f32.mrf.mxu0
      %1589 = vdwg.mxu0
      %v1590 = vld [vmem:[#allocation2] sm:$0xff]
      %v1591 = vld [vmem:[#allocation2 + $0x8] sm:$0xff]
      %v1592 = vld [vmem:[#allocation2 + $0x10] sm:$0xff]
      %v1593 = vld [vmem:[#allocation2 + $0x18] sm:$0xff]
      %v1594 = vld [vmem:[#allocation2 + $0x20] sm:$0xff]
      %v1595 = vld [vmem:[#allocation2 + $0x28] sm:$0xff]
      %v1596 = vld [vmem:[#allocation2 + $0x30] sm:$0xff]
      %v1597 = vld [vmem:[#allocation2 + $0x38] sm:$0xff]
      %v1598 = vld [vmem:[#allocation2 + $0x40] sm:$0xff]
      %v1599 = vadd.f32 %v1590, %v1567
      %v1600 = vadd.f32 %v1591, %v1569
      %v1601 = vadd.f32 %v1592, %v1572
      %v1602 = vadd.f32 %v1593, %v1574
      %v1603 = vadd.f32 %v1594, %v1577
      %v1604 = vadd.f32 %v1595, %v1579
      %v1605 = vadd.f32 %v1596, %v1582
      %v1606 = vadd.f32 %v1597, %v1584
      %v1607 = vadd.f32 %v1598, %v1587
      %1608 = vst [vmem:[#allocation2] sm:$0xff] %v1599
      %1609 = vst [vmem:[#allocation2 + $0x8] sm:$0xff] %v1600
      %1610 = vst [vmem:[#allocation2 + $0x10] sm:$0xff] %v1601
      %1611 = vst [vmem:[#allocation2 + $0x18] sm:$0xff] %v1602
      %1612 = vst [vmem:[#allocation2 + $0x20] sm:$0xff] %v1603
      %1613 = vst [vmem:[#allocation2 + $0x28] sm:$0xff] %v1604
      %1614 = vst [vmem:[#allocation2 + $0x30] sm:$0xff] %v1605
      %1615 = vst [vmem:[#allocation2 + $0x38] sm:$0xff] %v1606
      %1616 = vst [vmem:[#allocation2 + $0x40] sm:$0xff] %v1607
      %v1617 = vld [vmem:[%s165 + $0x10] sm:$0xe]
      %v1618 = vld [vmem:[%s165 + $0x20] sm:$0xf]
      %v1619 = vld [vmem:[%s165 + $0x30] sm:$0xf]
      %v1620 = vld [vmem:[%s165 + $0x40] sm:$0xf]
      %v1621 = vld [vmem:[%s165 + $0x50] sm:$0xf]
      %v1622 = vld [vmem:[%s165 + $0x60] sm:$0xf]
      %v1623 = vld [vmem:[%s165 + $0x70] sm:$0xf]
      %v1624 = vld [vmem:[%s165 + $0x80] sm:$0xf]
      %v1625 = vld [vmem:[%s165 + $0x90] sm:$0xf]
      %v1626 = vld [vmem:[%s165 + $0xa0] sm:$0x1]
      %s1627 = scalar_lea.vmem %s1, 512
      %v1628 = vld [vmem:[%s1627] sm:$0xf]
      %v1629 = vld [vmem:[%s1627 + $0x4] sm:$0xf]
      %v1630 = vld [vmem:[%s1627 + $0x8] sm:$0xf]
      %v1631 = vld [vmem:[%s1627 + $0xc] sm:$0xf]
      %v1632 = vld [vmem:[%s1627 + $0x10] sm:$0xf]
      %v1633 = vld [vmem:[%s1627 + $0x14] sm:$0xf]
      %v1634 = vld [vmem:[%s1627 + $0x18] sm:$0xf]
      %v1635 = vld [vmem:[%s1627 + $0x1c] sm:$0xf]
      %v1636 = vld [vmem:[%s1627 + $0x20] sm:$0xf]
      %v1637 = vld [vmem:[%s1627 + $0x24] sm:$0xf]
      %v1638 = vld [vmem:[%s1627 + $0x28] sm:$0xf]
      %v1639 = vld [vmem:[%s1627 + $0x2c] sm:$0xf]
      %v1640 = vld [vmem:[%s1627 + $0x30] sm:$0xf]
      %v1641 = vld [vmem:[%s1627 + $0x34] sm:$0xf]
      %v1642 = vld [vmem:[%s1627 + $0x38] sm:$0xf]
      %v1643 = vld [vmem:[%s1627 + $0x3c] sm:$0xf]
      %v1654 = vunpack.c.l.b16 %v1617
      %v1655 = vunpack.c.l.b16 %v1618
      %v1656 = vunpack.c.l.b16 %v1619
      %v1657 = vunpack.c.l.b16 %v1620
      %v1658 = vunpack.c.l.b16 %v1621
      %v1659 = vunpack.c.l.b16 %v1622
      %v1660 = vunpack.c.l.b16 %v1623
      %v1661 = vunpack.c.l.b16 %v1624
      %v1662 = vunpack.c.l.b16 %v1625
      %v1663 = vunpack.c.l.b16 %v1626
      %v1664 = vpack.c.b16 %v1655, %v1654
      %v1665 = vpack.c.b16 %v1657, %v1656
      %v1666 = vpack.c.b16 %v1659, %v1658
      %v1667 = vpack.c.b16 %v1661, %v1660
      %v1668 = vpack.c.b16 %v1663, %v1662
      %vm1669 = vcmask 1046528
      %v1670 = vrot.slane %v1664, 1
      %v1671 = vrot.slane %v1665, 1
      %v1672 = vsel %vm1669, %v1670, %v1671
      %v1673 = vrot.slane %v1666, 1
      %v1674 = vsel %vm1669, %v1671, %v1673
      %v1675 = vrot.slane %v1667, 1
      %v1676 = vsel %vm1669, %v1673, %v1675
      %v1677 = vrot.slane %v1668, 1
      %v1678 = vsel %vm1669, %v1675, %v1677
      %v1700 = vunpack.c.l.b16 %v1628
      %v1701 = vunpack.c.l.b16 %v1629
      %v1702 = vunpack.c.l.b16 %v1630
      %v1703 = vunpack.c.l.b16 %v1631
      %v1704 = vunpack.c.l.b16 %v1632
      %v1705 = vunpack.c.l.b16 %v1633
      %v1706 = vunpack.c.l.b16 %v1634
      %v1707 = vunpack.c.l.b16 %v1635
      %v1708 = vunpack.c.l.b16 %v1636
      %v1709 = vunpack.c.l.b16 %v1637
      %v1710 = vunpack.c.l.b16 %v1638
      %v1711 = vunpack.c.l.b16 %v1639
      %v1712 = vunpack.c.l.b16 %v1640
      %v1713 = vunpack.c.l.b16 %v1641
      %v1714 = vunpack.c.l.b16 %v1642
      %v1715 = vunpack.c.l.b16 %v1643
      %v1716 = vpack.c.b16 %v1701, %v1700
      %v1717 = vpack.c.b16 %v1703, %v1702
      %v1718 = vpack.c.b16 %v1705, %v1704
      %v1719 = vpack.c.b16 %v1707, %v1706
      %v1720 = vpack.c.b16 %v1709, %v1708
      %v1721 = vpack.c.b16 %v1711, %v1710
      %v1722 = vpack.c.b16 %v1713, %v1712
      %v1723 = vpack.c.b16 %v1715, %v1714
      %1732 = vmatpush.bf16.msra.mxu0 %v1723
      %1733 = vmatpush.bf16.msra.mxu0 %v1722
      %1734 = vmatpush.bf16.msra.mxu0 %v1721
      %1735 = vmatpush.bf16.msra.mxu0 %v1720
      %1736 = vmatpush.bf16.msra.mxu0 %v1719
      %1737 = vmatpush.bf16.msra.mxu0 %v1718
      %1738 = vmatpush.bf16.msra.mxu0 %v1717
      %1739 = vmatpush.bf16.msra.mxu0 %v1716
      %1740 = vmatmul.bf16.gmra.mxu0 %v1672
      %v1741 = vpop.f32.mrf.mxu0
      %v1742 = vadd.f32 0.0, %v1741
      %v1743 = vpop.f32.mrf.mxu0
      %v1744 = vadd.f32 0.0, %v1743
      %1745 = vmatmul.bf16.gmra.mxu0 %v1674
      %v1746 = vpop.f32.mrf.mxu0
      %v1747 = vadd.f32 0.0, %v1746
      %v1748 = vpop.f32.mrf.mxu0
      %v1749 = vadd.f32 0.0, %v1748
      %1750 = vmatmul.bf16.gmra.mxu0 %v1676
      %v1751 = vpop.f32.mrf.mxu0
      %v1752 = vadd.f32 0.0, %v1751
      %v1753 = vpop.f32.mrf.mxu0
      %v1754 = vadd.f32 0.0, %v1753
      %1755 = vmatmul.bf16.gmra.mxu0 %v1678
      %v1756 = vpop.f32.mrf.mxu0
      %v1757 = vadd.f32 0.0, %v1756
      %v1758 = vpop.f32.mrf.mxu0
      %v1759 = vadd.f32 0.0, %v1758
      %1760 = vmatmul.bf16.gmra.mxu0 %v1677
      %v1761 = vpop.f32.mrf.mxu0
      %v1762 = vadd.f32 0.0, %v1761
      %v1763 = vpop.f32.mrf.mxu0
      %1764 = vdwg.mxu0
      %v1765 = vld [vmem:[#allocation2] sm:$0xff]
      %v1766 = vld [vmem:[#allocation2 + $0x8] sm:$0xff]
      %v1767 = vld [vmem:[#allocation2 + $0x10] sm:$0xff]
      %v1768 = vld [vmem:[#allocation2 + $0x18] sm:$0xff]
      %v1769 = vld [vmem:[#allocation2 + $0x20] sm:$0xff]
      %v1770 = vld [vmem:[#allocation2 + $0x28] sm:$0xff]
      %v1771 = vld [vmem:[#allocation2 + $0x30] sm:$0xff]
      %v1772 = vld [vmem:[#allocation2 + $0x38] sm:$0xff]
      %v1773 = vld [vmem:[#allocation2 + $0x40] sm:$0xff]
      %v1774 = vadd.f32 %v1765, %v1742
      %v1775 = vadd.f32 %v1766, %v1744
      %v1776 = vadd.f32 %v1767, %v1747
      %v1777 = vadd.f32 %v1768, %v1749
      %v1778 = vadd.f32 %v1769, %v1752
      %v1779 = vadd.f32 %v1770, %v1754
      %v1780 = vadd.f32 %v1771, %v1757
      %v1781 = vadd.f32 %v1772, %v1759
      %v1782 = vadd.f32 %v1773, %v1762
      %1783 = vst [vmem:[#allocation2] sm:$0xff] %v1774
      %1784 = vst [vmem:[#allocation2 + $0x8] sm:$0xff] %v1775
      %1785 = vst [vmem:[#allocation2 + $0x10] sm:$0xff] %v1776
      %1786 = vst [vmem:[#allocation2 + $0x18] sm:$0xff] %v1777
      %1787 = vst [vmem:[#allocation2 + $0x20] sm:$0xff] %v1778
      %1788 = vst [vmem:[#allocation2 + $0x28] sm:$0xff] %v1779
      %1789 = vst [vmem:[#allocation2 + $0x30] sm:$0xff] %v1780
      %1790 = vst [vmem:[#allocation2 + $0x38] sm:$0xff] %v1781
      %1791 = vst [vmem:[#allocation2 + $0x40] sm:$0xff] %v1782
      %v1792 = vld [vmem:[%s2] sm:$0x1]
      %v1793 = vld [vmem:[#allocation2] sm:$0xff]
      %v1795 = vperm.slane %v1792, 0
      %v1797 = vadd.f32 %v1793, %v1795
      %v1798 = vmax.f32 %v1797, 0.0
      %v1799 = vpack.c.bf16 %v1798, %v1798
      %1800 = vst [vmem:[%s170] sm:$0xf] %v1799
      %v1801 = vld [vmem:[#allocation2 + $0x9] sm:$0xff]
      %v1802 = vadd.f32 %v1801, %v1795
      %v1803 = vmax.f32 %v1802, 0.0
      %v1804 = vpack.c.bf16 %v1803, %v1803
      %s1805 = scalar_lea.vmem %s170, 4
      %1806 = vst [vmem:[%s1805] sm:$0xf] %v1804
      %v1807 = vld [vmem:[#allocation2 + $0x12] sm:$0xff]
      %v1808 = vadd.f32 %v1807, %v1795
      %v1809 = vmax.f32 %v1808, 0.0
      %v1810 = vpack.c.bf16 %v1809, %v1809
      %s1811 = scalar_lea.vmem %s170, 8
      %1812 = vst [vmem:[%s1811] sm:$0xf] %v1810
      %v1813 = vld [vmem:[#allocation2 + $0x1b] sm:$0xff]
      %v1814 = vadd.f32 %v1813, %v1795
      %v1815 = vmax.f32 %v1814, 0.0
      %v1816 = vpack.c.bf16 %v1815, %v1815
      %s1817 = scalar_lea.vmem %s170, 12
      %1818 = vst [vmem:[%s1817] sm:$0xf] %v1816
      %v1819 = vld [vmem:[#allocation2 + $0x24] sm:$0xff]
      %v1820 = vadd.f32 %v1819, %v1795
      %v1821 = vmax.f32 %v1820, 0.0
      %v1822 = vpack.c.bf16 %v1821, %v1821
      %s1823 = scalar_lea.vmem %s170, 16
      %1824 = vst [vmem:[%s1823] sm:$0xf] %v1822
      %v1825 = vld [vmem:[#allocation2 + $0x2d] sm:$0xff]
      %v1826 = vadd.f32 %v1825, %v1795
      %v1827 = vmax.f32 %v1826, 0.0
      %v1828 = vpack.c.bf16 %v1827, %v1827
      %s1829 = scalar_lea.vmem %s170, 20
      %1830 = vst [vmem:[%s1829] sm:$0xf] %v1828
      %v1831 = vld [vmem:[#allocation2 + $0x36] sm:$0xff]
      %v1832 = vadd.f32 %v1831, %v1795
      %v1833 = vmax.f32 %v1832, 0.0
      %v1834 = vpack.c.bf16 %v1833, %v1833
      %s1835 = scalar_lea.vmem %s170, 24
      %1836 = vst [vmem:[%s1835] sm:$0xf] %v1834
      %v1837 = vld [vmem:[#allocation2 + $0x3f] sm:$0xff]
      %v1838 = vadd.f32 %v1837, %v1795
      %v1839 = vmax.f32 %v1838, 0.0
      %v1840 = vpack.c.bf16 %v1839, %v1839
      %s1841 = scalar_lea.vmem %s170, 28
      %1842 = vst [vmem:[%s1841] sm:$0xf] %v1840
      %p1843 = scmp.lt.s32.totalorder %s14, 1
      %s1844 = scalar_select %p1843, %s14, 1
      %s1845 = smul.addr %s1844, 8
      %s1846 = smul.addr %s1845, 4
      %s1847 = scalar_lea.vmem %s3, %s1846
      // Predicated region
      $region33: #{_lambda_.4} parent=31 // pred_check
        %p1848 = pneg %p100
      $region34: #{_lambda_.4} parent=31 // pred_check_branch
        %1850 = sbr.rel (%p1848) target = $region36
      $region35: #{_lambda_.4} parent=31 // pred_region
        _
      $region36: #{_lambda_.4} parent=31 // pred_fallthru
        _
    $region32: #{_lambda_.4} parent=5 // pred_fallthru
      _
    %p1851 = scmp.le.s32.totalorder 2, %s9
    // Predicated region
    $region37: #{_lambda_.4} parent=5 // pred_check
      %p1852 = pneg %p1851
    $region38: #{_lambda_.4} parent=5 // pred_check_branch
      %1854 = sbr.rel (%p1852) target = $region40
    $region39: #{_lambda_.4} parent=5 // pred_region
      %s1855 = ssub.s32 %s9, 2
      // Predicated region
      $region41: #{_lambda_.4} parent=39 // pred_check
        %p1856 = pneg %p106
      $region42: #{_lambda_.4} parent=39 // pred_check_branch
        %1858 = sbr.rel (%p1856) target = $region44
      $region43: #{_lambda_.4} parent=39 // pred_region
        %p1859 = scmp.lt.s32.totalorder %s15, 1
        %s1860 = scalar_select %p1859, %s15, 1
        %s1861 = smul.addr %s1860, 8
        %s1862 = smul.addr %s1861, 4
        %s1863 = scalar_lea.vmem %s3, %s1862
      $region44: #{_lambda_.4} parent=39 // pred_fallthru
        _
    $region40: #{_lambda_.4} parent=5 // pred_fallthru
      _
  $region6: #{_lambda_.4} parent=0 // loop_footer
    %s13 = sadd.s32 1, %s9
  $region7: #{_lambda_.4} parent=0 // loop_footer_branch
    %8 = sbr.rel target = $region3
  $region8: #{_lambda_.4} parent=0 // loop_exit
    _

</llo_original>
